<compile_context>
chip_gen: v6e
topology: v6e:2x2x1
jax: 0.10.0
libtpu: 0.0.40
codegen_flags: <defaults>
</compile_context>

<pallas_src>
import jax
import jax.numpy as jnp
from jax import lax
from jax.experimental import pallas as pl
from jax.experimental.pallas import tpu as pltpu

# ----- config (mirrors the PyTorch file) -----
N_EMBD = 256
N_HEAD = 4
HEAD_SIZE = N_EMBD // N_HEAD  # 64
BLOCK_SIZE = 128              # causal mask buffer size (T <= BLOCK_SIZE)


# ---------------- fused multi-head attention + projection kernel ----------------
def _mha_fused_kernel(x_ref, wqkv_ref, wp_ref, bp_ref, o_ref):
    _, T, C = x_ref.shape

    # Causal mask first: pure VPU work, co-issues in idle VALU slots under the
    # MXU pushes of the QKV matmul below.
    row = lax.broadcasted_iota(jnp.int32, (T, T), 0)
    col = lax.broadcasted_iota(jnp.int32, (T, T), 1)
    causal = col <= row

    x = x_ref[0]  # (T, C) bf16

    # Single fused QKV projection: (T, C) @ (C, 3C) -> (T, 3C), f32 accumulation.
    qkv = jnp.dot(x, wqkv_ref[...], preferred_element_type=jnp.float32)

    scale = C ** -0.5  # full embed dim, as in the torch code
    q = qkv[:, 0 * C:1 * C] * scale   # pre-scale Q once (f32)
    k = qkv[:, 1 * C:2 * C]
    v = qkv[:, 2 * C:3 * C]

    y = None
    for h in range(N_HEAD):
        lo, hi = h * HEAD_SIZE, (h + 1) * HEAD_SIZE
        qh = q[:, lo:hi].astype(jnp.bfloat16)   # (T, H)
        kh = k[:, lo:hi].astype(jnp.bfloat16)   # (T, H)
        vh = v[:, lo:hi].astype(jnp.bfloat16)   # (T, H)

        # scores: contract last dims directly (no explicit k transpose)
        wei = lax.dot_general(
            qh, kh, dimension_numbers=(((1,), (1,)), ((), ())),
            preferred_element_type=jnp.float32)                 # (T, T) f32

        wei = jnp.where(causal, wei, -jnp.inf)
        wei = wei - jnp.max(wei, axis=-1, keepdims=True)
        p = jnp.exp(wei)
        p = p * pl.reciprocal(jnp.sum(p, axis=-1, keepdims=True), approx=True)

        out_h = jnp.dot(p.astype(jnp.bfloat16), vh,
                        preferred_element_type=jnp.float32)     # (T, H) f32

        # Fused output projection: accumulate this head's contribution
        # (avoids a lane-offset concat; w_proj row slice is a clean sublane slice).
        wp_h = wp_ref[lo:hi, :]                                  # (H, C) bf16
        yh = jnp.dot(out_h.astype(jnp.bfloat16), wp_h,
                     preferred_element_type=jnp.float32)         # (T, C) f32
        y = yh if y is None else y + yh

    y = y + bp_ref[...]                                          # bias (1, C)
    o_ref[0] = y.astype(o_ref.dtype)                             # lane-dense (T, 256) store


def multi_head_attention(x, params):
    """x: (B, T, C) f32. Returns (B, T, C) f32."""
    B, T, C = x.shape

    # Pack per-head weights (n_head, C, H) -> (C, n_head*H) so fused[:, h*H:(h+1)*H] == w[h].
    def fuse(w):
        return jnp.transpose(w, (1, 0, 2)).reshape(C, N_HEAD * HEAD_SIZE).astype(jnp.bfloat16)

    # Single (C, 3C) QKV slab: [Q | K | V] along the output (lane) dim.
    wqkv = jnp.concatenate([fuse(params["wq"]),
                            fuse(params["wk"]),
                            fuse(params["wv"])], axis=1)        # (C, 3C) bf16
    wp = params["w_proj"].astype(jnp.bfloat16)                   # (C, C) (in, out)
    bp = params["b_proj"].astype(jnp.float32)                    # (1, C)
    xb = x.astype(jnp.bfloat16)

    return pl.pallas_call(
        _mha_fused_kernel,
        out_shape=jax.ShapeDtypeStruct((B, T, C), x.dtype),
        grid_spec=pltpu.PrefetchScalarGridSpec(
            num_scalar_prefetch=0,
            grid=(B,),
            in_specs=[
                pl.BlockSpec((1, T, C), lambda b: (b, 0, 0)),    # x
                pl.BlockSpec((C, 3 * C), lambda b: (0, 0)),      # wqkv fused
                pl.BlockSpec((C, C), lambda b: (0, 0)),          # w_proj
                pl.BlockSpec((1, C), lambda b: (0, 0)),          # b_proj
            ],
            out_specs=pl.BlockSpec((1, T, C), lambda b: (b, 0, 0)),
        ),
        compiler_params=pltpu.CompilerParams(
            dimension_semantics=("parallel",)),
    )(xb, wqkv, wp, bp)


# ---------------- pure-JAX reference (mirrors kernel precision) ----------------
def reference(x, params):
    B, T, C = x.shape
    xb = x.astype(jnp.bfloat16)
    mask = jnp.tril(jnp.ones((T, T), dtype=bool))
    scale = C ** -0.5
    outs = []
    for h in range(N_HEAD):
        wk = params["wk"][h].astype(jnp.bfloat16)
        wq = params["wq"][h].astype(jnp.bfloat16)
        wv = params["wv"][h].astype(jnp.bfloat16)
        k = jnp.einsum("btc,ch->bth", xb, wk, preferred_element_type=jnp.float32)
        q = jnp.einsum("btc,ch->bth", xb, wq, preferred_element_type=jnp.float32)
        v = jnp.einsum("btc,ch->bth", xb, wv, preferred_element_type=jnp.float32)
        wei = jnp.einsum("bqh,bkh->bqk", q.astype(jnp.bfloat16), k.astype(jnp.bfloat16),
                         preferred_element_type=jnp.float32) * scale
        wei = jnp.where(mask, wei, -jnp.inf)
        p = jax.nn.softmax(wei, axis=-1)
        outs.append(jnp.einsum("bqk,bkh->bqh", p.astype(jnp.bfloat16),
                               v.astype(jnp.bfloat16),
                               preferred_element_type=jnp.float32))
    out = jnp.concatenate(outs, axis=-1)  # (B, T, C)
    y = jnp.einsum("btc,cd->btd", out.astype(jnp.bfloat16),
                   params["w_proj"].astype(jnp.bfloat16),
                   preferred_element_type=jnp.float32) + params["b_proj"][0]
    return y


if __name__ == "__main__":
    key = jax.random.PRNGKey(0)
    kx, kk, kq, kv, kw, kb = jax.random.split(key, 6)

    B, T, C = 2, 128, N_EMBD  # T <= block_size (128)

    x = jax.random.normal(kx, (B, T, C), dtype=jnp.float32)

    scale_head = 1.0 / (C ** 0.5)
    params = {
        "wk": jax.random.uniform(kk, (N_HEAD, C, HEAD_SIZE), jnp.float32,
                                 -scale_head, scale_head),
        "wq": jax.random.uniform(kq, (N_HEAD, C, HEAD_SIZE), jnp.float32,
                                 -scale_head, scale_head),
        "wv": jax.random.uniform(kv, (N_HEAD, C, HEAD_SIZE), jnp.float32,
                                 -scale_head, scale_head),
        "w_proj": jax.random.uniform(kw, (N_HEAD * HEAD_SIZE, N_HEAD * HEAD_SIZE),
                                     jnp.float32, -scale_head, scale_head),
        "b_proj": jax.random.uniform(kb, (1, N_HEAD * HEAD_SIZE),
                                     jnp.float32, -scale_head, scale_head),
    }

    y = jax.block_until_ready(multi_head_attention(x, params))
    y_ref = reference(x, params)
    assert y.shape == (B, T, N_HEAD * HEAD_SIZE)
    # bf16 matmul inputs + approx reciprocal -> modest tolerance vs matched reference
    assert jnp.allclose(y, y_ref, atol=1e-2, rtol=1e-2)
    print("KERNEL_OK")
</pallas_src>

<mosaic_0001>
module attributes {stable_mosaic.version = 11 : i64} {
  func.func @_mha_fused_kernel(%arg0: i32, %arg1: memref<1x128x256xbf16, #tpu.memory_space<vmem>>, %arg2: memref<256x768xbf16, #tpu.memory_space<vmem>>, %arg3: memref<256x256xbf16, #tpu.memory_space<vmem>>, %arg4: memref<1x256xf32, #tpu.memory_space<vmem>>, %arg5: memref<1x128x256xf32, #tpu.memory_space<vmem>>) attributes {dimension_semantics = [#tpu.dimension_semantics<parallel>], iteration_bounds = array<i64: 2>, scalar_prefetch = 0 : i64, scratch_operands = 0 : i64, tpu.core_type = #tpu.core_type<tc>, window_params = [{transform_indices = @transform_0, window_bounds = array<i64: 1, 128, 256>}, {pipeline_mode = #tpu.pipeline_mode<synchronous>, transform_indices = @transform_1, window_bounds = array<i64: 256, 768>}, {pipeline_mode = #tpu.pipeline_mode<synchronous>, transform_indices = @transform_2, window_bounds = array<i64: 256, 256>}, {pipeline_mode = #tpu.pipeline_mode<synchronous>, transform_indices = @transform_3, window_bounds = array<i64: 1, 256>}, {transform_indices = @transform_4, window_bounds = array<i64: 1, 128, 256>}]} {
    %0 = tpu.iota {dimensions = array<i32: 0>} : vector<128x128xi32>
    %1 = tpu.iota {dimensions = array<i32: 1>} : vector<128x128xi32>
    %2 = arith.cmpi sle, %1, %0 : vector<128x128xi32>
    %c0 = arith.constant 0 : index
    %c0_0 = arith.constant 0 : index
    %c0_1 = arith.constant 0 : index
    %3 = vector.load %arg1[%c0, %c0_0, %c0_1] : memref<1x128x256xbf16, #tpu.memory_space<vmem>>, vector<1x128x256xbf16>
    %4 = vector.shape_cast %3 : vector<1x128x256xbf16> to vector<128x256xbf16>
    %c0_2 = arith.constant 0 : index
    %c0_3 = arith.constant 0 : index
    %5 = vector.load %arg2[%c0_2, %c0_3] : memref<256x768xbf16, #tpu.memory_space<vmem>>, vector<256x768xbf16>
    %cst = arith.constant dense<0.000000e+00> : vector<128x768xf32>
    %6 = tpu.matmul %4, %5, %cst {dimension_numbers = #tpu.dot_dimension_numbers<[1], [0], [0], [1], [0, 0, 1, 1], [], []>} : vector<128x256xbf16>, vector<256x768xbf16>, vector<128x768xf32> -> vector<128x768xf32>
    %7 = vector.extract_strided_slice %6 {offsets = [0, 0], sizes = [128, 256], strides = [1, 1]} : vector<128x768xf32> to vector<128x256xf32>
    %cst_4 = arith.constant 6.250000e-02 : f32
    %8 = vector.broadcast %cst_4 : f32 to vector<128x256xf32>
    %9 = arith.mulf %7, %8 : vector<128x256xf32>
    %10 = vector.extract_strided_slice %6 {offsets = [0, 256], sizes = [128, 256], strides = [1, 1]} : vector<128x768xf32> to vector<128x256xf32>
    %11 = vector.extract_strided_slice %6 {offsets = [0, 512], sizes = [128, 256], strides = [1, 1]} : vector<128x768xf32> to vector<128x256xf32>
    %12 = vector.extract_strided_slice %9 {offsets = [0, 0], sizes = [128, 64], strides = [1, 1]} : vector<128x256xf32> to vector<128x64xf32>
    %13 = arith.truncf %12 : vector<128x64xf32> to vector<128x64xbf16>
    %14 = vector.extract_strided_slice %10 {offsets = [0, 0], sizes = [128, 64], strides = [1, 1]} : vector<128x256xf32> to vector<128x64xf32>
    %15 = arith.truncf %14 : vector<128x64xf32> to vector<128x64xbf16>
    %16 = vector.extract_strided_slice %11 {offsets = [0, 0], sizes = [128, 64], strides = [1, 1]} : vector<128x256xf32> to vector<128x64xf32>
    %17 = arith.truncf %16 : vector<128x64xf32> to vector<128x64xbf16>
    %cst_5 = arith.constant dense<0.000000e+00> : vector<128x128xf32>
    %18 = tpu.matmul %13, %15, %cst_5 {dimension_numbers = #tpu.dot_dimension_numbers<[1], [1], [0], [0], [0, 0, 1, 0], [], []>} : vector<128x64xbf16>, vector<128x64xbf16>, vector<128x128xf32> -> vector<128x128xf32>
    %cst_6 = arith.constant 0xFF800000 : f32
    %19 = vector.broadcast %cst_6 : f32 to vector<128x128xf32>
    %20 = arith.select %2, %18, %19 : vector<128x128xi1>, vector<128x128xf32>
    %cst_7 = arith.constant dense<0xFF800000> : vector<128xf32>
    %21 = vector.multi_reduction <maximumf>, %20, %cst_7 [1] : vector<128x128xf32> to vector<128xf32>
    %22 = vector.shape_cast %21 : vector<128xf32> to vector<128x1xf32>
    %23 = vector.broadcast %22 : vector<128x1xf32> to vector<128x128xf32>
    %24 = arith.subf %20, %23 : vector<128x128xf32>
    %25 = math.exp %24 : vector<128x128xf32>
    %cst_8 = arith.constant dense<0.000000e+00> : vector<128xf32>
    %26 = vector.multi_reduction <add>, %25, %cst_8 [1] : vector<128x128xf32> to vector<128xf32>
    %27 = vector.shape_cast %26 : vector<128xf32> to vector<128x1xf32>
    %28 = tpu.reciprocal %27 {approx = true} : vector<128x1xf32> -> vector<128x1xf32>
    %29 = vector.broadcast %28 : vector<128x1xf32> to vector<128x128xf32>
    %30 = arith.mulf %25, %29 : vector<128x128xf32>
    %31 = arith.truncf %30 : vector<128x128xf32> to vector<128x128xbf16>
    %cst_9 = arith.constant dense<0.000000e+00> : vector<128x64xf32>
    %32 = tpu.matmul %31, %17, %cst_9 {dimension_numbers = #tpu.dot_dimension_numbers<[1], [0], [0], [1], [0, 0, 1, 1], [], []>} : vector<128x128xbf16>, vector<128x64xbf16>, vector<128x64xf32> -> vector<128x64xf32>
    %c0_10 = arith.constant 0 : index
    %c0_11 = arith.constant 0 : index
    %33 = vector.load %arg3[%c0_10, %c0_11] : memref<256x256xbf16, #tpu.memory_space<vmem>>, vector<64x256xbf16>
    %34 = arith.truncf %32 : vector<128x64xf32> to vector<128x64xbf16>
    %cst_12 = arith.constant dense<0.000000e+00> : vector<128x256xf32>
    %35 = tpu.matmul %34, %33, %cst_12 {dimension_numbers = #tpu.dot_dimension_numbers<[1], [0], [0], [1], [0, 0, 1, 1], [], []>} : vector<128x64xbf16>, vector<64x256xbf16>, vector<128x256xf32> -> vector<128x256xf32>
    %36 = vector.extract_strided_slice %9 {offsets = [0, 64], sizes = [128, 64], strides = [1, 1]} : vector<128x256xf32> to vector<128x64xf32>
    %37 = arith.truncf %36 : vector<128x64xf32> to vector<128x64xbf16>
    %38 = vector.extract_strided_slice %10 {offsets = [0, 64], sizes = [128, 64], strides = [1, 1]} : vector<128x256xf32> to vector<128x64xf32>
    %39 = arith.truncf %38 : vector<128x64xf32> to vector<128x64xbf16>
    %40 = vector.extract_strided_slice %11 {offsets = [0, 64], sizes = [128, 64], strides = [1, 1]} : vector<128x256xf32> to vector<128x64xf32>
    %41 = arith.truncf %40 : vector<128x64xf32> to vector<128x64xbf16>
    %cst_13 = arith.constant dense<0.000000e+00> : vector<128x128xf32>
    %42 = tpu.matmul %37, %39, %cst_13 {dimension_numbers = #tpu.dot_dimension_numbers<[1], [1], [0], [0], [0, 0, 1, 0], [], []>} : vector<128x64xbf16>, vector<128x64xbf16>, vector<128x128xf32> -> vector<128x128xf32>
    %cst_14 = arith.constant 0xFF800000 : f32
    %43 = vector.broadcast %cst_14 : f32 to vector<128x128xf32>
    %44 = arith.select %2, %42, %43 : vector<128x128xi1>, vector<128x128xf32>
    %cst_15 = arith.constant dense<0xFF800000> : vector<128xf32>
    %45 = vector.multi_reduction <maximumf>, %44, %cst_15 [1] : vector<128x128xf32> to vector<128xf32>
    %46 = vector.shape_cast %45 : vector<128xf32> to vector<128x1xf32>
    %47 = vector.broadcast %46 : vector<128x1xf32> to vector<128x128xf32>
    %48 = arith.subf %44, %47 : vector<128x128xf32>
    %49 = math.exp %48 : vector<128x128xf32>
    %cst_16 = arith.constant dense<0.000000e+00> : vector<128xf32>
    %50 = vector.multi_reduction <add>, %49, %cst_16 [1] : vector<128x128xf32> to vector<128xf32>
    %51 = vector.shape_cast %50 : vector<128xf32> to vector<128x1xf32>
    %52 = tpu.reciprocal %51 {approx = true} : vector<128x1xf32> -> vector<128x1xf32>
    %53 = vector.broadcast %52 : vector<128x1xf32> to vector<128x128xf32>
    %54 = arith.mulf %49, %53 : vector<128x128xf32>
    %55 = arith.truncf %54 : vector<128x128xf32> to vector<128x128xbf16>
    %cst_17 = arith.constant dense<0.000000e+00> : vector<128x64xf32>
    %56 = tpu.matmul %55, %41, %cst_17 {dimension_numbers = #tpu.dot_dimension_numbers<[1], [0], [0], [1], [0, 0, 1, 1], [], []>} : vector<128x128xbf16>, vector<128x64xbf16>, vector<128x64xf32> -> vector<128x64xf32>
    %c64 = arith.constant 64 : index
    %c0_18 = arith.constant 0 : index
    %57 = vector.load %arg3[%c64, %c0_18] : memref<256x256xbf16, #tpu.memory_space<vmem>>, vector<64x256xbf16>
    %58 = arith.truncf %56 : vector<128x64xf32> to vector<128x64xbf16>
    %cst_19 = arith.constant dense<0.000000e+00> : vector<128x256xf32>
    %59 = tpu.matmul %58, %57, %cst_19 {dimension_numbers = #tpu.dot_dimension_numbers<[1], [0], [0], [1], [0, 0, 1, 1], [], []>} : vector<128x64xbf16>, vector<64x256xbf16>, vector<128x256xf32> -> vector<128x256xf32>
    %60 = arith.addf %35, %59 : vector<128x256xf32>
    %61 = vector.extract_strided_slice %9 {offsets = [0, 128], sizes = [128, 64], strides = [1, 1]} : vector<128x256xf32> to vector<128x64xf32>
    %62 = arith.truncf %61 : vector<128x64xf32> to vector<128x64xbf16>
    %63 = vector.extract_strided_slice %10 {offsets = [0, 128], sizes = [128, 64], strides = [1, 1]} : vector<128x256xf32> to vector<128x64xf32>
    %64 = arith.truncf %63 : vector<128x64xf32> to vector<128x64xbf16>
    %65 = vector.extract_strided_slice %11 {offsets = [0, 128], sizes = [128, 64], strides = [1, 1]} : vector<128x256xf32> to vector<128x64xf32>
    %66 = arith.truncf %65 : vector<128x64xf32> to vector<128x64xbf16>
    %cst_20 = arith.constant dense<0.000000e+00> : vector<128x128xf32>
    %67 = tpu.matmul %62, %64, %cst_20 {dimension_numbers = #tpu.dot_dimension_numbers<[1], [1], [0], [0], [0, 0, 1, 0], [], []>} : vector<128x64xbf16>, vector<128x64xbf16>, vector<128x128xf32> -> vector<128x128xf32>
    %cst_21 = arith.constant 0xFF800000 : f32
    %68 = vector.broadcast %cst_21 : f32 to vector<128x128xf32>
    %69 = arith.select %2, %67, %68 : vector<128x128xi1>, vector<128x128xf32>
    %cst_22 = arith.constant dense<0xFF800000> : vector<128xf32>
    %70 = vector.multi_reduction <maximumf>, %69, %cst_22 [1] : vector<128x128xf32> to vector<128xf32>
    %71 = vector.shape_cast %70 : vector<128xf32> to vector<128x1xf32>
    %72 = vector.broadcast %71 : vector<128x1xf32> to vector<128x128xf32>
    %73 = arith.subf %69, %72 : vector<128x128xf32>
    %74 = math.exp %73 : vector<128x128xf32>
    %cst_23 = arith.constant dense<0.000000e+00> : vector<128xf32>
    %75 = vector.multi_reduction <add>, %74, %cst_23 [1] : vector<128x128xf32> to vector<128xf32>
    %76 = vector.shape_cast %75 : vector<128xf32> to vector<128x1xf32>
    %77 = tpu.reciprocal %76 {approx = true} : vector<128x1xf32> -> vector<128x1xf32>
    %78 = vector.broadcast %77 : vector<128x1xf32> to vector<128x128xf32>
    %79 = arith.mulf %74, %78 : vector<128x128xf32>
    %80 = arith.truncf %79 : vector<128x128xf32> to vector<128x128xbf16>
    %cst_24 = arith.constant dense<0.000000e+00> : vector<128x64xf32>
    %81 = tpu.matmul %80, %66, %cst_24 {dimension_numbers = #tpu.dot_dimension_numbers<[1], [0], [0], [1], [0, 0, 1, 1], [], []>} : vector<128x128xbf16>, vector<128x64xbf16>, vector<128x64xf32> -> vector<128x64xf32>
    %c128 = arith.constant 128 : index
    %c0_25 = arith.constant 0 : index
    %82 = vector.load %arg3[%c128, %c0_25] : memref<256x256xbf16, #tpu.memory_space<vmem>>, vector<64x256xbf16>
    %83 = arith.truncf %81 : vector<128x64xf32> to vector<128x64xbf16>
    %cst_26 = arith.constant dense<0.000000e+00> : vector<128x256xf32>
    %84 = tpu.matmul %83, %82, %cst_26 {dimension_numbers = #tpu.dot_dimension_numbers<[1], [0], [0], [1], [0, 0, 1, 1], [], []>} : vector<128x64xbf16>, vector<64x256xbf16>, vector<128x256xf32> -> vector<128x256xf32>
    %85 = arith.addf %60, %84 : vector<128x256xf32>
    %86 = vector.extract_strided_slice %9 {offsets = [0, 192], sizes = [128, 64], strides = [1, 1]} : vector<128x256xf32> to vector<128x64xf32>
    %87 = arith.truncf %86 : vector<128x64xf32> to vector<128x64xbf16>
    %88 = vector.extract_strided_slice %10 {offsets = [0, 192], sizes = [128, 64], strides = [1, 1]} : vector<128x256xf32> to vector<128x64xf32>
    %89 = arith.truncf %88 : vector<128x64xf32> to vector<128x64xbf16>
    %90 = vector.extract_strided_slice %11 {offsets = [0, 192], sizes = [128, 64], strides = [1, 1]} : vector<128x256xf32> to vector<128x64xf32>
    %91 = arith.truncf %90 : vector<128x64xf32> to vector<128x64xbf16>
    %cst_27 = arith.constant dense<0.000000e+00> : vector<128x128xf32>
    %92 = tpu.matmul %87, %89, %cst_27 {dimension_numbers = #tpu.dot_dimension_numbers<[1], [1], [0], [0], [0, 0, 1, 0], [], []>} : vector<128x64xbf16>, vector<128x64xbf16>, vector<128x128xf32> -> vector<128x128xf32>
    %cst_28 = arith.constant 0xFF800000 : f32
    %93 = vector.broadcast %cst_28 : f32 to vector<128x128xf32>
    %94 = arith.select %2, %92, %93 : vector<128x128xi1>, vector<128x128xf32>
    %cst_29 = arith.constant dense<0xFF800000> : vector<128xf32>
    %95 = vector.multi_reduction <maximumf>, %94, %cst_29 [1] : vector<128x128xf32> to vector<128xf32>
    %96 = vector.shape_cast %95 : vector<128xf32> to vector<128x1xf32>
    %97 = vector.broadcast %96 : vector<128x1xf32> to vector<128x128xf32>
    %98 = arith.subf %94, %97 : vector<128x128xf32>
    %99 = math.exp %98 : vector<128x128xf32>
    %cst_30 = arith.constant dense<0.000000e+00> : vector<128xf32>
    %100 = vector.multi_reduction <add>, %99, %cst_30 [1] : vector<128x128xf32> to vector<128xf32>
    %101 = vector.shape_cast %100 : vector<128xf32> to vector<128x1xf32>
    %102 = tpu.reciprocal %101 {approx = true} : vector<128x1xf32> -> vector<128x1xf32>
    %103 = vector.broadcast %102 : vector<128x1xf32> to vector<128x128xf32>
    %104 = arith.mulf %99, %103 : vector<128x128xf32>
    %105 = arith.truncf %104 : vector<128x128xf32> to vector<128x128xbf16>
    %cst_31 = arith.constant dense<0.000000e+00> : vector<128x64xf32>
    %106 = tpu.matmul %105, %91, %cst_31 {dimension_numbers = #tpu.dot_dimension_numbers<[1], [0], [0], [1], [0, 0, 1, 1], [], []>} : vector<128x128xbf16>, vector<128x64xbf16>, vector<128x64xf32> -> vector<128x64xf32>
    %c192 = arith.constant 192 : index
    %c0_32 = arith.constant 0 : index
    %107 = vector.load %arg3[%c192, %c0_32] : memref<256x256xbf16, #tpu.memory_space<vmem>>, vector<64x256xbf16>
    %108 = arith.truncf %106 : vector<128x64xf32> to vector<128x64xbf16>
    %cst_33 = arith.constant dense<0.000000e+00> : vector<128x256xf32>
    %109 = tpu.matmul %108, %107, %cst_33 {dimension_numbers = #tpu.dot_dimension_numbers<[1], [0], [0], [1], [0, 0, 1, 1], [], []>} : vector<128x64xbf16>, vector<64x256xbf16>, vector<128x256xf32> -> vector<128x256xf32>
    %110 = arith.addf %85, %109 : vector<128x256xf32>
    %c0_34 = arith.constant 0 : index
    %c0_35 = arith.constant 0 : index
    %111 = vector.load %arg4[%c0_34, %c0_35] : memref<1x256xf32, #tpu.memory_space<vmem>>, vector<1x256xf32>
    %112 = vector.broadcast %111 : vector<1x256xf32> to vector<128x256xf32>
    %113 = arith.addf %110, %112 : vector<128x256xf32>
    %c0_36 = arith.constant 0 : index
    %c0_37 = arith.constant 0 : index
    %c0_38 = arith.constant 0 : index
    %114 = vector.load %arg5[%c0_36, %c0_37, %c0_38] : memref<1x128x256xf32, #tpu.memory_space<vmem>>, vector<1x128x256xf32>
    %115 = vector.shape_cast %114 : vector<1x128x256xf32> to vector<128x256xf32>
    %116 = vector.shape_cast %113 : vector<128x256xf32> to vector<1x128x256xf32>
    tpu.vector_store %arg5[%c0_36, %c0_37, %c0_38], %116 {strides = array<i32>} : memref<1x128x256xf32, #tpu.memory_space<vmem>>, vector<1x128x256xf32>,
    return
  }
  func.func @transform_0(%arg0: i32) -> (i32, i32, i32) {
    %c0_i32 = arith.constant 0 : i32
    %c0_i32_0 = arith.constant 0 : i32
    %c0_i32_1 = arith.constant 0 : i32
    return %arg0, %c0_i32, %c0_i32_0 : i32, i32, i32
  }
  func.func @transform_1(%arg0: i32) -> (i32, i32) {
    %c0_i32 = arith.constant 0 : i32
    %c0_i32_0 = arith.constant 0 : i32
    %c0_i32_1 = arith.constant 0 : i32
    return %c0_i32, %c0_i32_0 : i32, i32
  }
  func.func @transform_2(%arg0: i32) -> (i32, i32) {
    %c0_i32 = arith.constant 0 : i32
    %c0_i32_0 = arith.constant 0 : i32
    %c0_i32_1 = arith.constant 0 : i32
    return %c0_i32, %c0_i32_0 : i32, i32
  }
  func.func @transform_3(%arg0: i32) -> (i32, i32) {
    %c0_i32 = arith.constant 0 : i32
    %c0_i32_0 = arith.constant 0 : i32
    %c0_i32_1 = arith.constant 0 : i32
    return %c0_i32, %c0_i32_0 : i32, i32
  }
  func.func @transform_4(%arg0: i32) -> (i32, i32, i32) {
    %c0_i32 = arith.constant 0 : i32
    %c0_i32_0 = arith.constant 0 : i32
    %c0_i32_1 = arith.constant 0 : i32
    return %arg0, %c0_i32, %c0_i32_0 : i32, i32, i32
  }
}

</mosaic_0001>

<llo_original>
// kernel: tpu_custom_call.1
$region0: #{tpu_custom_call.1}
  #allocation0 [shape = 'u32[]', space=smem, size = 0x4, offset = 0x4, fixed_abs, tag = 'smem constant byte address 0x4 - core index']
  #allocation1 [shape = 'u32[144,128]{1,0:T(1,128)}', space=vmem, size = 0x12000, scoped, tag = 'internal scratch']
  %s0 = inlined_call_operand.hbm [shape: bf16[2,128,256], index: 0, kind: input, shape index: {}]
  %s1 = inlined_call_operand.hbm [shape: bf16[256,768], index: 1, kind: input, shape index: {}]
  %s2 = inlined_call_operand.hbm [shape: bf16[256,256], index: 2, kind: input, shape index: {}]
  %s3 = inlined_call_operand.vmem [shape: f32[1,256], index: 3, kind: input, shape index: {}]
  %s4 = inlined_call_operand.hbm [shape: f32[2,128,256], index: 4, kind: output, shape index: {}]
  %s5 = sld [smem:[#allocation0]]
  $region61: #{tpu_custom_call.1} parent=0
    _
  %s7 = ssub.s32 1, %s5
  %s8 = scalar_select 0, %s7, %s5
  $region1: #{tpu_custom_call.1} parent=0
    #allocation2 [shape = 'u8[131072]{0}', space=vmem, size = 0x20000, scoped, tag = 'input window, operand 0']
    #allocation3 [shape = 's32[2]{0}', space=sflag, size = 0x8, scoped, tag = 'scoped memory for tpu_custom_call.1']
    #allocation4 [shape = 's32[2]{0}', space=sflag, size = 0x8, scoped, tag = 'scoped memory for tpu_custom_call.1']
    #allocation5 [shape = 'u8[393216]{0}', space=vmem, size = 0x60000, scoped, tag = 'input window, operand 1, single buffered']
    #allocation6 [shape = 's32[1]{0}', space=sflag, size = 0x4, scoped, tag = 'scoped memory for tpu_custom_call.1']
    #allocation7 [shape = 'u8[131072]{0}', space=vmem, size = 0x20000, scoped, tag = 'input window, operand 2, single buffered']
    #allocation8 [shape = 'u8[262144]{0}', space=vmem, size = 0x40000, scoped, tag = 'output window, operand 0']
    %9 = vsyncpa [#allocation3], 0
    %s10 = scalar_lea.sflag [#allocation3], 1
    %11 = vsyncpa %s10, 0
    %12 = vsyncpa [#allocation6], 0
    %13 = vsyncpa [#allocation4], 0
    %s14 = scalar_lea.sflag [#allocation4], 1
    %15 = vsyncpa %s14, 0
    loop: start=0, step=1, limit=4
    $region2: #{tpu_custom_call.1} parent=1 // loop_pre_header
      _
    $region3: #{tpu_custom_call.1} parent=1 // loop_header
      %s17 = sphi 0, %s21
      %p18 = scmp.ge.s32.totalorder %s17, 4
      %s27 = sphi 0, %s29
      %s30 = sphi 0, %s27
      %s31 = sphi 0, %s30
      %s47 = sphi 0, %s31
      %s51 = sphi 0, %s51
      %s53 = sphi 0, %s51
      %s54 = sphi 0, %s53
      %s68 = sphi 0, %s54
      %s72 = sphi 0, %s72
      %s74 = sphi 0, %s72
      %s75 = sphi 0, %s74
      %s89 = sphi 0, %s75
      %s93 = sphi 0, %s93
      %s95 = sphi 0, %s93
      %s96 = sphi 0, %s95
      %s110 = sphi 0, %s96
      %s116 = sphi 0, %s118
      %s119 = sphi 0, %s116
      %s120 = sphi 0, %s119
      %s136 = sphi 0, %s120
    $region4: #{tpu_custom_call.1} parent=1 // loop_header_branch
      %20 = sbr.rel (%p18) target = $region8
    $region5: #{tpu_custom_call.1} parent=1 // loop_body
      %s22 = ssub.s32 %s17, 1
      %s23 = ssub.s32 %s17, 2
      %s24 = sadd.s32 %s17, 1
      %s25 = ssub.s32 %s17, %s24
      %p26 = scmp.eq.s32.totalorder %s25, 0
      %s28 = sadd.s32 %s27, 1
      %s29 = scalar_select %p26, %s27, %s28
      %p32 = pneg %p26
      %p33 = scmp.eq.s32.totalorder %s17, 1
      %p34 = por %p32, %p33
      %p35 = scmp.ne.s32.totalorder %s27, %s30
      %p36 = scmp.eq.s32.totalorder %s17, 0
      %p37 = por %p35, %p36
      %p38 = scmp.ne.s32.totalorder %s27, %s30
      %p39 = scmp.eq.s32.totalorder %s22, 1
      %p40 = por %p38, %p39
      %p41 = scmp.ne.s32.totalorder %s30, %s31
      %p42 = scmp.eq.s32.totalorder %s22, 0
      %p43 = por %p41, %p42
      %p44 = scmp.ne.s32.totalorder %s30, %s31
      %p45 = scmp.eq.s32.totalorder %s23, 1
      %p46 = por %p44, %p45
      %p48 = scmp.ne.s32.totalorder %s31, %s47
      %p49 = scmp.eq.s32.totalorder %s23, 0
      %p50 = por %p48, %p49
      %s52 = sadd.s32 %s51, 1
      %p55 = scmp.eq.s32.totalorder %s17, 1
      %p56 = scmp.ne.s32.totalorder %s51, %s53
      %p57 = scmp.eq.s32.totalorder %s17, 0
      %p58 = por %p56, %p57
      %p59 = scmp.ne.s32.totalorder %s51, %s53
      %p60 = scmp.eq.s32.totalorder %s22, 1
      %p61 = por %p59, %p60
      %p62 = scmp.ne.s32.totalorder %s53, %s54
      %p63 = scmp.eq.s32.totalorder %s22, 0
      %p64 = por %p62, %p63
      %p65 = scmp.ne.s32.totalorder %s53, %s54
      %p66 = scmp.eq.s32.totalorder %s23, 1
      %p67 = por %p65, %p66
      %p69 = scmp.ne.s32.totalorder %s54, %s68
      %p70 = scmp.eq.s32.totalorder %s23, 0
      %p71 = por %p69, %p70
      %s73 = sadd.s32 %s72, 1
      %p76 = scmp.eq.s32.totalorder %s17, 1
      %p77 = scmp.ne.s32.totalorder %s72, %s74
      %p78 = scmp.eq.s32.totalorder %s17, 0
      %p79 = por %p77, %p78
      %p80 = scmp.ne.s32.totalorder %s72, %s74
      %p81 = scmp.eq.s32.totalorder %s22, 1
      %p82 = por %p80, %p81
      %p83 = scmp.ne.s32.totalorder %s74, %s75
      %p84 = scmp.eq.s32.totalorder %s22, 0
      %p85 = por %p83, %p84
      %p86 = scmp.ne.s32.totalorder %s74, %s75
      %p87 = scmp.eq.s32.totalorder %s23, 1
      %p88 = por %p86, %p87
      %p90 = scmp.ne.s32.totalorder %s75, %s89
      %p91 = scmp.eq.s32.totalorder %s23, 0
      %p92 = por %p90, %p91
      %s94 = sadd.s32 %s93, 1
      %p97 = scmp.eq.s32.totalorder %s17, 1
      %p98 = scmp.ne.s32.totalorder %s93, %s95
      %p99 = scmp.eq.s32.totalorder %s17, 0
      %p100 = por %p98, %p99
      %p101 = scmp.ne.s32.totalorder %s93, %s95
      %p102 = scmp.eq.s32.totalorder %s22, 1
      %p103 = por %p101, %p102
      %p104 = scmp.ne.s32.totalorder %s95, %s96
      %p105 = scmp.eq.s32.totalorder %s22, 0
      %p106 = por %p104, %p105
      %p107 = scmp.ne.s32.totalorder %s95, %s96
      %p108 = scmp.eq.s32.totalorder %s23, 1
      %p109 = por %p107, %p108
      %p111 = scmp.ne.s32.totalorder %s96, %s110
      %p112 = scmp.eq.s32.totalorder %s23, 0
      %p113 = por %p111, %p112
      %s114 = ssub.s32 %s17, %s24
      %p115 = scmp.eq.s32.totalorder %s114, 0
      %s117 = sadd.s32 %s116, 1
      %s118 = scalar_select %p115, %s116, %s117
      %p121 = pneg %p115
      %p122 = scmp.eq.s32.totalorder %s17, 1
      %p123 = por %p121, %p122
      %p124 = scmp.ne.s32.totalorder %s116, %s119
      %p125 = scmp.eq.s32.totalorder %s17, 0
      %p126 = por %p124, %p125
      %p127 = scmp.ne.s32.totalorder %s116, %s119
      %p128 = scmp.eq.s32.totalorder %s22, 1
      %p129 = por %p127, %p128
      %p130 = scmp.ne.s32.totalorder %s119, %s120
      %p131 = scmp.eq.s32.totalorder %s22, 0
      %p132 = por %p130, %p131
      %p133 = scmp.ne.s32.totalorder %s119, %s120
      %p134 = scmp.eq.s32.totalorder %s23, 1
      %p135 = por %p133, %p134
      %p137 = scmp.ne.s32.totalorder %s120, %s136
      %p138 = scmp.eq.s32.totalorder %s23, 0
      %p139 = por %p137, %p138
      %p140 = scmp.le.s32.totalorder 1, %s17
      %p141 = scmp.lt.s32.totalorder %s17, 3
      %p142 = pnand %p140, %p141
      %p143 = pneg %p142
      // Predicated region
      $region9: #{tpu_custom_call.1} parent=5 // pred_check
        _
      $region10: #{tpu_custom_call.1} parent=5 // pred_check_branch
        %145 = sbr.rel (%p142) target = $region12
      $region11: #{tpu_custom_call.1} parent=5 // pred_region
        %s146 = ssub.s32 %s17, 1
        // Predicated region
        $region13: #{tpu_custom_call.1} parent=11 // pred_check
          %p147 = pneg %p64
        $region14: #{tpu_custom_call.1} parent=11 // pred_check_branch
          %149 = sbr.rel (%p147) target = $region16
        $region15: #{tpu_custom_call.1} parent=11 // pred_region
          %s151 = ssub.s32 12288, 12288
          %152 = vsyncadd [#allocation6], %s151
          %s153 = sshll.u32 [#allocation5], 4
          %s154 = int_to_ptr.vmem [resolvable:$true] %s153
          %159 = dma.hbm_to_vmem [thread:$0]  %s1, 12288, %s154, [#allocation6], 384, 384, 24
        $region16: #{tpu_custom_call.1} parent=11 // pred_fallthru
          _
        // Predicated region
        $region17: #{tpu_custom_call.1} parent=11 // pred_check
          %p160 = pneg %p85
        $region18: #{tpu_custom_call.1} parent=11 // pred_check_branch
          %162 = sbr.rel (%p160) target = $region20
        $region19: #{tpu_custom_call.1} parent=11 // pred_region
          %s164 = ssub.s32 4096, 4096
          %165 = vsyncadd [#allocation6], %s164
          %s166 = sshll.u32 [#allocation7], 4
          %s167 = int_to_ptr.vmem [resolvable:$true] %s166
          %172 = dma.hbm_to_vmem [thread:$0]  %s2, 4096, %s167, [#allocation6], 128, 128, 8
        $region20: #{tpu_custom_call.1} parent=11 // pred_fallthru
          _
        // Predicated region
        $region21: #{tpu_custom_call.1} parent=11 // pred_check
          %p173 = pneg %p106
        $region22: #{tpu_custom_call.1} parent=11 // pred_check_branch
          %175 = sbr.rel (%p173) target = $region24
        $region23: #{tpu_custom_call.1} parent=11 // pred_region
          _
        $region24: #{tpu_custom_call.1} parent=11 // pred_fallthru
          _
      $region12: #{tpu_custom_call.1} parent=5 // pred_fallthru
        _
      %p176 = scmp.lt.s32.totalorder %s17, 2
      // Predicated region
      $region25: #{tpu_custom_call.1} parent=5 // pred_check
        %p177 = pneg %p176
      $region26: #{tpu_custom_call.1} parent=5 // pred_check_branch
        %179 = sbr.rel (%p177) target = $region28
      $region27: #{tpu_custom_call.1} parent=5 // pred_region
        // Predicated region
        $region29: #{tpu_custom_call.1} parent=27 // pred_check
          %p180 = pneg %p37
        $region30: #{tpu_custom_call.1} parent=27 // pred_check_branch
          %182 = sbr.rel (%p180) target = $region32
        $region31: #{tpu_custom_call.1} parent=27 // pred_region
          %s183 = sand.u32 %s27, 1
          %s184 = scalar_lea.sflag [#allocation3], %s183
          %s185 = sand.u32 %s27, 1
          %s186 = smul.addr %s185, 128
          %s187 = scalar_lea.vmem [#allocation2], %s186
          %s189 = ssub.s32 2048, 2048
          %190 = vsyncadd %s184, %s189
          %s191 = smul.addr %s17, 32
          %s192 = smul.addr %s191, 64
          %s193 = scalar_lea.hbm %s0, %s192
          %s194 = sshll.u32 %s187, 4
          %s195 = int_to_ptr.vmem [resolvable:$true] %s194
          %200 = dma.hbm_to_vmem [thread:$0]  %s193, 2048, %s195, %s184, 128, 128, 8
        $region32: #{tpu_custom_call.1} parent=27 // pred_fallthru
          _
      $region28: #{tpu_custom_call.1} parent=5 // pred_fallthru
        _
      %p201 = scmp.le.s32.totalorder 1, %s17
      %p202 = scmp.lt.s32.totalorder %s17, 3
      %p203 = pnand %p201, %p202
      %p204 = pneg %p203
      // Predicated region
      $region33: #{tpu_custom_call.1} parent=5 // pred_check
        _
      $region34: #{tpu_custom_call.1} parent=5 // pred_check_branch
        %206 = sbr.rel (%p203) target = $region36
      $region35: #{tpu_custom_call.1} parent=5 // pred_region
        %s207 = ssub.s32 %s17, 1
        %s208 = sand.u32 %s30, 1
        %s209 = scalar_lea.sflag [#allocation3], %s208
        %s210 = sand.u32 %s30, 1
        %s211 = smul.addr %s210, 128
        %s212 = scalar_lea.vmem [#allocation2], %s211
        // Predicated region
        $region37: #{tpu_custom_call.1} parent=35 // pred_check
          %p213 = pneg %p43
        $region38: #{tpu_custom_call.1} parent=35 // pred_check_branch
          %215 = sbr.rel (%p213) target = $region40
        $region39: #{tpu_custom_call.1} parent=35 // pred_region
          %216 = dma.done %s209, 2048
        $region40: #{tpu_custom_call.1} parent=35 // pred_fallthru
          _
        // Predicated region
        $region41: #{tpu_custom_call.1} parent=35 // pred_check
          %p217 = pneg %p64
        $region42: #{tpu_custom_call.1} parent=35 // pred_check_branch
          %219 = sbr.rel (%p217) target = $region44
        $region43: #{tpu_custom_call.1} parent=35 // pred_region
          %220 = dma.done [#allocation6], 12288
        $region44: #{tpu_custom_call.1} parent=35 // pred_fallthru
          _
        // Predicated region
        $region45: #{tpu_custom_call.1} parent=35 // pred_check
          %p221 = pneg %p85
        $region46: #{tpu_custom_call.1} parent=35 // pred_check_branch
          %223 = sbr.rel (%p221) target = $region48
        $region47: #{tpu_custom_call.1} parent=35 // pred_region
          %224 = dma.done [#allocation6], 4096
        $region48: #{tpu_custom_call.1} parent=35 // pred_fallthru
          _
        %s225 = sand.u32 %s30, 1
        %s226 = scalar_lea.sflag [#allocation3], %s225
        %s227 = sand.u32 %s30, 1
        %s228 = smul.addr %s227, 128
        %s229 = scalar_lea.vmem [#allocation2], %s228
        %p230 = pneg %p43
        %p231 = pneg %p40
        %p232 = pneg %p64
        %p233 = pneg %p61
        %p234 = pneg %p85
        %p235 = pneg %p82
        %p236 = pneg %p106
        %p237 = pneg %p103
        %p238 = pneg %p132
        %p239 = pneg %p129
        %s240 = sand.u32 %s119, 1
        %s241 = scalar_lea.sflag [#allocation4], %s240
        %s242 = sand.u32 %s119, 1
        %s243 = smul.addr %s242, 256
        %s244 = scalar_lea.vmem [#allocation8], %s243
        %v246 = vlaneseq
        %v247 = vshrl.u32 %v246, 7
        %v248 = vadd.s32 %v247, 8
        %v249 = vadd.s32 %v247, 16
        %v250 = vadd.s32 %v247, 24
        %v251 = vadd.s32 %v247, 32
        %v252 = vadd.s32 %v247, 40
        %v253 = vadd.s32 %v247, 48
        %v254 = vadd.s32 %v247, 56
        %v255 = vadd.s32 %v247, 64
        %v256 = vadd.s32 %v247, 72
        %v257 = vadd.s32 %v247, 80
        %v258 = vadd.s32 %v247, 88
        %v259 = vadd.s32 %v247, 96
        %v260 = vadd.s32 %v247, 104
        %v261 = vadd.s32 %v247, 112
        %v262 = vadd.s32 %v247, 120
        %v263 = vlaneseq
        %v264 = vand.u32 %v263, 127
        %vm265 = vcmp.le.s32.totalorder %v264, %v247
        %vm266 = vcmp.le.s32.totalorder %v264, %v248
        %vm267 = vcmp.le.s32.totalorder %v264, %v249
        %vm268 = vcmp.le.s32.totalorder %v264, %v250
        %vm269 = vcmp.le.s32.totalorder %v264, %v251
        %vm270 = vcmp.le.s32.totalorder %v264, %v252
        %vm271 = vcmp.le.s32.totalorder %v264, %v253
        %vm272 = vcmp.le.s32.totalorder %v264, %v254
        %vm273 = vcmp.le.s32.totalorder %v264, %v255
        %vm274 = vcmp.le.s32.totalorder %v264, %v256
        %vm275 = vcmp.le.s32.totalorder %v264, %v257
        %vm276 = vcmp.le.s32.totalorder %v264, %v258
        %vm277 = vcmp.le.s32.totalorder %v264, %v259
        %vm278 = vcmp.le.s32.totalorder %v264, %v260
        %vm279 = vcmp.le.s32.totalorder %v264, %v261
        %vm280 = vcmp.le.s32.totalorder %v264, %v262
        %v281 = vld [vmem:[%s212] sm:$0xff]
        %v282 = vld [vmem:[%s212 + $0x8] sm:$0xff]
        %v283 = vld [vmem:[%s212 + $0x10] sm:$0xff]
        %v284 = vld [vmem:[%s212 + $0x18] sm:$0xff]
        %v285 = vld [vmem:[%s212 + $0x20] sm:$0xff]
        %v286 = vld [vmem:[%s212 + $0x28] sm:$0xff]
        %v287 = vld [vmem:[%s212 + $0x30] sm:$0xff]
        %v288 = vld [vmem:[%s212 + $0x38] sm:$0xff]
        %v289 = vld [vmem:[%s212 + $0x40] sm:$0xff]
        %v290 = vld [vmem:[%s212 + $0x48] sm:$0xff]
        %v291 = vld [vmem:[%s212 + $0x50] sm:$0xff]
        %v292 = vld [vmem:[%s212 + $0x58] sm:$0xff]
        %v293 = vld [vmem:[%s212 + $0x60] sm:$0xff]
        %v294 = vld [vmem:[%s212 + $0x68] sm:$0xff]
        %v295 = vld [vmem:[%s212 + $0x70] sm:$0xff]
        %v296 = vld [vmem:[%s212 + $0x78] sm:$0xff]
        %v297 = vld [vmem:[#allocation5] sm:$0xff]
        %v298 = vld [vmem:[#allocation5 + $0x8] sm:$0xff]
        %v299 = vld [vmem:[#allocation5 + $0x10] sm:$0xff]
        %v300 = vld [vmem:[#allocation5 + $0x18] sm:$0xff]
        %v301 = vld [vmem:[#allocation5 + $0x20] sm:$0xff]
        %v302 = vld [vmem:[#allocation5 + $0x28] sm:$0xff]
        %v303 = vld [vmem:[#allocation5 + $0x30] sm:$0xff]
        %v304 = vld [vmem:[#allocation5 + $0x38] sm:$0xff]
        %v305 = vld [vmem:[#allocation5 + $0x40] sm:$0xff]
        %v306 = vld [vmem:[#allocation5 + $0x48] sm:$0xff]
        %v307 = vld [vmem:[#allocation5 + $0x50] sm:$0xff]
        %v308 = vld [vmem:[#allocation5 + $0x58] sm:$0xff]
        %v309 = vld [vmem:[#allocation5 + $0x60] sm:$0xff]
        %v310 = vld [vmem:[#allocation5 + $0x68] sm:$0xff]
        %v311 = vld [vmem:[#allocation5 + $0x70] sm:$0xff]
        %v312 = vld [vmem:[#allocation5 + $0x78] sm:$0xff]
        %v313 = vld [vmem:[#allocation5 + $0x80] sm:$0xff]
        %v314 = vld [vmem:[#allocation5 + $0x88] sm:$0xff]
        %v315 = vld [vmem:[#allocation5 + $0x90] sm:$0xff]
        %v316 = vld [vmem:[#allocation5 + $0x98] sm:$0xff]
        %v317 = vld [vmem:[#allocation5 + $0xa0] sm:$0xff]
        %v318 = vld [vmem:[#allocation5 + $0xa8] sm:$0xff]
        %v319 = vld [vmem:[#allocation5 + $0xb0] sm:$0xff]
        %v320 = vld [vmem:[#allocation5 + $0xb8] sm:$0xff]
        %v321 = vld [vmem:[#allocation5 + $0xc0] sm:$0xff]
        %v322 = vld [vmem:[#allocation5 + $0xc8] sm:$0xff]
        %v323 = vld [vmem:[#allocation5 + $0xd0] sm:$0xff]
        %v324 = vld [vmem:[#allocation5 + $0xd8] sm:$0xff]
        %v325 = vld [vmem:[#allocation5 + $0xe0] sm:$0xff]
        %v326 = vld [vmem:[#allocation5 + $0xe8] sm:$0xff]
        %v327 = vld [vmem:[#allocation5 + $0xf0] sm:$0xff]
        %v328 = vld [vmem:[#allocation5 + $0xf8] sm:$0xff]
        %v329 = vld [vmem:[#allocation5 + $0x100] sm:$0xff]
        %v330 = vld [vmem:[#allocation5 + $0x108] sm:$0xff]
        %v331 = vld [vmem:[#allocation5 + $0x110] sm:$0xff]
        %v332 = vld [vmem:[#allocation5 + $0x118] sm:$0xff]
        %v333 = vld [vmem:[#allocation5 + $0x120] sm:$0xff]
        %v334 = vld [vmem:[#allocation5 + $0x128] sm:$0xff]
        %v335 = vld [vmem:[#allocation5 + $0x130] sm:$0xff]
        %v336 = vld [vmem:[#allocation5 + $0x138] sm:$0xff]
        %v337 = vld [vmem:[#allocation5 + $0x140] sm:$0xff]
        %v338 = vld [vmem:[#allocation5 + $0x148] sm:$0xff]
        %v339 = vld [vmem:[#allocation5 + $0x150] sm:$0xff]
        %v340 = vld [vmem:[#allocation5 + $0x158] sm:$0xff]
        %v341 = vld [vmem:[#allocation5 + $0x160] sm:$0xff]
        %v342 = vld [vmem:[#allocation5 + $0x168] sm:$0xff]
        %v343 = vld [vmem:[#allocation5 + $0x170] sm:$0xff]
        %v344 = vld [vmem:[#allocation5 + $0x178] sm:$0xff]
        %v345 = vld [vmem:[#allocation5 + $0x180] sm:$0xff]
        %v346 = vld [vmem:[#allocation5 + $0x188] sm:$0xff]
        %v347 = vld [vmem:[#allocation5 + $0x190] sm:$0xff]
        %v348 = vld [vmem:[#allocation5 + $0x198] sm:$0xff]
        %v349 = vld [vmem:[#allocation5 + $0x1a0] sm:$0xff]
        %v350 = vld [vmem:[#allocation5 + $0x1a8] sm:$0xff]
        %v351 = vld [vmem:[#allocation5 + $0x1b0] sm:$0xff]
        %v352 = vld [vmem:[#allocation5 + $0x1b8] sm:$0xff]
        %v353 = vld [vmem:[#allocation5 + $0x1c0] sm:$0xff]
        %v354 = vld [vmem:[#allocation5 + $0x1c8] sm:$0xff]
        %v355 = vld [vmem:[#allocation5 + $0x1d0] sm:$0xff]
        %v356 = vld [vmem:[#allocation5 + $0x1d8] sm:$0xff]
        %v357 = vld [vmem:[#allocation5 + $0x1e0] sm:$0xff]
        %v358 = vld [vmem:[#allocation5 + $0x1e8] sm:$0xff]
        %v359 = vld [vmem:[#allocation5 + $0x1f0] sm:$0xff]
        %v360 = vld [vmem:[#allocation5 + $0x1f8] sm:$0xff]
        %v361 = vld [vmem:[#allocation5 + $0x200] sm:$0xff]
        %v362 = vld [vmem:[#allocation5 + $0x208] sm:$0xff]
        %v363 = vld [vmem:[#allocation5 + $0x210] sm:$0xff]
        %v364 = vld [vmem:[#allocation5 + $0x218] sm:$0xff]
        %v365 = vld [vmem:[#allocation5 + $0x220] sm:$0xff]
        %v366 = vld [vmem:[#allocation5 + $0x228] sm:$0xff]
        %v367 = vld [vmem:[#allocation5 + $0x230] sm:$0xff]
        %v368 = vld [vmem:[#allocation5 + $0x238] sm:$0xff]
        %v369 = vld [vmem:[#allocation5 + $0x240] sm:$0xff]
        %v370 = vld [vmem:[#allocation5 + $0x248] sm:$0xff]
        %v371 = vld [vmem:[#allocation5 + $0x250] sm:$0xff]
        %v372 = vld [vmem:[#allocation5 + $0x258] sm:$0xff]
        %v373 = vld [vmem:[#allocation5 + $0x260] sm:$0xff]
        %v374 = vld [vmem:[#allocation5 + $0x268] sm:$0xff]
        %v375 = vld [vmem:[#allocation5 + $0x270] sm:$0xff]
        %v376 = vld [vmem:[#allocation5 + $0x278] sm:$0xff]
        %v377 = vld [vmem:[#allocation5 + $0x280] sm:$0xff]
        %v378 = vld [vmem:[#allocation5 + $0x288] sm:$0xff]
        %v379 = vld [vmem:[#allocation5 + $0x290] sm:$0xff]
        %v380 = vld [vmem:[#allocation5 + $0x298] sm:$0xff]
        %v381 = vld [vmem:[#allocation5 + $0x2a0] sm:$0xff]
        %v382 = vld [vmem:[#allocation5 + $0x2a8] sm:$0xff]
        %v383 = vld [vmem:[#allocation5 + $0x2b0] sm:$0xff]
        %v384 = vld [vmem:[#allocation5 + $0x2b8] sm:$0xff]
        %v385 = vld [vmem:[#allocation5 + $0x2c0] sm:$0xff]
        %v386 = vld [vmem:[#allocation5 + $0x2c8] sm:$0xff]
        %v387 = vld [vmem:[#allocation5 + $0x2d0] sm:$0xff]
        %v388 = vld [vmem:[#allocation5 + $0x2d8] sm:$0xff]
        %v389 = vld [vmem:[#allocation5 + $0x2e0] sm:$0xff]
        %v390 = vld [vmem:[#allocation5 + $0x2e8] sm:$0xff]
        %v391 = vld [vmem:[#allocation5 + $0x2f0] sm:$0xff]
        %v392 = vld [vmem:[#allocation5 + $0x2f8] sm:$0xff]
        %v409 = vunpack.c.l.b16 %v281
        %v410 = vunpack.c.h.b16 %v281
        %v411 = vunpack.c.l.b16 %v282
        %v412 = vunpack.c.h.b16 %v282
        %v413 = vunpack.c.l.b16 %v283
        %v414 = vunpack.c.h.b16 %v283
        %v415 = vunpack.c.l.b16 %v284
        %v416 = vunpack.c.h.b16 %v284
        %v417 = vunpack.c.l.b16 %v285
        %v418 = vunpack.c.h.b16 %v285
        %v419 = vunpack.c.l.b16 %v286
        %v420 = vunpack.c.h.b16 %v286
        %v421 = vunpack.c.l.b16 %v287
        %v422 = vunpack.c.h.b16 %v287
        %v423 = vunpack.c.l.b16 %v288
        %v424 = vunpack.c.h.b16 %v288
        %v425 = vunpack.c.l.b16 %v289
        %v426 = vunpack.c.h.b16 %v289
        %v427 = vunpack.c.l.b16 %v290
        %v428 = vunpack.c.h.b16 %v290
        %v429 = vunpack.c.l.b16 %v291
        %v430 = vunpack.c.h.b16 %v291
        %v431 = vunpack.c.l.b16 %v292
        %v432 = vunpack.c.h.b16 %v292
        %v433 = vunpack.c.l.b16 %v293
        %v434 = vunpack.c.h.b16 %v293
        %v435 = vunpack.c.l.b16 %v294
        %v436 = vunpack.c.h.b16 %v294
        %v437 = vunpack.c.l.b16 %v295
        %v438 = vunpack.c.h.b16 %v295
        %v439 = vunpack.c.l.b16 %v296
        %v440 = vunpack.c.h.b16 %v296
        %v441 = vpack.c.b16 %v411, %v409
        %v442 = vpack.c.b16 %v412, %v410
        %v443 = vpack.c.b16 %v415, %v413
        %v444 = vpack.c.b16 %v416, %v414
        %v445 = vpack.c.b16 %v419, %v417
        %v446 = vpack.c.b16 %v420, %v418
        %v447 = vpack.c.b16 %v423, %v421
        %v448 = vpack.c.b16 %v424, %v422
        %v449 = vpack.c.b16 %v427, %v425
        %v450 = vpack.c.b16 %v428, %v426
        %v451 = vpack.c.b16 %v431, %v429
        %v452 = vpack.c.b16 %v432, %v430
        %v453 = vpack.c.b16 %v435, %v433
        %v454 = vpack.c.b16 %v436, %v434
        %v455 = vpack.c.b16 %v439, %v437
        %v456 = vpack.c.b16 %v440, %v438
        %v569 = vunpack.c.l.b16 %v297
        %v570 = vunpack.c.h.b16 %v297
        %v571 = vunpack.c.l.b16 %v298
        %v572 = vunpack.c.h.b16 %v298
        %v573 = vunpack.c.l.b16 %v299
        %v574 = vunpack.c.h.b16 %v299
        %v575 = vunpack.c.l.b16 %v300
        %v576 = vunpack.c.h.b16 %v300
        %v577 = vunpack.c.l.b16 %v301
        %v578 = vunpack.c.h.b16 %v301
        %v579 = vunpack.c.l.b16 %v302
        %v580 = vunpack.c.h.b16 %v302
        %v581 = vunpack.c.l.b16 %v303
        %v582 = vunpack.c.h.b16 %v303
        %v583 = vunpack.c.l.b16 %v304
        %v584 = vunpack.c.h.b16 %v304
        %v585 = vunpack.c.l.b16 %v305
        %v586 = vunpack.c.h.b16 %v305
        %v587 = vunpack.c.l.b16 %v306
        %v588 = vunpack.c.h.b16 %v306
        %v589 = vunpack.c.l.b16 %v307
        %v590 = vunpack.c.h.b16 %v307
        %v591 = vunpack.c.l.b16 %v308
        %v592 = vunpack.c.h.b16 %v308
        %v593 = vunpack.c.l.b16 %v309
        %v594 = vunpack.c.h.b16 %v309
        %v595 = vunpack.c.l.b16 %v310
        %v596 = vunpack.c.h.b16 %v310
        %v597 = vunpack.c.l.b16 %v311
        %v598 = vunpack.c.h.b16 %v311
        %v599 = vunpack.c.l.b16 %v312
        %v600 = vunpack.c.h.b16 %v312
        %v601 = vunpack.c.l.b16 %v313
        %v602 = vunpack.c.h.b16 %v313
        %v603 = vunpack.c.l.b16 %v314
        %v604 = vunpack.c.h.b16 %v314
        %v605 = vunpack.c.l.b16 %v315
        %v606 = vunpack.c.h.b16 %v315
        %v607 = vunpack.c.l.b16 %v316
        %v608 = vunpack.c.h.b16 %v316
        %v609 = vunpack.c.l.b16 %v317
        %v610 = vunpack.c.h.b16 %v317
        %v611 = vunpack.c.l.b16 %v318
        %v612 = vunpack.c.h.b16 %v318
        %v613 = vunpack.c.l.b16 %v319
        %v614 = vunpack.c.h.b16 %v319
        %v615 = vunpack.c.l.b16 %v320
        %v616 = vunpack.c.h.b16 %v320
        %v617 = vunpack.c.l.b16 %v321
        %v618 = vunpack.c.h.b16 %v321
        %v619 = vunpack.c.l.b16 %v322
        %v620 = vunpack.c.h.b16 %v322
        %v621 = vunpack.c.l.b16 %v323
        %v622 = vunpack.c.h.b16 %v323
        %v623 = vunpack.c.l.b16 %v324
        %v624 = vunpack.c.h.b16 %v324
        %v625 = vunpack.c.l.b16 %v325
        %v626 = vunpack.c.h.b16 %v325
        %v627 = vunpack.c.l.b16 %v326
        %v628 = vunpack.c.h.b16 %v326
        %v629 = vunpack.c.l.b16 %v327
        %v630 = vunpack.c.h.b16 %v327
        %v631 = vunpack.c.l.b16 %v328
        %v632 = vunpack.c.h.b16 %v328
        %v633 = vunpack.c.l.b16 %v329
        %v634 = vunpack.c.h.b16 %v329
        %v635 = vunpack.c.l.b16 %v330
        %v636 = vunpack.c.h.b16 %v330
        %v637 = vunpack.c.l.b16 %v331
        %v638 = vunpack.c.h.b16 %v331
        %v639 = vunpack.c.l.b16 %v332
        %v640 = vunpack.c.h.b16 %v332
        %v641 = vunpack.c.l.b16 %v333
        %v642 = vunpack.c.h.b16 %v333
        %v643 = vunpack.c.l.b16 %v334
        %v644 = vunpack.c.h.b16 %v334
        %v645 = vunpack.c.l.b16 %v335
        %v646 = vunpack.c.h.b16 %v335
        %v647 = vunpack.c.l.b16 %v336
        %v648 = vunpack.c.h.b16 %v336
        %v649 = vunpack.c.l.b16 %v337
        %v650 = vunpack.c.h.b16 %v337
        %v651 = vunpack.c.l.b16 %v338
        %v652 = vunpack.c.h.b16 %v338
        %v653 = vunpack.c.l.b16 %v339
        %v654 = vunpack.c.h.b16 %v339
        %v655 = vunpack.c.l.b16 %v340
        %v656 = vunpack.c.h.b16 %v340
        %v657 = vunpack.c.l.b16 %v341
        %v658 = vunpack.c.h.b16 %v341
        %v659 = vunpack.c.l.b16 %v342
        %v660 = vunpack.c.h.b16 %v342
        %v661 = vunpack.c.l.b16 %v343
        %v662 = vunpack.c.h.b16 %v343
        %v663 = vunpack.c.l.b16 %v344
        %v664 = vunpack.c.h.b16 %v344
        %v665 = vunpack.c.l.b16 %v345
        %v666 = vunpack.c.h.b16 %v345
        %v667 = vunpack.c.l.b16 %v346
        %v668 = vunpack.c.h.b16 %v346
        %v669 = vunpack.c.l.b16 %v347
        %v670 = vunpack.c.h.b16 %v347
        %v671 = vunpack.c.l.b16 %v348
        %v672 = vunpack.c.h.b16 %v348
        %v673 = vunpack.c.l.b16 %v349
        %v674 = vunpack.c.h.b16 %v349
        %v675 = vunpack.c.l.b16 %v350
        %v676 = vunpack.c.h.b16 %v350
        %v677 = vunpack.c.l.b16 %v351
        %v678 = vunpack.c.h.b16 %v351
        %v679 = vunpack.c.l.b16 %v352
        %v680 = vunpack.c.h.b16 %v352
        %v681 = vunpack.c.l.b16 %v353
        %v682 = vunpack.c.h.b16 %v353
        %v683 = vunpack.c.l.b16 %v354
        %v684 = vunpack.c.h.b16 %v354
        %v685 = vunpack.c.l.b16 %v355
        %v686 = vunpack.c.h.b16 %v355
        %v687 = vunpack.c.l.b16 %v356
        %v688 = vunpack.c.h.b16 %v356
        %v689 = vunpack.c.l.b16 %v357
        %v690 = vunpack.c.h.b16 %v357
        %v691 = vunpack.c.l.b16 %v358
        %v692 = vunpack.c.h.b16 %v358
        %v693 = vunpack.c.l.b16 %v359
        %v694 = vunpack.c.h.b16 %v359
        %v695 = vunpack.c.l.b16 %v360
        %v696 = vunpack.c.h.b16 %v360
        %v697 = vunpack.c.l.b16 %v361
        %v698 = vunpack.c.h.b16 %v361
        %v699 = vunpack.c.l.b16 %v362
        %v700 = vunpack.c.h.b16 %v362
        %v701 = vunpack.c.l.b16 %v363
        %v702 = vunpack.c.h.b16 %v363
        %v703 = vunpack.c.l.b16 %v364
        %v704 = vunpack.c.h.b16 %v364
        %v705 = vunpack.c.l.b16 %v365
        %v706 = vunpack.c.h.b16 %v365
        %v707 = vunpack.c.l.b16 %v366
        %v708 = vunpack.c.h.b16 %v366
        %v709 = vunpack.c.l.b16 %v367
        %v710 = vunpack.c.h.b16 %v367
        %v711 = vunpack.c.l.b16 %v368
        %v712 = vunpack.c.h.b16 %v368
        %v713 = vunpack.c.l.b16 %v369
        %v714 = vunpack.c.h.b16 %v369
        %v715 = vunpack.c.l.b16 %v370
        %v716 = vunpack.c.h.b16 %v370
        %v717 = vunpack.c.l.b16 %v371
        %v718 = vunpack.c.h.b16 %v371
        %v719 = vunpack.c.l.b16 %v372
        %v720 = vunpack.c.h.b16 %v372
        %v721 = vunpack.c.l.b16 %v373
        %v722 = vunpack.c.h.b16 %v373
        %v723 = vunpack.c.l.b16 %v374
        %v724 = vunpack.c.h.b16 %v374
        %v725 = vunpack.c.l.b16 %v375
        %v726 = vunpack.c.h.b16 %v375
        %v727 = vunpack.c.l.b16 %v376
        %v728 = vunpack.c.h.b16 %v376
        %v729 = vunpack.c.l.b16 %v377
        %v730 = vunpack.c.h.b16 %v377
        %v731 = vunpack.c.l.b16 %v378
        %v732 = vunpack.c.h.b16 %v378
        %v733 = vunpack.c.l.b16 %v379
        %v734 = vunpack.c.h.b16 %v379
        %v735 = vunpack.c.l.b16 %v380
        %v736 = vunpack.c.h.b16 %v380
        %v737 = vunpack.c.l.b16 %v381
        %v738 = vunpack.c.h.b16 %v381
        %v739 = vunpack.c.l.b16 %v382
        %v740 = vunpack.c.h.b16 %v382
        %v741 = vunpack.c.l.b16 %v383
        %v742 = vunpack.c.h.b16 %v383
        %v743 = vunpack.c.l.b16 %v384
        %v744 = vunpack.c.h.b16 %v384
        %v745 = vunpack.c.l.b16 %v385
        %v746 = vunpack.c.h.b16 %v385
        %v747 = vunpack.c.l.b16 %v386
        %v748 = vunpack.c.h.b16 %v386
        %v749 = vunpack.c.l.b16 %v387
        %v750 = vunpack.c.h.b16 %v387
        %v751 = vunpack.c.l.b16 %v388
        %v752 = vunpack.c.h.b16 %v388
        %v753 = vunpack.c.l.b16 %v389
        %v754 = vunpack.c.h.b16 %v389
        %v755 = vunpack.c.l.b16 %v390
        %v756 = vunpack.c.h.b16 %v390
        %v757 = vunpack.c.l.b16 %v391
        %v758 = vunpack.c.h.b16 %v391
        %v759 = vunpack.c.l.b16 %v392
        %v760 = vunpack.c.h.b16 %v392
        %v761 = vpack.c.b16 %v575, %v569
        %v762 = vpack.c.b16 %v576, %v570
        %v763 = vpack.c.b16 %v577, %v571
        %v764 = vpack.c.b16 %v578, %v572
        %v765 = vpack.c.b16 %v579, %v573
        %v766 = vpack.c.b16 %v580, %v574
        %v767 = vpack.c.b16 %v587, %v581
        %v768 = vpack.c.b16 %v588, %v582
        %v769 = vpack.c.b16 %v589, %v583
        %v770 = vpack.c.b16 %v590, %v584
        %v771 = vpack.c.b16 %v591, %v585
        %v772 = vpack.c.b16 %v592, %v586
        %v773 = vpack.c.b16 %v599, %v593
        %v774 = vpack.c.b16 %v600, %v594
        %v775 = vpack.c.b16 %v601, %v595
        %v776 = vpack.c.b16 %v602, %v596
        %v777 = vpack.c.b16 %v603, %v597
        %v778 = vpack.c.b16 %v604, %v598
        %v779 = vpack.c.b16 %v611, %v605
        %v780 = vpack.c.b16 %v612, %v606
        %v781 = vpack.c.b16 %v613, %v607
        %v782 = vpack.c.b16 %v614, %v608
        %v783 = vpack.c.b16 %v615, %v609
        %v784 = vpack.c.b16 %v616, %v610
        %v785 = vpack.c.b16 %v623, %v617
        %v786 = vpack.c.b16 %v624, %v618
        %v787 = vpack.c.b16 %v625, %v619
        %v788 = vpack.c.b16 %v626, %v620
        %v789 = vpack.c.b16 %v627, %v621
        %v790 = vpack.c.b16 %v628, %v622
        %v791 = vpack.c.b16 %v635, %v629
        %v792 = vpack.c.b16 %v636, %v630
        %v793 = vpack.c.b16 %v637, %v631
        %v794 = vpack.c.b16 %v638, %v632
        %v795 = vpack.c.b16 %v639, %v633
        %v796 = vpack.c.b16 %v640, %v634
        %v797 = vpack.c.b16 %v647, %v641
        %v798 = vpack.c.b16 %v648, %v642
        %v799 = vpack.c.b16 %v649, %v643
        %v800 = vpack.c.b16 %v650, %v644
        %v801 = vpack.c.b16 %v651, %v645
        %v802 = vpack.c.b16 %v652, %v646
        %v803 = vpack.c.b16 %v659, %v653
        %v804 = vpack.c.b16 %v660, %v654
        %v805 = vpack.c.b16 %v661, %v655
        %v806 = vpack.c.b16 %v662, %v656
        %v807 = vpack.c.b16 %v663, %v657
        %v808 = vpack.c.b16 %v664, %v658
        %v809 = vpack.c.b16 %v671, %v665
        %v810 = vpack.c.b16 %v672, %v666
        %v811 = vpack.c.b16 %v673, %v667
        %v812 = vpack.c.b16 %v674, %v668
        %v813 = vpack.c.b16 %v675, %v669
        %v814 = vpack.c.b16 %v676, %v670
        %v815 = vpack.c.b16 %v683, %v677
        %v816 = vpack.c.b16 %v684, %v678
        %v817 = vpack.c.b16 %v685, %v679
        %v818 = vpack.c.b16 %v686, %v680
        %v819 = vpack.c.b16 %v687, %v681
        %v820 = vpack.c.b16 %v688, %v682
        %v821 = vpack.c.b16 %v695, %v689
        %v822 = vpack.c.b16 %v696, %v690
        %v823 = vpack.c.b16 %v697, %v691
        %v824 = vpack.c.b16 %v698, %v692
        %v825 = vpack.c.b16 %v699, %v693
        %v826 = vpack.c.b16 %v700, %v694
        %v827 = vpack.c.b16 %v707, %v701
        %v828 = vpack.c.b16 %v708, %v702
        %v829 = vpack.c.b16 %v709, %v703
        %v830 = vpack.c.b16 %v710, %v704
        %v831 = vpack.c.b16 %v711, %v705
        %v832 = vpack.c.b16 %v712, %v706
        %v833 = vpack.c.b16 %v719, %v713
        %v834 = vpack.c.b16 %v720, %v714
        %v835 = vpack.c.b16 %v721, %v715
        %v836 = vpack.c.b16 %v722, %v716
        %v837 = vpack.c.b16 %v723, %v717
        %v838 = vpack.c.b16 %v724, %v718
        %v839 = vpack.c.b16 %v731, %v725
        %v840 = vpack.c.b16 %v732, %v726
        %v841 = vpack.c.b16 %v733, %v727
        %v842 = vpack.c.b16 %v734, %v728
        %v843 = vpack.c.b16 %v735, %v729
        %v844 = vpack.c.b16 %v736, %v730
        %v845 = vpack.c.b16 %v743, %v737
        %v846 = vpack.c.b16 %v744, %v738
        %v847 = vpack.c.b16 %v745, %v739
        %v848 = vpack.c.b16 %v746, %v740
        %v849 = vpack.c.b16 %v747, %v741
        %v850 = vpack.c.b16 %v748, %v742
        %v851 = vpack.c.b16 %v755, %v749
        %v852 = vpack.c.b16 %v756, %v750
        %v853 = vpack.c.b16 %v757, %v751
        %v854 = vpack.c.b16 %v758, %v752
        %v855 = vpack.c.b16 %v759, %v753
        %v856 = vpack.c.b16 %v760, %v754
        %953 = vmatprep.subr.bf16.mxu0 %v804
        %954 = vmatpush1.bf16.msra.mxu0 %v803
        %955 = vmatprep.subr.bf16.mxu0 %v798
        %956 = vmatpush1.bf16.msra.mxu0 %v797
        %957 = vmatprep.subr.bf16.mxu0 %v792
        %958 = vmatpush1.bf16.msra.mxu0 %v791
        %959 = vmatprep.subr.bf16.mxu0 %v786
        %960 = vmatpush1.bf16.msra.mxu0 %v785
        %961 = vmatprep.subr.bf16.mxu0 %v780
        %962 = vmatpush1.bf16.msra.mxu0 %v779
        %963 = vmatprep.subr.bf16.mxu0 %v774
        %964 = vmatpush1.bf16.msra.mxu0 %v773
        %965 = vmatprep.subr.bf16.mxu0 %v768
        %966 = vmatpush1.bf16.msra.mxu0 %v767
        %967 = vmatprep.subr.bf16.mxu0 %v762
        %968 = vmatpush1.bf16.msra.mxu0 %v761
        %969 = vmatprep.subr.bf16.mxu0 %v852
        %970 = vmatpush2.bf16.msra.mxu0 %v851
        %971 = vmatprep.subr.bf16.mxu0 %v846
        %972 = vmatpush2.bf16.msra.mxu0 %v845
        %973 = vmatprep.subr.bf16.mxu0 %v840
        %974 = vmatpush2.bf16.msra.mxu0 %v839
        %975 = vmatprep.subr.bf16.mxu0 %v834
        %976 = vmatpush2.bf16.msra.mxu0 %v833
        %977 = vmatprep.subr.bf16.mxu0 %v828
        %978 = vmatpush2.bf16.msra.mxu0 %v827
        %979 = vmatprep.subr.bf16.mxu0 %v822
        %980 = vmatpush2.bf16.msra.mxu0 %v821
        %981 = vmatprep.subr.bf16.mxu0 %v816
        %982 = vmatpush2.bf16.msra.mxu0 %v815
        %983 = vmatprep.subr.bf16.mxu0 %v810
        %984 = vmatpush2.bf16.msra.mxu0 %v809
        %985 = vmatprep.mubr.bf16.mxu0 %v442
        %986 = vmatmul.mubr.bf16.gmra.mxu0 %v441
        %v987 = vpop.f32.mrf.mxu0
        %v988 = vadd.f32 0.0, %v987
        %v989 = vpop.f32.mrf.mxu0
        %v990 = vadd.f32 0.0, %v989
        %v991 = vpop.f32.mrf.mxu0
        %v992 = vadd.f32 0.0, %v991
        %v993 = vpop.f32.mrf.mxu0
        %v994 = vadd.f32 0.0, %v993
        %995 = vmatprep.mubr.bf16.mxu0 %v444
        %996 = vmatmul.mubr.bf16.gmra.mxu0 %v443
        %v997 = vpop.f32.mrf.mxu0
        %v998 = vadd.f32 0.0, %v997
        %v999 = vpop.f32.mrf.mxu0
        %v1000 = vadd.f32 0.0, %v999
        %v1001 = vpop.f32.mrf.mxu0
        %v1002 = vadd.f32 0.0, %v1001
        %v1003 = vpop.f32.mrf.mxu0
        %v1004 = vadd.f32 0.0, %v1003
        %1005 = vmatprep.mubr.bf16.mxu0 %v446
        %1006 = vmatmul.mubr.bf16.gmra.mxu0 %v445
        %v1007 = vpop.f32.mrf.mxu0
        %v1008 = vadd.f32 0.0, %v1007
        %v1009 = vpop.f32.mrf.mxu0
        %v1010 = vadd.f32 0.0, %v1009
        %v1011 = vpop.f32.mrf.mxu0
        %v1012 = vadd.f32 0.0, %v1011
        %v1013 = vpop.f32.mrf.mxu0
        %v1014 = vadd.f32 0.0, %v1013
        %1015 = vmatprep.mubr.bf16.mxu0 %v448
        %1016 = vmatmul.mubr.bf16.gmra.mxu0 %v447
        %v1017 = vpop.f32.mrf.mxu0
        %v1018 = vadd.f32 0.0, %v1017
        %v1019 = vpop.f32.mrf.mxu0
        %v1020 = vadd.f32 0.0, %v1019
        %v1021 = vpop.f32.mrf.mxu0
        %v1022 = vadd.f32 0.0, %v1021
        %v1023 = vpop.f32.mrf.mxu0
        %v1024 = vadd.f32 0.0, %v1023
        %1025 = vmatprep.mubr.bf16.mxu0 %v450
        %1026 = vmatmul.mubr.bf16.gmra.mxu0 %v449
        %v1027 = vpop.f32.mrf.mxu0
        %v1028 = vadd.f32 0.0, %v1027
        %v1029 = vpop.f32.mrf.mxu0
        %v1030 = vadd.f32 0.0, %v1029
        %v1031 = vpop.f32.mrf.mxu0
        %v1032 = vadd.f32 0.0, %v1031
        %v1033 = vpop.f32.mrf.mxu0
        %v1034 = vadd.f32 0.0, %v1033
        %1035 = vmatprep.mubr.bf16.mxu0 %v452
        %1036 = vmatmul.mubr.bf16.gmra.mxu0 %v451
        %v1037 = vpop.f32.mrf.mxu0
        %v1038 = vadd.f32 0.0, %v1037
        %v1039 = vpop.f32.mrf.mxu0
        %v1040 = vadd.f32 0.0, %v1039
        %v1041 = vpop.f32.mrf.mxu0
        %v1042 = vadd.f32 0.0, %v1041
        %v1043 = vpop.f32.mrf.mxu0
        %v1044 = vadd.f32 0.0, %v1043
        %1045 = vmatprep.mubr.bf16.mxu0 %v454
        %1046 = vmatmul.mubr.bf16.gmra.mxu0 %v453
        %v1047 = vpop.f32.mrf.mxu0
        %v1048 = vadd.f32 0.0, %v1047
        %v1049 = vpop.f32.mrf.mxu0
        %v1050 = vadd.f32 0.0, %v1049
        %v1051 = vpop.f32.mrf.mxu0
        %v1052 = vadd.f32 0.0, %v1051
        %v1053 = vpop.f32.mrf.mxu0
        %v1054 = vadd.f32 0.0, %v1053
        %1055 = vmatprep.mubr.bf16.mxu0 %v456
        %1056 = vmatmul.mubr.bf16.gmra.mxu0 %v455
        %v1057 = vpop.f32.mrf.mxu0
        %v1058 = vadd.f32 0.0, %v1057
        %v1059 = vpop.f32.mrf.mxu0
        %v1060 = vadd.f32 0.0, %v1059
        %v1061 = vpop.f32.mrf.mxu0
        %v1062 = vadd.f32 0.0, %v1061
        %v1063 = vpop.f32.mrf.mxu0
        %v1064 = vadd.f32 0.0, %v1063
        %1065 = vdwg.mxu0
        %1066 = vmatprep.subr.bf16.mxu0 %v806
        %1067 = vmatpush1.bf16.msra.mxu0 %v805
        %1068 = vmatprep.subr.bf16.mxu0 %v800
        %1069 = vmatpush1.bf16.msra.mxu0 %v799
        %1070 = vmatprep.subr.bf16.mxu0 %v794
        %1071 = vmatpush1.bf16.msra.mxu0 %v793
        %1072 = vmatprep.subr.bf16.mxu0 %v788
        %1073 = vmatpush1.bf16.msra.mxu0 %v787
        %1074 = vmatprep.subr.bf16.mxu0 %v782
        %1075 = vmatpush1.bf16.msra.mxu0 %v781
        %1076 = vmatprep.subr.bf16.mxu0 %v776
        %1077 = vmatpush1.bf16.msra.mxu0 %v775
        %1078 = vmatprep.subr.bf16.mxu0 %v770
        %1079 = vmatpush1.bf16.msra.mxu0 %v769
        %1080 = vmatprep.subr.bf16.mxu0 %v764
        %1081 = vmatpush1.bf16.msra.mxu0 %v763
        %1082 = vmatprep.subr.bf16.mxu0 %v854
        %1083 = vmatpush2.bf16.msra.mxu0 %v853
        %1084 = vmatprep.subr.bf16.mxu0 %v848
        %1085 = vmatpush2.bf16.msra.mxu0 %v847
        %1086 = vmatprep.subr.bf16.mxu0 %v842
        %1087 = vmatpush2.bf16.msra.mxu0 %v841
        %1088 = vmatprep.subr.bf16.mxu0 %v836
        %1089 = vmatpush2.bf16.msra.mxu0 %v835
        %1090 = vmatprep.subr.bf16.mxu0 %v830
        %1091 = vmatpush2.bf16.msra.mxu0 %v829
        %1092 = vmatprep.subr.bf16.mxu0 %v824
        %1093 = vmatpush2.bf16.msra.mxu0 %v823
        %1094 = vmatprep.subr.bf16.mxu0 %v818
        %1095 = vmatpush2.bf16.msra.mxu0 %v817
        %1096 = vmatprep.subr.bf16.mxu0 %v812
        %1097 = vmatpush2.bf16.msra.mxu0 %v811
        %1098 = vmatprep.mubr.bf16.mxu0 %v442
        %1099 = vmatmul.mubr.bf16.gmra.mxu0 %v441
        %v1100 = vpop.f32.mrf.mxu0
        %v1101 = vadd.f32 0.0, %v1100
        %v1102 = vpop.f32.mrf.mxu0
        %v1103 = vadd.f32 0.0, %v1102
        %v1104 = vpop.f32.mrf.mxu0
        %v1105 = vadd.f32 0.0, %v1104
        %v1106 = vpop.f32.mrf.mxu0
        %v1107 = vadd.f32 0.0, %v1106
        %1108 = vmatprep.mubr.bf16.mxu0 %v444
        %1109 = vmatmul.mubr.bf16.gmra.mxu0 %v443
        %v1110 = vpop.f32.mrf.mxu0
        %v1111 = vadd.f32 0.0, %v1110
        %v1112 = vpop.f32.mrf.mxu0
        %v1113 = vadd.f32 0.0, %v1112
        %v1114 = vpop.f32.mrf.mxu0
        %v1115 = vadd.f32 0.0, %v1114
        %v1116 = vpop.f32.mrf.mxu0
        %v1117 = vadd.f32 0.0, %v1116
        %1118 = vmatprep.mubr.bf16.mxu0 %v446
        %1119 = vmatmul.mubr.bf16.gmra.mxu0 %v445
        %v1120 = vpop.f32.mrf.mxu0
        %v1121 = vadd.f32 0.0, %v1120
        %v1122 = vpop.f32.mrf.mxu0
        %v1123 = vadd.f32 0.0, %v1122
        %v1124 = vpop.f32.mrf.mxu0
        %v1125 = vadd.f32 0.0, %v1124
        %v1126 = vpop.f32.mrf.mxu0
        %v1127 = vadd.f32 0.0, %v1126
        %1128 = vmatprep.mubr.bf16.mxu0 %v448
        %1129 = vmatmul.mubr.bf16.gmra.mxu0 %v447
        %v1130 = vpop.f32.mrf.mxu0
        %v1131 = vadd.f32 0.0, %v1130
        %v1132 = vpop.f32.mrf.mxu0
        %v1133 = vadd.f32 0.0, %v1132
        %v1134 = vpop.f32.mrf.mxu0
        %v1135 = vadd.f32 0.0, %v1134
        %v1136 = vpop.f32.mrf.mxu0
        %v1137 = vadd.f32 0.0, %v1136
        %1138 = vmatprep.mubr.bf16.mxu0 %v450
        %1139 = vmatmul.mubr.bf16.gmra.mxu0 %v449
        %v1140 = vpop.f32.mrf.mxu0
        %v1141 = vadd.f32 0.0, %v1140
        %v1142 = vpop.f32.mrf.mxu0
        %v1143 = vadd.f32 0.0, %v1142
        %v1144 = vpop.f32.mrf.mxu0
        %v1145 = vadd.f32 0.0, %v1144
        %v1146 = vpop.f32.mrf.mxu0
        %v1147 = vadd.f32 0.0, %v1146
        %1148 = vmatprep.mubr.bf16.mxu0 %v452
        %1149 = vmatmul.mubr.bf16.gmra.mxu0 %v451
        %v1150 = vpop.f32.mrf.mxu0
        %v1151 = vadd.f32 0.0, %v1150
        %v1152 = vpop.f32.mrf.mxu0
        %v1153 = vadd.f32 0.0, %v1152
        %v1154 = vpop.f32.mrf.mxu0
        %v1155 = vadd.f32 0.0, %v1154
        %v1156 = vpop.f32.mrf.mxu0
        %v1157 = vadd.f32 0.0, %v1156
        %1158 = vmatprep.mubr.bf16.mxu0 %v454
        %1159 = vmatmul.mubr.bf16.gmra.mxu0 %v453
        %v1160 = vpop.f32.mrf.mxu0
        %v1161 = vadd.f32 0.0, %v1160
        %v1162 = vpop.f32.mrf.mxu0
        %v1163 = vadd.f32 0.0, %v1162
        %v1164 = vpop.f32.mrf.mxu0
        %v1165 = vadd.f32 0.0, %v1164
        %v1166 = vpop.f32.mrf.mxu0
        %v1167 = vadd.f32 0.0, %v1166
        %1168 = vmatprep.mubr.bf16.mxu0 %v456
        %1169 = vmatmul.mubr.bf16.gmra.mxu0 %v455
        %v1170 = vpop.f32.mrf.mxu0
        %v1171 = vadd.f32 0.0, %v1170
        %v1172 = vpop.f32.mrf.mxu0
        %v1173 = vadd.f32 0.0, %v1172
        %v1174 = vpop.f32.mrf.mxu0
        %v1175 = vadd.f32 0.0, %v1174
        %v1176 = vpop.f32.mrf.mxu0
        %v1177 = vadd.f32 0.0, %v1176
        %1178 = vdwg.mxu0
        %1179 = vmatprep.subr.bf16.mxu0 %v808
        %1180 = vmatpush1.bf16.msra.mxu0 %v807
        %1181 = vmatprep.subr.bf16.mxu0 %v802
        %1182 = vmatpush1.bf16.msra.mxu0 %v801
        %1183 = vmatprep.subr.bf16.mxu0 %v796
        %1184 = vmatpush1.bf16.msra.mxu0 %v795
        %1185 = vmatprep.subr.bf16.mxu0 %v790
        %1186 = vmatpush1.bf16.msra.mxu0 %v789
        %1187 = vmatprep.subr.bf16.mxu0 %v784
        %1188 = vmatpush1.bf16.msra.mxu0 %v783
        %1189 = vmatprep.subr.bf16.mxu0 %v778
        %1190 = vmatpush1.bf16.msra.mxu0 %v777
        %1191 = vmatprep.subr.bf16.mxu0 %v772
        %1192 = vmatpush1.bf16.msra.mxu0 %v771
        %1193 = vmatprep.subr.bf16.mxu0 %v766
        %1194 = vmatpush1.bf16.msra.mxu0 %v765
        %1195 = vmatprep.subr.bf16.mxu0 %v856
        %1196 = vmatpush2.bf16.msra.mxu0 %v855
        %1197 = vmatprep.subr.bf16.mxu0 %v850
        %1198 = vmatpush2.bf16.msra.mxu0 %v849
        %1199 = vmatprep.subr.bf16.mxu0 %v844
        %1200 = vmatpush2.bf16.msra.mxu0 %v843
        %1201 = vmatprep.subr.bf16.mxu0 %v838
        %1202 = vmatpush2.bf16.msra.mxu0 %v837
        %1203 = vmatprep.subr.bf16.mxu0 %v832
        %1204 = vmatpush2.bf16.msra.mxu0 %v831
        %1205 = vmatprep.subr.bf16.mxu0 %v826
        %1206 = vmatpush2.bf16.msra.mxu0 %v825
        %1207 = vmatprep.subr.bf16.mxu0 %v820
        %1208 = vmatpush2.bf16.msra.mxu0 %v819
        %1209 = vmatprep.subr.bf16.mxu0 %v814
        %1210 = vmatpush2.bf16.msra.mxu0 %v813
        %1211 = vmatprep.mubr.bf16.mxu0 %v442
        %1212 = vmatmul.mubr.bf16.gmra.mxu0 %v441
        %v1213 = vpop.f32.mrf.mxu0
        %v1214 = vadd.f32 0.0, %v1213
        %v1215 = vpop.f32.mrf.mxu0
        %v1216 = vadd.f32 0.0, %v1215
        %v1217 = vpop.f32.mrf.mxu0
        %v1218 = vadd.f32 0.0, %v1217
        %v1219 = vpop.f32.mrf.mxu0
        %v1220 = vadd.f32 0.0, %v1219
        %1221 = vmatprep.mubr.bf16.mxu0 %v444
        %1222 = vmatmul.mubr.bf16.gmra.mxu0 %v443
        %v1223 = vpop.f32.mrf.mxu0
        %v1224 = vadd.f32 0.0, %v1223
        %v1225 = vpop.f32.mrf.mxu0
        %v1226 = vadd.f32 0.0, %v1225
        %v1227 = vpop.f32.mrf.mxu0
        %v1228 = vadd.f32 0.0, %v1227
        %v1229 = vpop.f32.mrf.mxu0
        %v1230 = vadd.f32 0.0, %v1229
        %1231 = vmatprep.mubr.bf16.mxu0 %v446
        %1232 = vmatmul.mubr.bf16.gmra.mxu0 %v445
        %v1233 = vpop.f32.mrf.mxu0
        %v1234 = vadd.f32 0.0, %v1233
        %v1235 = vpop.f32.mrf.mxu0
        %v1236 = vadd.f32 0.0, %v1235
        %v1237 = vpop.f32.mrf.mxu0
        %v1238 = vadd.f32 0.0, %v1237
        %v1239 = vpop.f32.mrf.mxu0
        %v1240 = vadd.f32 0.0, %v1239
        %1241 = vmatprep.mubr.bf16.mxu0 %v448
        %1242 = vmatmul.mubr.bf16.gmra.mxu0 %v447
        %v1243 = vpop.f32.mrf.mxu0
        %v1244 = vadd.f32 0.0, %v1243
        %v1245 = vpop.f32.mrf.mxu0
        %v1246 = vadd.f32 0.0, %v1245
        %v1247 = vpop.f32.mrf.mxu0
        %v1248 = vadd.f32 0.0, %v1247
        %v1249 = vpop.f32.mrf.mxu0
        %v1250 = vadd.f32 0.0, %v1249
        %1251 = vmatprep.mubr.bf16.mxu0 %v450
        %1252 = vmatmul.mubr.bf16.gmra.mxu0 %v449
        %v1253 = vpop.f32.mrf.mxu0
        %v1254 = vadd.f32 0.0, %v1253
        %v1255 = vpop.f32.mrf.mxu0
        %v1256 = vadd.f32 0.0, %v1255
        %v1257 = vpop.f32.mrf.mxu0
        %v1258 = vadd.f32 0.0, %v1257
        %v1259 = vpop.f32.mrf.mxu0
        %v1260 = vadd.f32 0.0, %v1259
        %1261 = vmatprep.mubr.bf16.mxu0 %v452
        %1262 = vmatmul.mubr.bf16.gmra.mxu0 %v451
        %v1263 = vpop.f32.mrf.mxu0
        %v1264 = vadd.f32 0.0, %v1263
        %v1265 = vpop.f32.mrf.mxu0
        %v1266 = vadd.f32 0.0, %v1265
        %v1267 = vpop.f32.mrf.mxu0
        %v1268 = vadd.f32 0.0, %v1267
        %v1269 = vpop.f32.mrf.mxu0
        %v1270 = vadd.f32 0.0, %v1269
        %1271 = vmatprep.mubr.bf16.mxu0 %v454
        %1272 = vmatmul.mubr.bf16.gmra.mxu0 %v453
        %v1273 = vpop.f32.mrf.mxu0
        %v1274 = vadd.f32 0.0, %v1273
        %v1275 = vpop.f32.mrf.mxu0
        %v1276 = vadd.f32 0.0, %v1275
        %v1277 = vpop.f32.mrf.mxu0
        %v1278 = vadd.f32 0.0, %v1277
        %v1279 = vpop.f32.mrf.mxu0
        %v1280 = vadd.f32 0.0, %v1279
        %1281 = vmatprep.mubr.bf16.mxu0 %v456
        %1282 = vmatmul.mubr.bf16.gmra.mxu0 %v455
        %v1283 = vpop.f32.mrf.mxu0
        %v1284 = vadd.f32 0.0, %v1283
        %v1285 = vpop.f32.mrf.mxu0
        %v1286 = vadd.f32 0.0, %v1285
        %v1287 = vpop.f32.mrf.mxu0
        %v1288 = vadd.f32 0.0, %v1287
        %v1289 = vpop.f32.mrf.mxu0
        %v1290 = vadd.f32 0.0, %v1289
        %1291 = vdwg.mxu0
        %v1292 = vmul.f32 %v988, 0.0625
        %v1293 = vmul.f32 %v990, 0.0625
        %v1294 = vmul.f32 %v992, 0.0625
        %v1295 = vmul.f32 %v994, 0.0625
        %v1296 = vmul.f32 %v998, 0.0625
        %v1297 = vmul.f32 %v1000, 0.0625
        %v1298 = vmul.f32 %v1002, 0.0625
        %v1299 = vmul.f32 %v1004, 0.0625
        %v1300 = vmul.f32 %v1008, 0.0625
        %v1301 = vmul.f32 %v1010, 0.0625
        %v1302 = vmul.f32 %v1012, 0.0625
        %v1303 = vmul.f32 %v1014, 0.0625
        %v1304 = vmul.f32 %v1018, 0.0625
        %v1305 = vmul.f32 %v1020, 0.0625
        %v1306 = vmul.f32 %v1022, 0.0625
        %v1307 = vmul.f32 %v1024, 0.0625
        %v1308 = vmul.f32 %v1028, 0.0625
        %v1309 = vmul.f32 %v1030, 0.0625
        %v1310 = vmul.f32 %v1032, 0.0625
        %v1311 = vmul.f32 %v1034, 0.0625
        %v1312 = vmul.f32 %v1038, 0.0625
        %v1313 = vmul.f32 %v1040, 0.0625
        %v1314 = vmul.f32 %v1042, 0.0625
        %v1315 = vmul.f32 %v1044, 0.0625
        %v1316 = vmul.f32 %v1048, 0.0625
        %v1317 = vmul.f32 %v1050, 0.0625
        %v1318 = vmul.f32 %v1052, 0.0625
        %v1319 = vmul.f32 %v1054, 0.0625
        %v1320 = vmul.f32 %v1058, 0.0625
        %v1321 = vmul.f32 %v1060, 0.0625
        %v1322 = vmul.f32 %v1062, 0.0625
        %v1323 = vmul.f32 %v1064, 0.0625
        %v1324 = vpack.c.bf16 %v1294, %v1292
        %v1325 = vpack.c.bf16 %v1298, %v1296
        %v1326 = vpack.c.bf16 %v1302, %v1300
        %v1327 = vpack.c.bf16 %v1306, %v1304
        %v1328 = vpack.c.bf16 %v1310, %v1308
        %v1329 = vpack.c.bf16 %v1314, %v1312
        %v1330 = vpack.c.bf16 %v1318, %v1316
        %v1331 = vpack.c.bf16 %v1322, %v1320
        %v1332 = vpack.c.bf16 %v1105, %v1101
        %v1333 = vpack.c.bf16 %v1115, %v1111
        %v1334 = vpack.c.bf16 %v1125, %v1121
        %v1335 = vpack.c.bf16 %v1135, %v1131
        %v1336 = vpack.c.bf16 %v1145, %v1141
        %v1337 = vpack.c.bf16 %v1155, %v1151
        %v1338 = vpack.c.bf16 %v1165, %v1161
        %v1339 = vpack.c.bf16 %v1175, %v1171
        %v1340 = vpack.c.bf16 %v1218, %v1214
        %v1341 = vpack.c.bf16 %v1228, %v1224
        %v1342 = vpack.c.bf16 %v1238, %v1234
        %v1343 = vpack.c.bf16 %v1248, %v1244
        %v1344 = vpack.c.bf16 %v1258, %v1254
        %v1345 = vpack.c.bf16 %v1268, %v1264
        %v1346 = vpack.c.bf16 %v1278, %v1274
        %v1347 = vpack.c.bf16 %v1288, %v1284
        %vm1348 = vcmask 523264
        %v1350 = vsel %vm1348, %v1324, 0
        %v1353 = vsel %vm1348, %v1325, 0
        %v1356 = vsel %vm1348, %v1326, 0
        %v1359 = vsel %vm1348, %v1327, 0
        %v1362 = vsel %vm1348, %v1328, 0
        %v1365 = vsel %vm1348, %v1329, 0
        %v1368 = vsel %vm1348, %v1330, 0
        %v1371 = vsel %vm1348, %v1331, 0
        %v1374 = vsel %vm1348, %v1332, 0
        %v1377 = vsel %vm1348, %v1333, 0
        %v1380 = vsel %vm1348, %v1334, 0
        %v1383 = vsel %vm1348, %v1335, 0
        %v1386 = vsel %vm1348, %v1336, 0
        %v1389 = vsel %vm1348, %v1337, 0
        %v1392 = vsel %vm1348, %v1338, 0
        %v1395 = vsel %vm1348, %v1339, 0
        %1397 = vmatprep.subr.bf16.mxu0 0
        %1398 = vmatpush1.bf16.xpose.msra.mxu0 %v1395
        %1399 = vmatprep.subr.bf16.mxu0 0
        %1400 = vmatpush1.bf16.xpose.msra.mxu0 %v1392
        %1401 = vmatprep.subr.bf16.mxu0 0
        %1402 = vmatpush1.bf16.xpose.msra.mxu0 %v1389
        %1403 = vmatprep.subr.bf16.mxu0 0
        %1404 = vmatpush1.bf16.xpose.msra.mxu0 %v1386
        %1405 = vmatprep.subr.bf16.mxu0 0
        %1406 = vmatpush1.bf16.xpose.msra.mxu0 %v1383
        %1407 = vmatprep.subr.bf16.mxu0 0
        %1408 = vmatpush1.bf16.xpose.msra.mxu0 %v1380
        %1409 = vmatprep.subr.bf16.mxu0 0
        %1410 = vmatpush1.bf16.xpose.msra.mxu0 %v1377
        %1411 = vmatprep.subr.bf16.mxu0 0
        %1412 = vmatpush1.bf16.xpose.msra.mxu0 %v1374
        %1413 = vmatprep.subr.bf16.mxu0 0
        %1414 = vmatpush2.bf16.xpose.msra.mxu0 0
        %1415 = vmatprep.subr.bf16.mxu0 0
        %1416 = vmatpush2.bf16.xpose.msra.mxu0 0
        %1417 = vmatprep.subr.bf16.mxu0 0
        %1418 = vmatpush2.bf16.xpose.msra.mxu0 0
        %1419 = vmatprep.subr.bf16.mxu0 0
        %1420 = vmatpush2.bf16.xpose.msra.mxu0 0
        %1421 = vmatprep.subr.bf16.mxu0 0
        %1422 = vmatpush2.bf16.xpose.msra.mxu0 0
        %1423 = vmatprep.subr.bf16.mxu0 0
        %1424 = vmatpush2.bf16.xpose.msra.mxu0 0
        %1425 = vmatprep.subr.bf16.mxu0 0
        %1426 = vmatpush2.bf16.xpose.msra.mxu0 0
        %1427 = vmatprep.subr.bf16.mxu0 0
        %1428 = vmatpush2.bf16.xpose.msra.mxu0 0
        %1429 = vmatprep.mubr.bf16.mxu0 0
        %1430 = vmatmul.mubr.bf16.gmra.mxu0 %v1350
        %v1431 = vpop.f32.mrf.mxu0
        %v1432 = vadd.f32 0.0, %v1431
        %v1433 = vpop.f32.mrf.mxu0
        %v1434 = vpop.f32.mrf.mxu0
        %v1435 = vadd.f32 0.0, %v1434
        %v1436 = vpop.f32.mrf.mxu0
        %1437 = vmatprep.mubr.bf16.mxu0 0
        %1438 = vmatmul.mubr.bf16.gmra.mxu0 %v1353
        %v1439 = vpop.f32.mrf.mxu0
        %v1440 = vadd.f32 0.0, %v1439
        %v1441 = vpop.f32.mrf.mxu0
        %v1442 = vpop.f32.mrf.mxu0
        %v1443 = vadd.f32 0.0, %v1442
        %v1444 = vpop.f32.mrf.mxu0
        %1445 = vmatprep.mubr.bf16.mxu0 0
        %1446 = vmatmul.mubr.bf16.gmra.mxu0 %v1356
        %v1447 = vpop.f32.mrf.mxu0
        %v1448 = vadd.f32 0.0, %v1447
        %v1449 = vpop.f32.mrf.mxu0
        %v1450 = vpop.f32.mrf.mxu0
        %v1451 = vadd.f32 0.0, %v1450
        %v1452 = vpop.f32.mrf.mxu0
        %1453 = vmatprep.mubr.bf16.mxu0 0
        %1454 = vmatmul.mubr.bf16.gmra.mxu0 %v1359
        %v1455 = vpop.f32.mrf.mxu0
        %v1456 = vadd.f32 0.0, %v1455
        %v1457 = vpop.f32.mrf.mxu0
        %v1458 = vpop.f32.mrf.mxu0
        %v1459 = vadd.f32 0.0, %v1458
        %v1460 = vpop.f32.mrf.mxu0
        %1461 = vmatprep.mubr.bf16.mxu0 0
        %1462 = vmatmul.mubr.bf16.gmra.mxu0 %v1362
        %v1463 = vpop.f32.mrf.mxu0
        %v1464 = vadd.f32 0.0, %v1463
        %v1465 = vpop.f32.mrf.mxu0
        %v1466 = vpop.f32.mrf.mxu0
        %v1467 = vadd.f32 0.0, %v1466
        %v1468 = vpop.f32.mrf.mxu0
        %1469 = vmatprep.mubr.bf16.mxu0 0
        %1470 = vmatmul.mubr.bf16.gmra.mxu0 %v1365
        %v1471 = vpop.f32.mrf.mxu0
        %v1472 = vadd.f32 0.0, %v1471
        %v1473 = vpop.f32.mrf.mxu0
        %v1474 = vpop.f32.mrf.mxu0
        %v1475 = vadd.f32 0.0, %v1474
        %v1476 = vpop.f32.mrf.mxu0
        %1477 = vmatprep.mubr.bf16.mxu0 0
        %1478 = vmatmul.mubr.bf16.gmra.mxu0 %v1368
        %v1479 = vpop.f32.mrf.mxu0
        %v1480 = vadd.f32 0.0, %v1479
        %v1481 = vpop.f32.mrf.mxu0
        %v1482 = vpop.f32.mrf.mxu0
        %v1483 = vadd.f32 0.0, %v1482
        %v1484 = vpop.f32.mrf.mxu0
        %1485 = vmatprep.mubr.bf16.mxu0 0
        %1486 = vmatmul.mubr.bf16.gmra.mxu0 %v1371
        %v1487 = vpop.f32.mrf.mxu0
        %v1488 = vadd.f32 0.0, %v1487
        %v1489 = vpop.f32.mrf.mxu0
        %v1490 = vpop.f32.mrf.mxu0
        %v1491 = vadd.f32 0.0, %v1490
        %v1492 = vpop.f32.mrf.mxu0
        %1493 = vdwg.mxu0
        %v1494 = vsel %vm265, %v1432, -inf
        %v1495 = vsel %vm266, %v1435, -inf
        %v1496 = vsel %vm267, %v1440, -inf
        %v1497 = vsel %vm268, %v1443, -inf
        %v1498 = vsel %vm269, %v1448, -inf
        %v1499 = vsel %vm270, %v1451, -inf
        %v1500 = vsel %vm271, %v1456, -inf
        %v1501 = vsel %vm272, %v1459, -inf
        %v1502 = vsel %vm273, %v1464, -inf
        %v1503 = vsel %vm274, %v1467, -inf
        %v1504 = vsel %vm275, %v1472, -inf
        %v1505 = vsel %vm276, %v1475, -inf
        %v1506 = vsel %vm277, %v1480, -inf
        %v1507 = vsel %vm278, %v1483, -inf
        %v1508 = vsel %vm279, %v1488, -inf
        %v1509 = vsel %vm280, %v1491, -inf
        %1510 = vmax.xlane.f32.xlu0 %v1494
        %v1511 = vpop.xlane.xlu0 %1510
        %1512 = vmax.xlane.f32.xlu0 %v1495
        %v1513 = vpop.xlane.xlu0 %1512
        %1514 = vmax.xlane.f32.xlu0 %v1496
        %v1515 = vpop.xlane.xlu0 %1514
        %1516 = vmax.xlane.f32.xlu0 %v1497
        %v1517 = vpop.xlane.xlu0 %1516
        %1518 = vmax.xlane.f32.xlu0 %v1498
        %v1519 = vpop.xlane.xlu0 %1518
        %1520 = vmax.xlane.f32.xlu0 %v1499
        %v1521 = vpop.xlane.xlu0 %1520
        %1522 = vmax.xlane.f32.xlu0 %v1500
        %v1523 = vpop.xlane.xlu0 %1522
        %1524 = vmax.xlane.f32.xlu0 %v1501
        %v1525 = vpop.xlane.xlu0 %1524
        %1526 = vmax.xlane.f32.xlu0 %v1502
        %v1527 = vpop.xlane.xlu0 %1526
        %1528 = vmax.xlane.f32.xlu0 %v1503
        %v1529 = vpop.xlane.xlu0 %1528
        %1530 = vmax.xlane.f32.xlu0 %v1504
        %v1531 = vpop.xlane.xlu0 %1530
        %1532 = vmax.xlane.f32.xlu0 %v1505
        %v1533 = vpop.xlane.xlu0 %1532
        %1534 = vmax.xlane.f32.xlu0 %v1506
        %v1535 = vpop.xlane.xlu0 %1534
        %1536 = vmax.xlane.f32.xlu0 %v1507
        %v1537 = vpop.xlane.xlu0 %1536
        %1538 = vmax.xlane.f32.xlu0 %v1508
        %v1539 = vpop.xlane.xlu0 %1538
        %1540 = vmax.xlane.f32.xlu0 %v1509
        %v1541 = vpop.xlane.xlu0 %1540
        %v1542 = vsub.f32 %v1494, %v1511
        %v1543 = vsub.f32 %v1495, %v1513
        %v1544 = vsub.f32 %v1496, %v1515
        %v1545 = vsub.f32 %v1497, %v1517
        %v1546 = vsub.f32 %v1498, %v1519
        %v1547 = vsub.f32 %v1499, %v1521
        %v1548 = vsub.f32 %v1500, %v1523
        %v1549 = vsub.f32 %v1501, %v1525
        %v1550 = vsub.f32 %v1502, %v1527
        %v1551 = vsub.f32 %v1503, %v1529
        %v1552 = vsub.f32 %v1504, %v1531
        %v1553 = vsub.f32 %v1505, %v1533
        %v1554 = vsub.f32 %v1506, %v1535
        %v1555 = vsub.f32 %v1507, %v1537
        %v1556 = vsub.f32 %v1508, %v1539
        %v1557 = vsub.f32 %v1509, %v1541
        %v1558 = vmul.f32 %v1542, 1.442695
        %v1559 = vpow.pop %v1558
        %v1560 = vmul.f32 %v1543, 1.442695
        %v1561 = vpow.pop %v1560
        %v1562 = vmul.f32 %v1544, 1.442695
        %v1563 = vpow.pop %v1562
        %v1564 = vmul.f32 %v1545, 1.442695
        %v1565 = vpow.pop %v1564
        %v1566 = vmul.f32 %v1546, 1.442695
        %v1567 = vpow.pop %v1566
        %v1568 = vmul.f32 %v1547, 1.442695
        %v1569 = vpow.pop %v1568
        %v1570 = vmul.f32 %v1548, 1.442695
        %v1571 = vpow.pop %v1570
        %v1572 = vmul.f32 %v1549, 1.442695
        %v1573 = vpow.pop %v1572
        %v1574 = vmul.f32 %v1550, 1.442695
        %v1575 = vpow.pop %v1574
        %v1576 = vmul.f32 %v1551, 1.442695
        %v1577 = vpow.pop %v1576
        %v1578 = vmul.f32 %v1552, 1.442695
        %v1579 = vpow.pop %v1578
        %v1580 = vmul.f32 %v1553, 1.442695
        %v1581 = vpow.pop %v1580
        %v1582 = vmul.f32 %v1554, 1.442695
        %v1583 = vpow.pop %v1582
        %v1584 = vmul.f32 %v1555, 1.442695
        %v1585 = vpow.pop %v1584
        %v1586 = vmul.f32 %v1556, 1.442695
        %v1587 = vpow.pop %v1586
        %v1588 = vmul.f32 %v1557, 1.442695
        %v1589 = vpow.pop %v1588
        %1590 = vadd.xlane.f32.xlu0 %v1559
        %v1591 = vpop.xlane.xlu0 %1590
        %1592 = vadd.xlane.f32.xlu0 %v1561
        %v1593 = vpop.xlane.xlu0 %1592
        %1594 = vadd.xlane.f32.xlu0 %v1563
        %v1595 = vpop.xlane.xlu0 %1594
        %1596 = vadd.xlane.f32.xlu0 %v1565
        %v1597 = vpop.xlane.xlu0 %1596
        %1598 = vadd.xlane.f32.xlu0 %v1567
        %v1599 = vpop.xlane.xlu0 %1598
        %1600 = vadd.xlane.f32.xlu0 %v1569
        %v1601 = vpop.xlane.xlu0 %1600
        %1602 = vadd.xlane.f32.xlu0 %v1571
        %v1603 = vpop.xlane.xlu0 %1602
        %1604 = vadd.xlane.f32.xlu0 %v1573
        %v1605 = vpop.xlane.xlu0 %1604
        %1606 = vadd.xlane.f32.xlu0 %v1575
        %v1607 = vpop.xlane.xlu0 %1606
        %1608 = vadd.xlane.f32.xlu0 %v1577
        %v1609 = vpop.xlane.xlu0 %1608
        %1610 = vadd.xlane.f32.xlu0 %v1579
        %v1611 = vpop.xlane.xlu0 %1610
        %1612 = vadd.xlane.f32.xlu0 %v1581
        %v1613 = vpop.xlane.xlu0 %1612
        %1614 = vadd.xlane.f32.xlu0 %v1583
        %v1615 = vpop.xlane.xlu0 %1614
        %1616 = vadd.xlane.f32.xlu0 %v1585
        %v1617 = vpop.xlane.xlu0 %1616
        %1618 = vadd.xlane.f32.xlu0 %v1587
        %v1619 = vpop.xlane.xlu0 %1618
        %1620 = vadd.xlane.f32.xlu0 %v1589
        %v1621 = vpop.xlane.xlu0 %1620
        %v1622 = vrcp.pop %v1591
        %v1623 = vrcp.pop %v1593
        %v1624 = vrcp.pop %v1595
        %v1625 = vrcp.pop %v1597
        %v1626 = vrcp.pop %v1599
        %v1627 = vrcp.pop %v1601
        %v1628 = vrcp.pop %v1603
        %v1629 = vrcp.pop %v1605
        %v1630 = vrcp.pop %v1607
        %v1631 = vrcp.pop %v1609
        %v1632 = vrcp.pop %v1611
        %v1633 = vrcp.pop %v1613
        %v1634 = vrcp.pop %v1615
        %v1635 = vrcp.pop %v1617
        %v1636 = vrcp.pop %v1619
        %v1637 = vrcp.pop %v1621
        %v1638 = vmul.f32 %v1559, %v1622
        %v1639 = vmul.f32 %v1561, %v1623
        %v1640 = vmul.f32 %v1563, %v1624
        %v1641 = vmul.f32 %v1565, %v1625
        %v1642 = vmul.f32 %v1567, %v1626
        %v1643 = vmul.f32 %v1569, %v1627
        %v1644 = vmul.f32 %v1571, %v1628
        %v1645 = vmul.f32 %v1573, %v1629
        %v1646 = vmul.f32 %v1575, %v1630
        %v1647 = vmul.f32 %v1577, %v1631
        %v1648 = vmul.f32 %v1579, %v1632
        %v1649 = vmul.f32 %v1581, %v1633
        %v1650 = vmul.f32 %v1583, %v1634
        %v1651 = vmul.f32 %v1585, %v1635
        %v1652 = vmul.f32 %v1587, %v1636
        %v1653 = vmul.f32 %v1589, %v1637
        %v1654 = vpack.c.bf16 %v1639, %v1638
        %v1655 = vpack.c.bf16 %v1641, %v1640
        %v1656 = vpack.c.bf16 %v1643, %v1642
        %v1657 = vpack.c.bf16 %v1645, %v1644
        %v1658 = vpack.c.bf16 %v1647, %v1646
        %v1659 = vpack.c.bf16 %v1649, %v1648
        %v1660 = vpack.c.bf16 %v1651, %v1650
        %v1661 = vpack.c.bf16 %v1653, %v1652
        %1662 = vmatprep.subr.bf16.mxu0 0
        %1663 = vmatpush1.bf16.msra.mxu0 %v1347
        %1664 = vmatprep.subr.bf16.mxu0 0
        %1665 = vmatpush1.bf16.msra.mxu0 %v1346
        %1666 = vmatprep.subr.bf16.mxu0 0
        %1667 = vmatpush1.bf16.msra.mxu0 %v1345
        %1668 = vmatprep.subr.bf16.mxu0 0
        %1669 = vmatpush1.bf16.msra.mxu0 %v1344
        %1670 = vmatprep.subr.bf16.mxu0 0
        %1671 = vmatpush1.bf16.msra.mxu0 %v1343
        %1672 = vmatprep.subr.bf16.mxu0 0
        %1673 = vmatpush1.bf16.msra.mxu0 %v1342
        %1674 = vmatprep.subr.bf16.mxu0 0
        %1675 = vmatpush1.bf16.msra.mxu0 %v1341
        %1676 = vmatprep.subr.bf16.mxu0 0
        %1677 = vmatpush1.bf16.msra.mxu0 %v1340
        %1678 = vmatprep.subr.bf16.mxu0 0
        %1679 = vmatpush2.bf16.msra.mxu0 0
        %1680 = vmatprep.subr.bf16.mxu0 0
        %1681 = vmatpush2.bf16.msra.mxu0 0
        %1682 = vmatprep.subr.bf16.mxu0 0
        %1683 = vmatpush2.bf16.msra.mxu0 0
        %1684 = vmatprep.subr.bf16.mxu0 0
        %1685 = vmatpush2.bf16.msra.mxu0 0
        %1686 = vmatprep.subr.bf16.mxu0 0
        %1687 = vmatpush2.bf16.msra.mxu0 0
        %1688 = vmatprep.subr.bf16.mxu0 0
        %1689 = vmatpush2.bf16.msra.mxu0 0
        %1690 = vmatprep.subr.bf16.mxu0 0
        %1691 = vmatpush2.bf16.msra.mxu0 0
        %1692 = vmatprep.subr.bf16.mxu0 0
        %1693 = vmatpush2.bf16.msra.mxu0 0
        %1694 = vmatprep.mubr.bf16.mxu0 0
        %1695 = vmatmul.mubr.bf16.gmra.mxu0 %v1654
        %v1696 = vpop.f32.mrf.mxu0
        %v1697 = vadd.f32 0.0, %v1696
        %v1698 = vpop.f32.mrf.mxu0
        %v1699 = vpop.f32.mrf.mxu0
        %v1700 = vadd.f32 0.0, %v1699
        %v1701 = vpop.f32.mrf.mxu0
        %1702 = vmatprep.mubr.bf16.mxu0 0
        %1703 = vmatmul.mubr.bf16.gmra.mxu0 %v1655
        %v1704 = vpop.f32.mrf.mxu0
        %v1705 = vadd.f32 0.0, %v1704
        %v1706 = vpop.f32.mrf.mxu0
        %v1707 = vpop.f32.mrf.mxu0
        %v1708 = vadd.f32 0.0, %v1707
        %v1709 = vpop.f32.mrf.mxu0
        %1710 = vmatprep.mubr.bf16.mxu0 0
        %1711 = vmatmul.mubr.bf16.gmra.mxu0 %v1656
        %v1712 = vpop.f32.mrf.mxu0
        %v1713 = vadd.f32 0.0, %v1712
        %v1714 = vpop.f32.mrf.mxu0
        %v1715 = vpop.f32.mrf.mxu0
        %v1716 = vadd.f32 0.0, %v1715
        %v1717 = vpop.f32.mrf.mxu0
        %1718 = vmatprep.mubr.bf16.mxu0 0
        %1719 = vmatmul.mubr.bf16.gmra.mxu0 %v1657
        %v1720 = vpop.f32.mrf.mxu0
        %v1721 = vadd.f32 0.0, %v1720
        %v1722 = vpop.f32.mrf.mxu0
        %v1723 = vpop.f32.mrf.mxu0
        %v1724 = vadd.f32 0.0, %v1723
        %v1725 = vpop.f32.mrf.mxu0
        %1726 = vmatprep.mubr.bf16.mxu0 0
        %1727 = vmatmul.mubr.bf16.gmra.mxu0 %v1658
        %v1728 = vpop.f32.mrf.mxu0
        %v1729 = vadd.f32 0.0, %v1728
        %v1730 = vpop.f32.mrf.mxu0
        %v1731 = vpop.f32.mrf.mxu0
        %v1732 = vadd.f32 0.0, %v1731
        %v1733 = vpop.f32.mrf.mxu0
        %1734 = vmatprep.mubr.bf16.mxu0 0
        %1735 = vmatmul.mubr.bf16.gmra.mxu0 %v1659
        %v1736 = vpop.f32.mrf.mxu0
        %v1737 = vadd.f32 0.0, %v1736
        %v1738 = vpop.f32.mrf.mxu0
        %v1739 = vpop.f32.mrf.mxu0
        %v1740 = vadd.f32 0.0, %v1739
        %v1741 = vpop.f32.mrf.mxu0
        %1742 = vmatprep.mubr.bf16.mxu0 0
        %1743 = vmatmul.mubr.bf16.gmra.mxu0 %v1660
        %v1744 = vpop.f32.mrf.mxu0
        %v1745 = vadd.f32 0.0, %v1744
        %v1746 = vpop.f32.mrf.mxu0
        %v1747 = vpop.f32.mrf.mxu0
        %v1748 = vadd.f32 0.0, %v1747
        %v1749 = vpop.f32.mrf.mxu0
        %1750 = vmatprep.mubr.bf16.mxu0 0
        %1751 = vmatmul.mubr.bf16.gmra.mxu0 %v1661
        %v1752 = vpop.f32.mrf.mxu0
        %v1753 = vadd.f32 0.0, %v1752
        %v1754 = vpop.f32.mrf.mxu0
        %v1755 = vpop.f32.mrf.mxu0
        %v1756 = vadd.f32 0.0, %v1755
        %v1757 = vpop.f32.mrf.mxu0
        %1758 = vdwg.mxu0
        %v1759 = vld [vmem:[#allocation7] sm:$0xff]
        %v1760 = vld [vmem:[#allocation7 + $0x8] sm:$0xff]
        %v1761 = vld [vmem:[#allocation7 + $0x10] sm:$0xff]
        %v1762 = vld [vmem:[#allocation7 + $0x18] sm:$0xff]
        %v1763 = vld [vmem:[#allocation7 + $0x20] sm:$0xff]
        %v1764 = vld [vmem:[#allocation7 + $0x28] sm:$0xff]
        %v1765 = vld [vmem:[#allocation7 + $0x30] sm:$0xff]
        %v1766 = vld [vmem:[#allocation7 + $0x38] sm:$0xff]
        %v1767 = vpack.c.bf16 %v1700, %v1697
        %v1768 = vpack.c.bf16 %v1708, %v1705
        %v1769 = vpack.c.bf16 %v1716, %v1713
        %v1770 = vpack.c.bf16 %v1724, %v1721
        %v1771 = vpack.c.bf16 %v1732, %v1729
        %v1772 = vpack.c.bf16 %v1740, %v1737
        %v1773 = vpack.c.bf16 %v1748, %v1745
        %v1774 = vpack.c.bf16 %v1756, %v1753
        %1783 = vrot.lane.b32.xlu0 %v1324, 64
        %v1784 = vpop.permute.xlu0 %1783
        %1785 = vrot.lane.b32.xlu0 %v1325, 64
        %v1786 = vpop.permute.xlu0 %1785
        %1787 = vrot.lane.b32.xlu0 %v1326, 64
        %v1788 = vpop.permute.xlu0 %1787
        %1789 = vrot.lane.b32.xlu0 %v1327, 64
        %v1790 = vpop.permute.xlu0 %1789
        %1791 = vrot.lane.b32.xlu0 %v1328, 64
        %v1792 = vpop.permute.xlu0 %1791
        %1793 = vrot.lane.b32.xlu0 %v1329, 64
        %v1794 = vpop.permute.xlu0 %1793
        %1795 = vrot.lane.b32.xlu0 %v1330, 64
        %v1796 = vpop.permute.xlu0 %1795
        %1797 = vrot.lane.b32.xlu0 %v1331, 64
        %v1798 = vpop.permute.xlu0 %1797
        %1807 = vrot.lane.b32.xlu0 %v1332, 64
        %v1808 = vpop.permute.xlu0 %1807
        %1809 = vrot.lane.b32.xlu0 %v1333, 64
        %v1810 = vpop.permute.xlu0 %1809
        %1811 = vrot.lane.b32.xlu0 %v1334, 64
        %v1812 = vpop.permute.xlu0 %1811
        %1813 = vrot.lane.b32.xlu0 %v1335, 64
        %v1814 = vpop.permute.xlu0 %1813
        %1815 = vrot.lane.b32.xlu0 %v1336, 64
        %v1816 = vpop.permute.xlu0 %1815
        %1817 = vrot.lane.b32.xlu0 %v1337, 64
        %v1818 = vpop.permute.xlu0 %1817
        %1819 = vrot.lane.b32.xlu0 %v1338, 64
        %v1820 = vpop.permute.xlu0 %1819
        %1821 = vrot.lane.b32.xlu0 %v1339, 64
        %v1822 = vpop.permute.xlu0 %1821
        %v1824 = vsel %vm1348, %v1784, 0
        %v1827 = vsel %vm1348, %v1786, 0
        %v1830 = vsel %vm1348, %v1788, 0
        %v1833 = vsel %vm1348, %v1790, 0
        %v1836 = vsel %vm1348, %v1792, 0
        %v1839 = vsel %vm1348, %v1794, 0
        %v1842 = vsel %vm1348, %v1796, 0
        %v1845 = vsel %vm1348, %v1798, 0
        %v1848 = vsel %vm1348, %v1808, 0
        %v1851 = vsel %vm1348, %v1810, 0
        %v1854 = vsel %vm1348, %v1812, 0
        %v1857 = vsel %vm1348, %v1814, 0
        %v1860 = vsel %vm1348, %v1816, 0
        %v1863 = vsel %vm1348, %v1818, 0
        %v1866 = vsel %vm1348, %v1820, 0
        %v1869 = vsel %vm1348, %v1822, 0
        %1871 = vmatprep.subr.bf16.mxu0 0
        %1872 = vmatpush1.bf16.xpose.msra.mxu0 %v1869
        %1873 = vmatprep.subr.bf16.mxu0 0
        %1874 = vmatpush1.bf16.xpose.msra.mxu0 %v1866
        %1875 = vmatprep.subr.bf16.mxu0 0
        %1876 = vmatpush1.bf16.xpose.msra.mxu0 %v1863
        %1877 = vmatprep.subr.bf16.mxu0 0
        %1878 = vmatpush1.bf16.xpose.msra.mxu0 %v1860
        %1879 = vmatprep.subr.bf16.mxu0 0
        %1880 = vmatpush1.bf16.xpose.msra.mxu0 %v1857
        %1881 = vmatprep.subr.bf16.mxu0 0
        %1882 = vmatpush1.bf16.xpose.msra.mxu0 %v1854
        %1883 = vmatprep.subr.bf16.mxu0 0
        %1884 = vmatpush1.bf16.xpose.msra.mxu0 %v1851
        %1885 = vmatprep.subr.bf16.mxu0 0
        %1886 = vmatpush1.bf16.xpose.msra.mxu0 %v1848
        %1887 = vmatprep.subr.bf16.mxu0 0
        %1888 = vmatpush2.bf16.xpose.msra.mxu0 0
        %1889 = vmatprep.subr.bf16.mxu0 0
        %1890 = vmatpush2.bf16.xpose.msra.mxu0 0
        %1891 = vmatprep.subr.bf16.mxu0 0
        %1892 = vmatpush2.bf16.xpose.msra.mxu0 0
        %1893 = vmatprep.subr.bf16.mxu0 0
        %1894 = vmatpush2.bf16.xpose.msra.mxu0 0
        %1895 = vmatprep.subr.bf16.mxu0 0
        %1896 = vmatpush2.bf16.xpose.msra.mxu0 0
        %1897 = vmatprep.subr.bf16.mxu0 0
        %1898 = vmatpush2.bf16.xpose.msra.mxu0 0
        %1899 = vmatprep.subr.bf16.mxu0 0
        %1900 = vmatpush2.bf16.xpose.msra.mxu0 0
        %1901 = vmatprep.subr.bf16.mxu0 0
        %1902 = vmatpush2.bf16.xpose.msra.mxu0 0
        %1903 = vmatprep.mubr.bf16.mxu0 0
        %1904 = vmatmul.mubr.bf16.gmra.mxu0 %v1824
        %v1905 = vpop.f32.mrf.mxu0
        %v1906 = vadd.f32 0.0, %v1905
        %v1907 = vpop.f32.mrf.mxu0
        %v1908 = vpop.f32.mrf.mxu0
        %v1909 = vadd.f32 0.0, %v1908
        %v1910 = vpop.f32.mrf.mxu0
        %1911 = vmatprep.mubr.bf16.mxu0 0
        %1912 = vmatmul.mubr.bf16.gmra.mxu0 %v1827
        %v1913 = vpop.f32.mrf.mxu0
        %v1914 = vadd.f32 0.0, %v1913
        %v1915 = vpop.f32.mrf.mxu0
        %v1916 = vpop.f32.mrf.mxu0
        %v1917 = vadd.f32 0.0, %v1916
        %v1918 = vpop.f32.mrf.mxu0
        %1919 = vmatprep.mubr.bf16.mxu0 0
        %1920 = vmatmul.mubr.bf16.gmra.mxu0 %v1830
        %v1921 = vpop.f32.mrf.mxu0
        %v1922 = vadd.f32 0.0, %v1921
        %v1923 = vpop.f32.mrf.mxu0
        %v1924 = vpop.f32.mrf.mxu0
        %v1925 = vadd.f32 0.0, %v1924
        %v1926 = vpop.f32.mrf.mxu0
        %1927 = vmatprep.mubr.bf16.mxu0 0
        %1928 = vmatmul.mubr.bf16.gmra.mxu0 %v1833
        %v1929 = vpop.f32.mrf.mxu0
        %v1930 = vadd.f32 0.0, %v1929
        %v1931 = vpop.f32.mrf.mxu0
        %v1932 = vpop.f32.mrf.mxu0
        %v1933 = vadd.f32 0.0, %v1932
        %v1934 = vpop.f32.mrf.mxu0
        %1935 = vmatprep.mubr.bf16.mxu0 0
        %1936 = vmatmul.mubr.bf16.gmra.mxu0 %v1836
        %v1937 = vpop.f32.mrf.mxu0
        %v1938 = vadd.f32 0.0, %v1937
        %v1939 = vpop.f32.mrf.mxu0
        %v1940 = vpop.f32.mrf.mxu0
        %v1941 = vadd.f32 0.0, %v1940
        %v1942 = vpop.f32.mrf.mxu0
        %1943 = vmatprep.mubr.bf16.mxu0 0
        %1944 = vmatmul.mubr.bf16.gmra.mxu0 %v1839
        %v1945 = vpop.f32.mrf.mxu0
        %v1946 = vadd.f32 0.0, %v1945
        %v1947 = vpop.f32.mrf.mxu0
        %v1948 = vpop.f32.mrf.mxu0
        %v1949 = vadd.f32 0.0, %v1948
        %v1950 = vpop.f32.mrf.mxu0
        %1951 = vmatprep.mubr.bf16.mxu0 0
        %1952 = vmatmul.mubr.bf16.gmra.mxu0 %v1842
        %v1953 = vpop.f32.mrf.mxu0
        %v1954 = vadd.f32 0.0, %v1953
        %v1955 = vpop.f32.mrf.mxu0
        %v1956 = vpop.f32.mrf.mxu0
        %v1957 = vadd.f32 0.0, %v1956
        %v1958 = vpop.f32.mrf.mxu0
        %1959 = vmatprep.mubr.bf16.mxu0 0
        %1960 = vmatmul.mubr.bf16.gmra.mxu0 %v1845
        %v1961 = vpop.f32.mrf.mxu0
        %v1962 = vadd.f32 0.0, %v1961
        %v1963 = vpop.f32.mrf.mxu0
        %v1964 = vpop.f32.mrf.mxu0
        %v1965 = vadd.f32 0.0, %v1964
        %v1966 = vpop.f32.mrf.mxu0
        %1967 = vdwg.mxu0
        %v1968 = vsel %vm265, %v1906, -inf
        %v1969 = vsel %vm266, %v1909, -inf
        %v1970 = vsel %vm267, %v1914, -inf
        %v1971 = vsel %vm268, %v1917, -inf
        %v1972 = vsel %vm269, %v1922, -inf
        %v1973 = vsel %vm270, %v1925, -inf
        %v1974 = vsel %vm271, %v1930, -inf
        %v1975 = vsel %vm272, %v1933, -inf
        %v1976 = vsel %vm273, %v1938, -inf
        %v1977 = vsel %vm274, %v1941, -inf
        %v1978 = vsel %vm275, %v1946, -inf
        %v1979 = vsel %vm276, %v1949, -inf
        %v1980 = vsel %vm277, %v1954, -inf
        %v1981 = vsel %vm278, %v1957, -inf
        %v1982 = vsel %vm279, %v1962, -inf
        %v1983 = vsel %vm280, %v1965, -inf
        %1984 = vmax.xlane.f32.xlu0 %v1968
        %v1985 = vpop.xlane.xlu0 %1984
        %1986 = vmax.xlane.f32.xlu0 %v1969
        %v1987 = vpop.xlane.xlu0 %1986
        %1988 = vmax.xlane.f32.xlu0 %v1970
        %v1989 = vpop.xlane.xlu0 %1988
        %1990 = vmax.xlane.f32.xlu0 %v1971
        %v1991 = vpop.xlane.xlu0 %1990
        %1992 = vmax.xlane.f32.xlu0 %v1972
        %v1993 = vpop.xlane.xlu0 %1992
        %1994 = vmax.xlane.f32.xlu0 %v1973
        %v1995 = vpop.xlane.xlu0 %1994
        %1996 = vmax.xlane.f32.xlu0 %v1974
        %v1997 = vpop.xlane.xlu0 %1996
        %1998 = vmax.xlane.f32.xlu0 %v1975
        %v1999 = vpop.xlane.xlu0 %1998
        %2000 = vmax.xlane.f32.xlu0 %v1976
        %v2001 = vpop.xlane.xlu0 %2000
        %2002 = vmax.xlane.f32.xlu0 %v1977
        %v2003 = vpop.xlane.xlu0 %2002
        %2004 = vmax.xlane.f32.xlu0 %v1978
        %v2005 = vpop.xlane.xlu0 %2004
        %2006 = vmax.xlane.f32.xlu0 %v1979
        %v2007 = vpop.xlane.xlu0 %2006
        %2008 = vmax.xlane.f32.xlu0 %v1980
        %v2009 = vpop.xlane.xlu0 %2008
        %2010 = vmax.xlane.f32.xlu0 %v1981
        %v2011 = vpop.xlane.xlu0 %2010
        %2012 = vmax.xlane.f32.xlu0 %v1982
        %v2013 = vpop.xlane.xlu0 %2012
        %2014 = vmax.xlane.f32.xlu0 %v1983
        %v2015 = vpop.xlane.xlu0 %2014
        %v2016 = vsub.f32 %v1968, %v1985
        %v2017 = vsub.f32 %v1969, %v1987
        %v2018 = vsub.f32 %v1970, %v1989
        %v2019 = vsub.f32 %v1971, %v1991
        %v2020 = vsub.f32 %v1972, %v1993
        %v2021 = vsub.f32 %v1973, %v1995
        %v2022 = vsub.f32 %v1974, %v1997
        %v2023 = vsub.f32 %v1975, %v1999
        %v2024 = vsub.f32 %v1976, %v2001
        %v2025 = vsub.f32 %v1977, %v2003
        %v2026 = vsub.f32 %v1978, %v2005
        %v2027 = vsub.f32 %v1979, %v2007
        %v2028 = vsub.f32 %v1980, %v2009
        %v2029 = vsub.f32 %v1981, %v2011
        %v2030 = vsub.f32 %v1982, %v2013
        %v2031 = vsub.f32 %v1983, %v2015
        %v2032 = vmul.f32 %v2016, 1.442695
        %v2033 = vpow.pop %v2032
        %v2034 = vmul.f32 %v2017, 1.442695
        %v2035 = vpow.pop %v2034
        %v2036 = vmul.f32 %v2018, 1.442695
        %v2037 = vpow.pop %v2036
        %v2038 = vmul.f32 %v2019, 1.442695
        %v2039 = vpow.pop %v2038
        %v2040 = vmul.f32 %v2020, 1.442695
        %v2041 = vpow.pop %v2040
        %v2042 = vmul.f32 %v2021, 1.442695
        %v2043 = vpow.pop %v2042
        %v2044 = vmul.f32 %v2022, 1.442695
        %v2045 = vpow.pop %v2044
        %v2046 = vmul.f32 %v2023, 1.442695
        %v2047 = vpow.pop %v2046
        %v2048 = vmul.f32 %v2024, 1.442695
        %v2049 = vpow.pop %v2048
        %v2050 = vmul.f32 %v2025, 1.442695
        %v2051 = vpow.pop %v2050
        %v2052 = vmul.f32 %v2026, 1.442695
        %v2053 = vpow.pop %v2052
        %v2054 = vmul.f32 %v2027, 1.442695
        %v2055 = vpow.pop %v2054
        %v2056 = vmul.f32 %v2028, 1.442695
        %v2057 = vpow.pop %v2056
        %v2058 = vmul.f32 %v2029, 1.442695
        %v2059 = vpow.pop %v2058
        %v2060 = vmul.f32 %v2030, 1.442695
        %v2061 = vpow.pop %v2060
        %v2062 = vmul.f32 %v2031, 1.442695
        %v2063 = vpow.pop %v2062
        %2064 = vadd.xlane.f32.xlu0 %v2033
        %v2065 = vpop.xlane.xlu0 %2064
        %2066 = vadd.xlane.f32.xlu0 %v2035
        %v2067 = vpop.xlane.xlu0 %2066
        %2068 = vadd.xlane.f32.xlu0 %v2037
        %v2069 = vpop.xlane.xlu0 %2068
        %2070 = vadd.xlane.f32.xlu0 %v2039
        %v2071 = vpop.xlane.xlu0 %2070
        %2072 = vadd.xlane.f32.xlu0 %v2041
        %v2073 = vpop.xlane.xlu0 %2072
        %2074 = vadd.xlane.f32.xlu0 %v2043
        %v2075 = vpop.xlane.xlu0 %2074
        %2076 = vadd.xlane.f32.xlu0 %v2045
        %v2077 = vpop.xlane.xlu0 %2076
        %2078 = vadd.xlane.f32.xlu0 %v2047
        %v2079 = vpop.xlane.xlu0 %2078
        %2080 = vadd.xlane.f32.xlu0 %v2049
        %v2081 = vpop.xlane.xlu0 %2080
        %2082 = vadd.xlane.f32.xlu0 %v2051
        %v2083 = vpop.xlane.xlu0 %2082
        %2084 = vadd.xlane.f32.xlu0 %v2053
        %v2085 = vpop.xlane.xlu0 %2084
        %2086 = vadd.xlane.f32.xlu0 %v2055
        %v2087 = vpop.xlane.xlu0 %2086
        %2088 = vadd.xlane.f32.xlu0 %v2057
        %v2089 = vpop.xlane.xlu0 %2088
        %2090 = vadd.xlane.f32.xlu0 %v2059
        %v2091 = vpop.xlane.xlu0 %2090
        %2092 = vadd.xlane.f32.xlu0 %v2061
        %v2093 = vpop.xlane.xlu0 %2092
        %2094 = vadd.xlane.f32.xlu0 %v2063
        %v2095 = vpop.xlane.xlu0 %2094
        %v2096 = vrcp.pop %v2065
        %v2097 = vrcp.pop %v2067
        %v2098 = vrcp.pop %v2069
        %v2099 = vrcp.pop %v2071
        %v2100 = vrcp.pop %v2073
        %v2101 = vrcp.pop %v2075
        %v2102 = vrcp.pop %v2077
        %v2103 = vrcp.pop %v2079
        %v2104 = vrcp.pop %v2081
        %v2105 = vrcp.pop %v2083
        %v2106 = vrcp.pop %v2085
        %v2107 = vrcp.pop %v2087
        %v2108 = vrcp.pop %v2089
        %v2109 = vrcp.pop %v2091
        %v2110 = vrcp.pop %v2093
        %v2111 = vrcp.pop %v2095
        %v2112 = vmul.f32 %v2033, %v2096
        %v2113 = vmul.f32 %v2035, %v2097
        %v2114 = vmul.f32 %v2037, %v2098
        %v2115 = vmul.f32 %v2039, %v2099
        %v2116 = vmul.f32 %v2041, %v2100
        %v2117 = vmul.f32 %v2043, %v2101
        %v2118 = vmul.f32 %v2045, %v2102
        %v2119 = vmul.f32 %v2047, %v2103
        %v2120 = vmul.f32 %v2049, %v2104
        %v2121 = vmul.f32 %v2051, %v2105
        %v2122 = vmul.f32 %v2053, %v2106
        %v2123 = vmul.f32 %v2055, %v2107
        %v2124 = vmul.f32 %v2057, %v2108
        %v2125 = vmul.f32 %v2059, %v2109
        %v2126 = vmul.f32 %v2061, %v2110
        %v2127 = vmul.f32 %v2063, %v2111
        %v2128 = vpack.c.bf16 %v2113, %v2112
        %v2129 = vpack.c.bf16 %v2115, %v2114
        %v2130 = vpack.c.bf16 %v2117, %v2116
        %v2131 = vpack.c.bf16 %v2119, %v2118
        %v2132 = vpack.c.bf16 %v2121, %v2120
        %v2133 = vpack.c.bf16 %v2123, %v2122
        %v2134 = vpack.c.bf16 %v2125, %v2124
        %v2135 = vpack.c.bf16 %v2127, %v2126
        %2144 = vrot.lane.b32.xlu0 %v1340, 64
        %v2145 = vpop.permute.xlu0 %2144
        %2146 = vrot.lane.b32.xlu0 %v1341, 64
        %v2147 = vpop.permute.xlu0 %2146
        %2148 = vrot.lane.b32.xlu0 %v1342, 64
        %v2149 = vpop.permute.xlu0 %2148
        %2150 = vrot.lane.b32.xlu0 %v1343, 64
        %v2151 = vpop.permute.xlu0 %2150
        %2152 = vrot.lane.b32.xlu0 %v1344, 64
        %v2153 = vpop.permute.xlu0 %2152
        %2154 = vrot.lane.b32.xlu0 %v1345, 64
        %v2155 = vpop.permute.xlu0 %2154
        %2156 = vrot.lane.b32.xlu0 %v1346, 64
        %v2157 = vpop.permute.xlu0 %2156
        %2158 = vrot.lane.b32.xlu0 %v1347, 64
        %v2159 = vpop.permute.xlu0 %2158
        %2168 = vmatprep.subr.bf16.mxu0 0
        %2169 = vmatpush1.bf16.msra.mxu0 %v2159
        %2170 = vmatprep.subr.bf16.mxu0 0
        %2171 = vmatpush1.bf16.msra.mxu0 %v2157
        %2172 = vmatprep.subr.bf16.mxu0 0
        %2173 = vmatpush1.bf16.msra.mxu0 %v2155
        %2174 = vmatprep.subr.bf16.mxu0 0
        %2175 = vmatpush1.bf16.msra.mxu0 %v2153
        %2176 = vmatprep.subr.bf16.mxu0 0
        %2177 = vmatpush1.bf16.msra.mxu0 %v2151
        %2178 = vmatprep.subr.bf16.mxu0 0
        %2179 = vmatpush1.bf16.msra.mxu0 %v2149
        %2180 = vmatprep.subr.bf16.mxu0 0
        %2181 = vmatpush1.bf16.msra.mxu0 %v2147
        %2182 = vmatprep.subr.bf16.mxu0 0
        %2183 = vmatpush1.bf16.msra.mxu0 %v2145
        %2184 = vmatprep.subr.bf16.mxu0 0
        %2185 = vmatpush2.bf16.msra.mxu0 0
        %2186 = vmatprep.subr.bf16.mxu0 0
        %2187 = vmatpush2.bf16.msra.mxu0 0
        %2188 = vmatprep.subr.bf16.mxu0 0
        %2189 = vmatpush2.bf16.msra.mxu0 0
        %2190 = vmatprep.subr.bf16.mxu0 0
        %2191 = vmatpush2.bf16.msra.mxu0 0
        %2192 = vmatprep.subr.bf16.mxu0 0
        %2193 = vmatpush2.bf16.msra.mxu0 0
        %2194 = vmatprep.subr.bf16.mxu0 0
        %2195 = vmatpush2.bf16.msra.mxu0 0
        %2196 = vmatprep.subr.bf16.mxu0 0
        %2197 = vmatpush2.bf16.msra.mxu0 0
        %2198 = vmatprep.subr.bf16.mxu0 0
        %2199 = vmatpush2.bf16.msra.mxu0 0
        %2200 = vmatprep.mubr.bf16.mxu0 0
        %2201 = vmatmul.mubr.bf16.gmra.mxu0 %v2128
        %v2202 = vpop.f32.mrf.mxu0
        %v2203 = vadd.f32 0.0, %v2202
        %v2204 = vpop.f32.mrf.mxu0
        %v2205 = vpop.f32.mrf.mxu0
        %v2206 = vadd.f32 0.0, %v2205
        %v2207 = vpop.f32.mrf.mxu0
        %2208 = vmatprep.mubr.bf16.mxu0 0
        %2209 = vmatmul.mubr.bf16.gmra.mxu0 %v2129
        %v2210 = vpop.f32.mrf.mxu0
        %v2211 = vadd.f32 0.0, %v2210
        %v2212 = vpop.f32.mrf.mxu0
        %v2213 = vpop.f32.mrf.mxu0
        %v2214 = vadd.f32 0.0, %v2213
        %v2215 = vpop.f32.mrf.mxu0
        %2216 = vmatprep.mubr.bf16.mxu0 0
        %2217 = vmatmul.mubr.bf16.gmra.mxu0 %v2130
        %v2218 = vpop.f32.mrf.mxu0
        %v2219 = vadd.f32 0.0, %v2218
        %v2220 = vpop.f32.mrf.mxu0
        %v2221 = vpop.f32.mrf.mxu0
        %v2222 = vadd.f32 0.0, %v2221
        %v2223 = vpop.f32.mrf.mxu0
        %2224 = vmatprep.mubr.bf16.mxu0 0
        %2225 = vmatmul.mubr.bf16.gmra.mxu0 %v2131
        %v2226 = vpop.f32.mrf.mxu0
        %v2227 = vadd.f32 0.0, %v2226
        %v2228 = vpop.f32.mrf.mxu0
        %v2229 = vpop.f32.mrf.mxu0
        %v2230 = vadd.f32 0.0, %v2229
        %v2231 = vpop.f32.mrf.mxu0
        %2232 = vmatprep.mubr.bf16.mxu0 0
        %2233 = vmatmul.mubr.bf16.gmra.mxu0 %v2132
        %v2234 = vpop.f32.mrf.mxu0
        %v2235 = vadd.f32 0.0, %v2234
        %v2236 = vpop.f32.mrf.mxu0
        %v2237 = vpop.f32.mrf.mxu0
        %v2238 = vadd.f32 0.0, %v2237
        %v2239 = vpop.f32.mrf.mxu0
        %2240 = vmatprep.mubr.bf16.mxu0 0
        %2241 = vmatmul.mubr.bf16.gmra.mxu0 %v2133
        %v2242 = vpop.f32.mrf.mxu0
        %v2243 = vadd.f32 0.0, %v2242
        %v2244 = vpop.f32.mrf.mxu0
        %v2245 = vpop.f32.mrf.mxu0
        %v2246 = vadd.f32 0.0, %v2245
        %v2247 = vpop.f32.mrf.mxu0
        %2248 = vmatprep.mubr.bf16.mxu0 0
        %2249 = vmatmul.mubr.bf16.gmra.mxu0 %v2134
        %v2250 = vpop.f32.mrf.mxu0
        %v2251 = vadd.f32 0.0, %v2250
        %v2252 = vpop.f32.mrf.mxu0
        %v2253 = vpop.f32.mrf.mxu0
        %v2254 = vadd.f32 0.0, %v2253
        %v2255 = vpop.f32.mrf.mxu0
        %2256 = vmatprep.mubr.bf16.mxu0 0
        %2257 = vmatmul.mubr.bf16.gmra.mxu0 %v2135
        %v2258 = vpop.f32.mrf.mxu0
        %v2259 = vadd.f32 0.0, %v2258
        %v2260 = vpop.f32.mrf.mxu0
        %v2261 = vpop.f32.mrf.mxu0
        %v2262 = vadd.f32 0.0, %v2261
        %v2263 = vpop.f32.mrf.mxu0
        %2264 = vdwg.mxu0
        %v2265 = vld [vmem:[#allocation7 + $0x40] sm:$0xff]
        %v2266 = vld [vmem:[#allocation7 + $0x48] sm:$0xff]
        %v2267 = vld [vmem:[#allocation7 + $0x50] sm:$0xff]
        %v2268 = vld [vmem:[#allocation7 + $0x58] sm:$0xff]
        %v2269 = vld [vmem:[#allocation7 + $0x60] sm:$0xff]
        %v2270 = vld [vmem:[#allocation7 + $0x68] sm:$0xff]
        %v2271 = vld [vmem:[#allocation7 + $0x70] sm:$0xff]
        %v2272 = vld [vmem:[#allocation7 + $0x78] sm:$0xff]
        %v2273 = vpack.c.bf16 %v2206, %v2203
        %v2274 = vpack.c.bf16 %v2214, %v2211
        %v2275 = vpack.c.bf16 %v2222, %v2219
        %v2276 = vpack.c.bf16 %v2230, %v2227
        %v2277 = vpack.c.bf16 %v2238, %v2235
        %v2278 = vpack.c.bf16 %v2246, %v2243
        %v2279 = vpack.c.bf16 %v2254, %v2251
        %v2280 = vpack.c.bf16 %v2262, %v2259
        %v2289 = vunpack.c.l.b16 %v2265
        %v2290 = vunpack.c.h.b16 %v2265
        %v2291 = vunpack.c.l.b16 %v2266
        %v2292 = vunpack.c.h.b16 %v2266
        %v2293 = vunpack.c.l.b16 %v2267
        %v2294 = vunpack.c.h.b16 %v2267
        %v2295 = vunpack.c.l.b16 %v2268
        %v2296 = vunpack.c.h.b16 %v2268
        %v2297 = vunpack.c.l.b16 %v2269
        %v2298 = vunpack.c.h.b16 %v2269
        %v2299 = vunpack.c.l.b16 %v2270
        %v2300 = vunpack.c.h.b16 %v2270
        %v2301 = vunpack.c.l.b16 %v2271
        %v2302 = vunpack.c.h.b16 %v2271
        %v2303 = vunpack.c.l.b16 %v2272
        %v2304 = vunpack.c.h.b16 %v2272
        %v2305 = vpack.c.b16 %v2291, %v2289
        %v2306 = vpack.c.b16 %v2292, %v2290
        %v2307 = vpack.c.b16 %v2295, %v2293
        %v2308 = vpack.c.b16 %v2296, %v2294
        %v2309 = vpack.c.b16 %v2299, %v2297
        %v2310 = vpack.c.b16 %v2300, %v2298
        %v2311 = vpack.c.b16 %v2303, %v2301
        %v2312 = vpack.c.b16 %v2304, %v2302
        %v2322 = vsel %vm1348, %v2273, 0
        %v2325 = vsel %vm1348, %v2274, 0
        %v2328 = vsel %vm1348, %v2275, 0
        %v2331 = vsel %vm1348, %v2276, 0
        %v2334 = vsel %vm1348, %v2277, 0
        %v2337 = vsel %vm1348, %v2278, 0
        %v2340 = vsel %vm1348, %v2279, 0
        %v2343 = vsel %vm1348, %v2280, 0
        %2345 = vmatprep.subr.bf16.mxu0 0
        %2346 = vmatpush1.bf16.msra.mxu0 0
        %2347 = vmatprep.subr.bf16.mxu0 0
        %2348 = vmatpush1.bf16.msra.mxu0 0
        %2349 = vmatprep.subr.bf16.mxu0 0
        %2350 = vmatpush1.bf16.msra.mxu0 0
        %2351 = vmatprep.subr.bf16.mxu0 0
        %2352 = vmatpush1.bf16.msra.mxu0 0
        %2353 = vmatprep.subr.bf16.mxu0 %v2312
        %2354 = vmatpush1.bf16.msra.mxu0 %v2311
        %2355 = vmatprep.subr.bf16.mxu0 %v2310
        %2356 = vmatpush1.bf16.msra.mxu0 %v2309
        %2357 = vmatprep.subr.bf16.mxu0 %v2308
        %2358 = vmatpush1.bf16.msra.mxu0 %v2307
        %2359 = vmatprep.subr.bf16.mxu0 %v2306
        %2360 = vmatpush1.bf16.msra.mxu0 %v2305
        %2361 = vmatprep.subr.bf16.mxu0 0
        %2362 = vmatpush2.bf16.msra.mxu0 0
        %2363 = vmatprep.subr.bf16.mxu0 0
        %2364 = vmatpush2.bf16.msra.mxu0 0
        %2365 = vmatprep.subr.bf16.mxu0 0
        %2366 = vmatpush2.bf16.msra.mxu0 0
        %2367 = vmatprep.subr.bf16.mxu0 0
        %2368 = vmatpush2.bf16.msra.mxu0 0
        %2369 = vmatprep.subr.bf16.mxu0 0
        %2370 = vmatpush2.bf16.msra.mxu0 0
        %2371 = vmatprep.subr.bf16.mxu0 0
        %2372 = vmatpush2.bf16.msra.mxu0 0
        %2373 = vmatprep.subr.bf16.mxu0 0
        %2374 = vmatpush2.bf16.msra.mxu0 0
        %2375 = vmatprep.subr.bf16.mxu0 0
        %2376 = vmatpush2.bf16.msra.mxu0 0
        %2377 = vmatprep.mubr.bf16.mxu0 0
        %2378 = vmatmul.mubr.bf16.gmra.mxu0 %v2322
        %v2379 = vpop.f32.mrf.mxu0
        %v2380 = vadd.f32 0.0, %v2379
        %v2381 = vpop.f32.mrf.mxu0
        %v2382 = vadd.f32 0.0, %v2381
        %v2383 = vpop.f32.mrf.mxu0
        %v2384 = vadd.f32 0.0, %v2383
        %v2385 = vpop.f32.mrf.mxu0
        %v2386 = vadd.f32 0.0, %v2385
        %2387 = vmatprep.mubr.bf16.mxu0 0
        %2388 = vmatmul.mubr.bf16.gmra.mxu0 %v2325
        %v2389 = vpop.f32.mrf.mxu0
        %v2390 = vadd.f32 0.0, %v2389
        %v2391 = vpop.f32.mrf.mxu0
        %v2392 = vadd.f32 0.0, %v2391
        %v2393 = vpop.f32.mrf.mxu0
        %v2394 = vadd.f32 0.0, %v2393
        %v2395 = vpop.f32.mrf.mxu0
        %v2396 = vadd.f32 0.0, %v2395
        %2397 = vmatprep.mubr.bf16.mxu0 0
        %2398 = vmatmul.mubr.bf16.gmra.mxu0 %v2328
        %v2399 = vpop.f32.mrf.mxu0
        %v2400 = vadd.f32 0.0, %v2399
        %v2401 = vpop.f32.mrf.mxu0
        %v2402 = vadd.f32 0.0, %v2401
        %v2403 = vpop.f32.mrf.mxu0
        %v2404 = vadd.f32 0.0, %v2403
        %v2405 = vpop.f32.mrf.mxu0
        %v2406 = vadd.f32 0.0, %v2405
        %2407 = vmatprep.mubr.bf16.mxu0 0
        %2408 = vmatmul.mubr.bf16.gmra.mxu0 %v2331
        %v2409 = vpop.f32.mrf.mxu0
        %v2410 = vadd.f32 0.0, %v2409
        %v2411 = vpop.f32.mrf.mxu0
        %v2412 = vadd.f32 0.0, %v2411
        %v2413 = vpop.f32.mrf.mxu0
        %v2414 = vadd.f32 0.0, %v2413
        %v2415 = vpop.f32.mrf.mxu0
        %v2416 = vadd.f32 0.0, %v2415
        %2417 = vmatprep.mubr.bf16.mxu0 0
        %2418 = vmatmul.mubr.bf16.gmra.mxu0 %v2334
        %v2419 = vpop.f32.mrf.mxu0
        %v2420 = vadd.f32 0.0, %v2419
        %v2421 = vpop.f32.mrf.mxu0
        %v2422 = vadd.f32 0.0, %v2421
        %v2423 = vpop.f32.mrf.mxu0
        %v2424 = vadd.f32 0.0, %v2423
        %v2425 = vpop.f32.mrf.mxu0
        %v2426 = vadd.f32 0.0, %v2425
        %2427 = vmatprep.mubr.bf16.mxu0 0
        %2428 = vmatmul.mubr.bf16.gmra.mxu0 %v2337
        %v2429 = vpop.f32.mrf.mxu0
        %v2430 = vadd.f32 0.0, %v2429
        %v2431 = vpop.f32.mrf.mxu0
        %v2432 = vadd.f32 0.0, %v2431
        %v2433 = vpop.f32.mrf.mxu0
        %v2434 = vadd.f32 0.0, %v2433
        %v2435 = vpop.f32.mrf.mxu0
        %v2436 = vadd.f32 0.0, %v2435
        %2437 = vmatprep.mubr.bf16.mxu0 0
        %2438 = vmatmul.mubr.bf16.gmra.mxu0 %v2340
        %v2439 = vpop.f32.mrf.mxu0
        %v2440 = vadd.f32 0.0, %v2439
        %v2441 = vpop.f32.mrf.mxu0
        %v2442 = vadd.f32 0.0, %v2441
        %v2443 = vpop.f32.mrf.mxu0
        %v2444 = vadd.f32 0.0, %v2443
        %v2445 = vpop.f32.mrf.mxu0
        %v2446 = vadd.f32 0.0, %v2445
        %2447 = vmatprep.mubr.bf16.mxu0 0
        %2448 = vmatmul.mubr.bf16.gmra.mxu0 %v2343
        %v2449 = vpop.f32.mrf.mxu0
        %v2450 = vadd.f32 0.0, %v2449
        %v2451 = vpop.f32.mrf.mxu0
        %v2452 = vadd.f32 0.0, %v2451
        %v2453 = vpop.f32.mrf.mxu0
        %v2454 = vadd.f32 0.0, %v2453
        %v2455 = vpop.f32.mrf.mxu0
        %v2456 = vadd.f32 0.0, %v2455
        %2457 = vdwg.mxu0
        %v2466 = vunpack.c.l.b16 %v1759
        %v2467 = vunpack.c.h.b16 %v1759
        %v2468 = vunpack.c.l.b16 %v1760
        %v2469 = vunpack.c.h.b16 %v1760
        %v2470 = vunpack.c.l.b16 %v1761
        %v2471 = vunpack.c.h.b16 %v1761
        %v2472 = vunpack.c.l.b16 %v1762
        %v2473 = vunpack.c.h.b16 %v1762
        %v2474 = vunpack.c.l.b16 %v1763
        %v2475 = vunpack.c.h.b16 %v1763
        %v2476 = vunpack.c.l.b16 %v1764
        %v2477 = vunpack.c.h.b16 %v1764
        %v2478 = vunpack.c.l.b16 %v1765
        %v2479 = vunpack.c.h.b16 %v1765
        %v2480 = vunpack.c.l.b16 %v1766
        %v2481 = vunpack.c.h.b16 %v1766
        %v2482 = vpack.c.b16 %v2468, %v2466
        %v2483 = vpack.c.b16 %v2469, %v2467
        %v2484 = vpack.c.b16 %v2472, %v2470
        %v2485 = vpack.c.b16 %v2473, %v2471
        %v2486 = vpack.c.b16 %v2476, %v2474
        %v2487 = vpack.c.b16 %v2477, %v2475
        %v2488 = vpack.c.b16 %v2480, %v2478
        %v2489 = vpack.c.b16 %v2481, %v2479
        %v2499 = vsel %vm1348, %v1767, 0
        %v2502 = vsel %vm1348, %v1768, 0
        %v2505 = vsel %vm1348, %v1769, 0
        %v2508 = vsel %vm1348, %v1770, 0
        %v2511 = vsel %vm1348, %v1771, 0
        %v2514 = vsel %vm1348, %v1772, 0
        %v2517 = vsel %vm1348, %v1773, 0
        %v2520 = vsel %vm1348, %v1774, 0
        %2522 = vmatprep.subr.bf16.mxu0 0
        %2523 = vmatpush1.bf16.msra.mxu0 0
        %2524 = vmatprep.subr.bf16.mxu0 0
        %2525 = vmatpush1.bf16.msra.mxu0 0
        %2526 = vmatprep.subr.bf16.mxu0 0
        %2527 = vmatpush1.bf16.msra.mxu0 0
        %2528 = vmatprep.subr.bf16.mxu0 0
        %2529 = vmatpush1.bf16.msra.mxu0 0
        %2530 = vmatprep.subr.bf16.mxu0 %v2489
        %2531 = vmatpush1.bf16.msra.mxu0 %v2488
        %2532 = vmatprep.subr.bf16.mxu0 %v2487
        %2533 = vmatpush1.bf16.msra.mxu0 %v2486
        %2534 = vmatprep.subr.bf16.mxu0 %v2485
        %2535 = vmatpush1.bf16.msra.mxu0 %v2484
        %2536 = vmatprep.subr.bf16.mxu0 %v2483
        %2537 = vmatpush1.bf16.msra.mxu0 %v2482
        %2538 = vmatprep.subr.bf16.mxu0 0
        %2539 = vmatpush2.bf16.msra.mxu0 0
        %2540 = vmatprep.subr.bf16.mxu0 0
        %2541 = vmatpush2.bf16.msra.mxu0 0
        %2542 = vmatprep.subr.bf16.mxu0 0
        %2543 = vmatpush2.bf16.msra.mxu0 0
        %2544 = vmatprep.subr.bf16.mxu0 0
        %2545 = vmatpush2.bf16.msra.mxu0 0
        %2546 = vmatprep.subr.bf16.mxu0 0
        %2547 = vmatpush2.bf16.msra.mxu0 0
        %2548 = vmatprep.subr.bf16.mxu0 0
        %2549 = vmatpush2.bf16.msra.mxu0 0
        %2550 = vmatprep.subr.bf16.mxu0 0
        %2551 = vmatpush2.bf16.msra.mxu0 0
        %2552 = vmatprep.subr.bf16.mxu0 0
        %2553 = vmatpush2.bf16.msra.mxu0 0
        %2554 = vmatprep.mubr.bf16.mxu0 0
        %2555 = vmatmul.mubr.bf16.gmra.mxu0 %v2499
        %v2556 = vpop.f32.mrf.mxu0
        %v2557 = vadd.f32 %v2380, %v2556
        %v2558 = vpop.f32.mrf.mxu0
        %v2559 = vadd.f32 %v2382, %v2558
        %v2560 = vpop.f32.mrf.mxu0
        %v2561 = vadd.f32 %v2384, %v2560
        %v2562 = vpop.f32.mrf.mxu0
        %v2563 = vadd.f32 %v2386, %v2562
        %2564 = vmatprep.mubr.bf16.mxu0 0
        %2565 = vmatmul.mubr.bf16.gmra.mxu0 %v2502
        %v2566 = vpop.f32.mrf.mxu0
        %v2567 = vadd.f32 %v2390, %v2566
        %v2568 = vpop.f32.mrf.mxu0
        %v2569 = vadd.f32 %v2392, %v2568
        %v2570 = vpop.f32.mrf.mxu0
        %v2571 = vadd.f32 %v2394, %v2570
        %v2572 = vpop.f32.mrf.mxu0
        %v2573 = vadd.f32 %v2396, %v2572
        %2574 = vmatprep.mubr.bf16.mxu0 0
        %2575 = vmatmul.mubr.bf16.gmra.mxu0 %v2505
        %v2576 = vpop.f32.mrf.mxu0
        %v2577 = vadd.f32 %v2400, %v2576
        %v2578 = vpop.f32.mrf.mxu0
        %v2579 = vadd.f32 %v2402, %v2578
        %v2580 = vpop.f32.mrf.mxu0
        %v2581 = vadd.f32 %v2404, %v2580
        %v2582 = vpop.f32.mrf.mxu0
        %v2583 = vadd.f32 %v2406, %v2582
        %2584 = vmatprep.mubr.bf16.mxu0 0
        %2585 = vmatmul.mubr.bf16.gmra.mxu0 %v2508
        %v2586 = vpop.f32.mrf.mxu0
        %v2587 = vadd.f32 %v2410, %v2586
        %v2588 = vpop.f32.mrf.mxu0
        %v2589 = vadd.f32 %v2412, %v2588
        %v2590 = vpop.f32.mrf.mxu0
        %v2591 = vadd.f32 %v2414, %v2590
        %v2592 = vpop.f32.mrf.mxu0
        %v2593 = vadd.f32 %v2416, %v2592
        %2594 = vmatprep.mubr.bf16.mxu0 0
        %2595 = vmatmul.mubr.bf16.gmra.mxu0 %v2511
        %v2596 = vpop.f32.mrf.mxu0
        %v2597 = vadd.f32 %v2420, %v2596
        %v2598 = vpop.f32.mrf.mxu0
        %v2599 = vadd.f32 %v2422, %v2598
        %v2600 = vpop.f32.mrf.mxu0
        %v2601 = vadd.f32 %v2424, %v2600
        %v2602 = vpop.f32.mrf.mxu0
        %v2603 = vadd.f32 %v2426, %v2602
        %2604 = vmatprep.mubr.bf16.mxu0 0
        %2605 = vmatmul.mubr.bf16.gmra.mxu0 %v2514
        %v2606 = vpop.f32.mrf.mxu0
        %v2607 = vadd.f32 %v2430, %v2606
        %v2608 = vpop.f32.mrf.mxu0
        %v2609 = vadd.f32 %v2432, %v2608
        %v2610 = vpop.f32.mrf.mxu0
        %v2611 = vadd.f32 %v2434, %v2610
        %v2612 = vpop.f32.mrf.mxu0
        %v2613 = vadd.f32 %v2436, %v2612
        %2614 = vmatprep.mubr.bf16.mxu0 0
        %2615 = vmatmul.mubr.bf16.gmra.mxu0 %v2517
        %v2616 = vpop.f32.mrf.mxu0
        %v2617 = vadd.f32 %v2440, %v2616
        %v2618 = vpop.f32.mrf.mxu0
        %v2619 = vadd.f32 %v2442, %v2618
        %v2620 = vpop.f32.mrf.mxu0
        %v2621 = vadd.f32 %v2444, %v2620
        %v2622 = vpop.f32.mrf.mxu0
        %v2623 = vadd.f32 %v2446, %v2622
        %2624 = vmatprep.mubr.bf16.mxu0 0
        %2625 = vmatmul.mubr.bf16.gmra.mxu0 %v2520
        %v2626 = vpop.f32.mrf.mxu0
        %v2627 = vadd.f32 %v2450, %v2626
        %v2628 = vpop.f32.mrf.mxu0
        %v2629 = vadd.f32 %v2452, %v2628
        %v2630 = vpop.f32.mrf.mxu0
        %v2631 = vadd.f32 %v2454, %v2630
        %v2632 = vpop.f32.mrf.mxu0
        %v2633 = vadd.f32 %v2456, %v2632
        %2634 = vdwg.mxu0
        %v2635 = vpack.c.bf16 %v1295, %v1293
        %v2636 = vpack.c.bf16 %v1299, %v1297
        %v2637 = vpack.c.bf16 %v1303, %v1301
        %v2638 = vpack.c.bf16 %v1307, %v1305
        %v2639 = vpack.c.bf16 %v1311, %v1309
        %v2640 = vpack.c.bf16 %v1315, %v1313
        %v2641 = vpack.c.bf16 %v1319, %v1317
        %v2642 = vpack.c.bf16 %v1323, %v1321
        %v2643 = vpack.c.bf16 %v1107, %v1103
        %v2644 = vpack.c.bf16 %v1117, %v1113
        %v2645 = vpack.c.bf16 %v1127, %v1123
        %v2646 = vpack.c.bf16 %v1137, %v1133
        %v2647 = vpack.c.bf16 %v1147, %v1143
        %v2648 = vpack.c.bf16 %v1157, %v1153
        %v2649 = vpack.c.bf16 %v1167, %v1163
        %v2650 = vpack.c.bf16 %v1177, %v1173
        %v2651 = vpack.c.bf16 %v1220, %v1216
        %v2652 = vpack.c.bf16 %v1230, %v1226
        %v2653 = vpack.c.bf16 %v1240, %v1236
        %v2654 = vpack.c.bf16 %v1250, %v1246
        %v2655 = vpack.c.bf16 %v1260, %v1256
        %v2656 = vpack.c.bf16 %v1270, %v1266
        %v2657 = vpack.c.bf16 %v1280, %v1276
        %v2658 = vpack.c.bf16 %v1290, %v1286
        %v2660 = vsel %vm1348, %v2635, 0
        %v2663 = vsel %vm1348, %v2636, 0
        %v2666 = vsel %vm1348, %v2637, 0
        %v2669 = vsel %vm1348, %v2638, 0
        %v2672 = vsel %vm1348, %v2639, 0
        %v2675 = vsel %vm1348, %v2640, 0
        %v2678 = vsel %vm1348, %v2641, 0
        %v2681 = vsel %vm1348, %v2642, 0
        %v2684 = vsel %vm1348, %v2643, 0
        %v2687 = vsel %vm1348, %v2644, 0
        %v2690 = vsel %vm1348, %v2645, 0
        %v2693 = vsel %vm1348, %v2646, 0
        %v2696 = vsel %vm1348, %v2647, 0
        %v2699 = vsel %vm1348, %v2648, 0
        %v2702 = vsel %vm1348, %v2649, 0
        %v2705 = vsel %vm1348, %v2650, 0
        %2707 = vmatprep.subr.bf16.mxu0 0
        %2708 = vmatpush1.bf16.xpose.msra.mxu0 %v2705
        %2709 = vmatprep.subr.bf16.mxu0 0
        %2710 = vmatpush1.bf16.xpose.msra.mxu0 %v2702
        %2711 = vmatprep.subr.bf16.mxu0 0
        %2712 = vmatpush1.bf16.xpose.msra.mxu0 %v2699
        %2713 = vmatprep.subr.bf16.mxu0 0
        %2714 = vmatpush1.bf16.xpose.msra.mxu0 %v2696
        %2715 = vmatprep.subr.bf16.mxu0 0
        %2716 = vmatpush1.bf16.xpose.msra.mxu0 %v2693
        %2717 = vmatprep.subr.bf16.mxu0 0
        %2718 = vmatpush1.bf16.xpose.msra.mxu0 %v2690
        %2719 = vmatprep.subr.bf16.mxu0 0
        %2720 = vmatpush1.bf16.xpose.msra.mxu0 %v2687
        %2721 = vmatprep.subr.bf16.mxu0 0
        %2722 = vmatpush1.bf16.xpose.msra.mxu0 %v2684
        %2723 = vmatprep.subr.bf16.mxu0 0
        %2724 = vmatpush2.bf16.xpose.msra.mxu0 0
        %2725 = vmatprep.subr.bf16.mxu0 0
        %2726 = vmatpush2.bf16.xpose.msra.mxu0 0
        %2727 = vmatprep.subr.bf16.mxu0 0
        %2728 = vmatpush2.bf16.xpose.msra.mxu0 0
        %2729 = vmatprep.subr.bf16.mxu0 0
        %2730 = vmatpush2.bf16.xpose.msra.mxu0 0
        %2731 = vmatprep.subr.bf16.mxu0 0
        %2732 = vmatpush2.bf16.xpose.msra.mxu0 0
        %2733 = vmatprep.subr.bf16.mxu0 0
        %2734 = vmatpush2.bf16.xpose.msra.mxu0 0
        %2735 = vmatprep.subr.bf16.mxu0 0
        %2736 = vmatpush2.bf16.xpose.msra.mxu0 0
        %2737 = vmatprep.subr.bf16.mxu0 0
        %2738 = vmatpush2.bf16.xpose.msra.mxu0 0
        %2739 = vmatprep.mubr.bf16.mxu0 0
        %2740 = vmatmul.mubr.bf16.gmra.mxu0 %v2660
        %v2741 = vpop.f32.mrf.mxu0
        %v2742 = vadd.f32 0.0, %v2741
        %v2743 = vpop.f32.mrf.mxu0
        %v2744 = vpop.f32.mrf.mxu0
        %v2745 = vadd.f32 0.0, %v2744
        %v2746 = vpop.f32.mrf.mxu0
        %2747 = vmatprep.mubr.bf16.mxu0 0
        %2748 = vmatmul.mubr.bf16.gmra.mxu0 %v2663
        %v2749 = vpop.f32.mrf.mxu0
        %v2750 = vadd.f32 0.0, %v2749
        %v2751 = vpop.f32.mrf.mxu0
        %v2752 = vpop.f32.mrf.mxu0
        %v2753 = vadd.f32 0.0, %v2752
        %v2754 = vpop.f32.mrf.mxu0
        %2755 = vmatprep.mubr.bf16.mxu0 0
        %2756 = vmatmul.mubr.bf16.gmra.mxu0 %v2666
        %v2757 = vpop.f32.mrf.mxu0
        %v2758 = vadd.f32 0.0, %v2757
        %v2759 = vpop.f32.mrf.mxu0
        %v2760 = vpop.f32.mrf.mxu0
        %v2761 = vadd.f32 0.0, %v2760
        %v2762 = vpop.f32.mrf.mxu0
        %2763 = vmatprep.mubr.bf16.mxu0 0
        %2764 = vmatmul.mubr.bf16.gmra.mxu0 %v2669
        %v2765 = vpop.f32.mrf.mxu0
        %v2766 = vadd.f32 0.0, %v2765
        %v2767 = vpop.f32.mrf.mxu0
        %v2768 = vpop.f32.mrf.mxu0
        %v2769 = vadd.f32 0.0, %v2768
        %v2770 = vpop.f32.mrf.mxu0
        %2771 = vmatprep.mubr.bf16.mxu0 0
        %2772 = vmatmul.mubr.bf16.gmra.mxu0 %v2672
        %v2773 = vpop.f32.mrf.mxu0
        %v2774 = vadd.f32 0.0, %v2773
        %v2775 = vpop.f32.mrf.mxu0
        %v2776 = vpop.f32.mrf.mxu0
        %v2777 = vadd.f32 0.0, %v2776
        %v2778 = vpop.f32.mrf.mxu0
        %2779 = vmatprep.mubr.bf16.mxu0 0
        %2780 = vmatmul.mubr.bf16.gmra.mxu0 %v2675
        %v2781 = vpop.f32.mrf.mxu0
        %v2782 = vadd.f32 0.0, %v2781
        %v2783 = vpop.f32.mrf.mxu0
        %v2784 = vpop.f32.mrf.mxu0
        %v2785 = vadd.f32 0.0, %v2784
        %v2786 = vpop.f32.mrf.mxu0
        %2787 = vmatprep.mubr.bf16.mxu0 0
        %2788 = vmatmul.mubr.bf16.gmra.mxu0 %v2678
        %v2789 = vpop.f32.mrf.mxu0
        %v2790 = vadd.f32 0.0, %v2789
        %v2791 = vpop.f32.mrf.mxu0
        %v2792 = vpop.f32.mrf.mxu0
        %v2793 = vadd.f32 0.0, %v2792
        %v2794 = vpop.f32.mrf.mxu0
        %2795 = vmatprep.mubr.bf16.mxu0 0
        %2796 = vmatmul.mubr.bf16.gmra.mxu0 %v2681
        %v2797 = vpop.f32.mrf.mxu0
        %v2798 = vadd.f32 0.0, %v2797
        %v2799 = vpop.f32.mrf.mxu0
        %v2800 = vpop.f32.mrf.mxu0
        %v2801 = vadd.f32 0.0, %v2800
        %v2802 = vpop.f32.mrf.mxu0
        %2803 = vdwg.mxu0
        %v2804 = vsel %vm265, %v2742, -inf
        %v2805 = vsel %vm266, %v2745, -inf
        %v2806 = vsel %vm267, %v2750, -inf
        %v2807 = vsel %vm268, %v2753, -inf
        %v2808 = vsel %vm269, %v2758, -inf
        %v2809 = vsel %vm270, %v2761, -inf
        %v2810 = vsel %vm271, %v2766, -inf
        %v2811 = vsel %vm272, %v2769, -inf
        %v2812 = vsel %vm273, %v2774, -inf
        %v2813 = vsel %vm274, %v2777, -inf
        %v2814 = vsel %vm275, %v2782, -inf
        %v2815 = vsel %vm276, %v2785, -inf
        %v2816 = vsel %vm277, %v2790, -inf
        %v2817 = vsel %vm278, %v2793, -inf
        %v2818 = vsel %vm279, %v2798, -inf
        %v2819 = vsel %vm280, %v2801, -inf
        %2820 = vmax.xlane.f32.xlu0 %v2804
        %v2821 = vpop.xlane.xlu0 %2820
        %2822 = vmax.xlane.f32.xlu0 %v2805
        %v2823 = vpop.xlane.xlu0 %2822
        %2824 = vmax.xlane.f32.xlu0 %v2806
        %v2825 = vpop.xlane.xlu0 %2824
        %2826 = vmax.xlane.f32.xlu0 %v2807
        %v2827 = vpop.xlane.xlu0 %2826
        %2828 = vmax.xlane.f32.xlu0 %v2808
        %v2829 = vpop.xlane.xlu0 %2828
        %2830 = vmax.xlane.f32.xlu0 %v2809
        %v2831 = vpop.xlane.xlu0 %2830
        %2832 = vmax.xlane.f32.xlu0 %v2810
        %v2833 = vpop.xlane.xlu0 %2832
        %2834 = vmax.xlane.f32.xlu0 %v2811
        %v2835 = vpop.xlane.xlu0 %2834
        %2836 = vmax.xlane.f32.xlu0 %v2812
        %v2837 = vpop.xlane.xlu0 %2836
        %2838 = vmax.xlane.f32.xlu0 %v2813
        %v2839 = vpop.xlane.xlu0 %2838
        %2840 = vmax.xlane.f32.xlu0 %v2814
        %v2841 = vpop.xlane.xlu0 %2840
        %2842 = vmax.xlane.f32.xlu0 %v2815
        %v2843 = vpop.xlane.xlu0 %2842
        %2844 = vmax.xlane.f32.xlu0 %v2816
        %v2845 = vpop.xlane.xlu0 %2844
        %2846 = vmax.xlane.f32.xlu0 %v2817
        %v2847 = vpop.xlane.xlu0 %2846
        %2848 = vmax.xlane.f32.xlu0 %v2818
        %v2849 = vpop.xlane.xlu0 %2848
        %2850 = vmax.xlane.f32.xlu0 %v2819
        %v2851 = vpop.xlane.xlu0 %2850
        %v2852 = vsub.f32 %v2804, %v2821
        %v2853 = vsub.f32 %v2805, %v2823
        %v2854 = vsub.f32 %v2806, %v2825
        %v2855 = vsub.f32 %v2807, %v2827
        %v2856 = vsub.f32 %v2808, %v2829
        %v2857 = vsub.f32 %v2809, %v2831
        %v2858 = vsub.f32 %v2810, %v2833
        %v2859 = vsub.f32 %v2811, %v2835
        %v2860 = vsub.f32 %v2812, %v2837
        %v2861 = vsub.f32 %v2813, %v2839
        %v2862 = vsub.f32 %v2814, %v2841
        %v2863 = vsub.f32 %v2815, %v2843
        %v2864 = vsub.f32 %v2816, %v2845
        %v2865 = vsub.f32 %v2817, %v2847
        %v2866 = vsub.f32 %v2818, %v2849
        %v2867 = vsub.f32 %v2819, %v2851
        %v2868 = vmul.f32 %v2852, 1.442695
        %v2869 = vpow.pop %v2868
        %v2870 = vmul.f32 %v2853, 1.442695
        %v2871 = vpow.pop %v2870
        %v2872 = vmul.f32 %v2854, 1.442695
        %v2873 = vpow.pop %v2872
        %v2874 = vmul.f32 %v2855, 1.442695
        %v2875 = vpow.pop %v2874
        %v2876 = vmul.f32 %v2856, 1.442695
        %v2877 = vpow.pop %v2876
        %v2878 = vmul.f32 %v2857, 1.442695
        %v2879 = vpow.pop %v2878
        %v2880 = vmul.f32 %v2858, 1.442695
        %v2881 = vpow.pop %v2880
        %v2882 = vmul.f32 %v2859, 1.442695
        %v2883 = vpow.pop %v2882
        %v2884 = vmul.f32 %v2860, 1.442695
        %v2885 = vpow.pop %v2884
        %v2886 = vmul.f32 %v2861, 1.442695
        %v2887 = vpow.pop %v2886
        %v2888 = vmul.f32 %v2862, 1.442695
        %v2889 = vpow.pop %v2888
        %v2890 = vmul.f32 %v2863, 1.442695
        %v2891 = vpow.pop %v2890
        %v2892 = vmul.f32 %v2864, 1.442695
        %v2893 = vpow.pop %v2892
        %v2894 = vmul.f32 %v2865, 1.442695
        %v2895 = vpow.pop %v2894
        %v2896 = vmul.f32 %v2866, 1.442695
        %v2897 = vpow.pop %v2896
        %v2898 = vmul.f32 %v2867, 1.442695
        %v2899 = vpow.pop %v2898
        %2900 = vadd.xlane.f32.xlu0 %v2869
        %v2901 = vpop.xlane.xlu0 %2900
        %2902 = vadd.xlane.f32.xlu0 %v2871
        %v2903 = vpop.xlane.xlu0 %2902
        %2904 = vadd.xlane.f32.xlu0 %v2873
        %v2905 = vpop.xlane.xlu0 %2904
        %2906 = vadd.xlane.f32.xlu0 %v2875
        %v2907 = vpop.xlane.xlu0 %2906
        %2908 = vadd.xlane.f32.xlu0 %v2877
        %v2909 = vpop.xlane.xlu0 %2908
        %2910 = vadd.xlane.f32.xlu0 %v2879
        %v2911 = vpop.xlane.xlu0 %2910
        %2912 = vadd.xlane.f32.xlu0 %v2881
        %v2913 = vpop.xlane.xlu0 %2912
        %2914 = vadd.xlane.f32.xlu0 %v2883
        %v2915 = vpop.xlane.xlu0 %2914
        %2916 = vadd.xlane.f32.xlu0 %v2885
        %v2917 = vpop.xlane.xlu0 %2916
        %2918 = vadd.xlane.f32.xlu0 %v2887
        %v2919 = vpop.xlane.xlu0 %2918
        %2920 = vadd.xlane.f32.xlu0 %v2889
        %v2921 = vpop.xlane.xlu0 %2920
        %2922 = vadd.xlane.f32.xlu0 %v2891
        %v2923 = vpop.xlane.xlu0 %2922
        %2924 = vadd.xlane.f32.xlu0 %v2893
        %v2925 = vpop.xlane.xlu0 %2924
        %2926 = vadd.xlane.f32.xlu0 %v2895
        %v2927 = vpop.xlane.xlu0 %2926
        %2928 = vadd.xlane.f32.xlu0 %v2897
        %v2929 = vpop.xlane.xlu0 %2928
        %2930 = vadd.xlane.f32.xlu0 %v2899
        %v2931 = vpop.xlane.xlu0 %2930
        %v2932 = vrcp.pop %v2901
        %v2933 = vrcp.pop %v2903
        %v2934 = vrcp.pop %v2905
        %v2935 = vrcp.pop %v2907
        %v2936 = vrcp.pop %v2909
        %v2937 = vrcp.pop %v2911
        %v2938 = vrcp.pop %v2913
        %v2939 = vrcp.pop %v2915
        %v2940 = vrcp.pop %v2917
        %v2941 = vrcp.pop %v2919
        %v2942 = vrcp.pop %v2921
        %v2943 = vrcp.pop %v2923
        %v2944 = vrcp.pop %v2925
        %v2945 = vrcp.pop %v2927
        %v2946 = vrcp.pop %v2929
        %v2947 = vrcp.pop %v2931
        %v2948 = vmul.f32 %v2869, %v2932
        %v2949 = vmul.f32 %v2871, %v2933
        %v2950 = vmul.f32 %v2873, %v2934
        %v2951 = vmul.f32 %v2875, %v2935
        %v2952 = vmul.f32 %v2877, %v2936
        %v2953 = vmul.f32 %v2879, %v2937
        %v2954 = vmul.f32 %v2881, %v2938
        %v2955 = vmul.f32 %v2883, %v2939
        %v2956 = vmul.f32 %v2885, %v2940
        %v2957 = vmul.f32 %v2887, %v2941
        %v2958 = vmul.f32 %v2889, %v2942
        %v2959 = vmul.f32 %v2891, %v2943
        %v2960 = vmul.f32 %v2893, %v2944
        %v2961 = vmul.f32 %v2895, %v2945
        %v2962 = vmul.f32 %v2897, %v2946
        %v2963 = vmul.f32 %v2899, %v2947
        %v2964 = vpack.c.bf16 %v2949, %v2948
        %v2965 = vpack.c.bf16 %v2951, %v2950
        %v2966 = vpack.c.bf16 %v2953, %v2952
        %v2967 = vpack.c.bf16 %v2955, %v2954
        %v2968 = vpack.c.bf16 %v2957, %v2956
        %v2969 = vpack.c.bf16 %v2959, %v2958
        %v2970 = vpack.c.bf16 %v2961, %v2960
        %v2971 = vpack.c.bf16 %v2963, %v2962
        %2972 = vmatprep.subr.bf16.mxu0 0
        %2973 = vmatpush1.bf16.msra.mxu0 %v2658
        %2974 = vmatprep.subr.bf16.mxu0 0
        %2975 = vmatpush1.bf16.msra.mxu0 %v2657
        %2976 = vmatprep.subr.bf16.mxu0 0
        %2977 = vmatpush1.bf16.msra.mxu0 %v2656
        %2978 = vmatprep.subr.bf16.mxu0 0
        %2979 = vmatpush1.bf16.msra.mxu0 %v2655
        %2980 = vmatprep.subr.bf16.mxu0 0
        %2981 = vmatpush1.bf16.msra.mxu0 %v2654
        %2982 = vmatprep.subr.bf16.mxu0 0
        %2983 = vmatpush1.bf16.msra.mxu0 %v2653
        %2984 = vmatprep.subr.bf16.mxu0 0
        %2985 = vmatpush1.bf16.msra.mxu0 %v2652
        %2986 = vmatprep.subr.bf16.mxu0 0
        %2987 = vmatpush1.bf16.msra.mxu0 %v2651
        %2988 = vmatprep.subr.bf16.mxu0 0
        %2989 = vmatpush2.bf16.msra.mxu0 0
        %2990 = vmatprep.subr.bf16.mxu0 0
        %2991 = vmatpush2.bf16.msra.mxu0 0
        %2992 = vmatprep.subr.bf16.mxu0 0
        %2993 = vmatpush2.bf16.msra.mxu0 0
        %2994 = vmatprep.subr.bf16.mxu0 0
        %2995 = vmatpush2.bf16.msra.mxu0 0
        %2996 = vmatprep.subr.bf16.mxu0 0
        %2997 = vmatpush2.bf16.msra.mxu0 0
        %2998 = vmatprep.subr.bf16.mxu0 0
        %2999 = vmatpush2.bf16.msra.mxu0 0
        %3000 = vmatprep.subr.bf16.mxu0 0
        %3001 = vmatpush2.bf16.msra.mxu0 0
        %3002 = vmatprep.subr.bf16.mxu0 0
        %3003 = vmatpush2.bf16.msra.mxu0 0
        %3004 = vmatprep.mubr.bf16.mxu0 0
        %3005 = vmatmul.mubr.bf16.gmra.mxu0 %v2964
        %v3006 = vpop.f32.mrf.mxu0
        %v3007 = vadd.f32 0.0, %v3006
        %v3008 = vpop.f32.mrf.mxu0
        %v3009 = vpop.f32.mrf.mxu0
        %v3010 = vadd.f32 0.0, %v3009
        %v3011 = vpop.f32.mrf.mxu0
        %3012 = vmatprep.mubr.bf16.mxu0 0
        %3013 = vmatmul.mubr.bf16.gmra.mxu0 %v2965
        %v3014 = vpop.f32.mrf.mxu0
        %v3015 = vadd.f32 0.0, %v3014
        %v3016 = vpop.f32.mrf.mxu0
        %v3017 = vpop.f32.mrf.mxu0
        %v3018 = vadd.f32 0.0, %v3017
        %v3019 = vpop.f32.mrf.mxu0
        %3020 = vmatprep.mubr.bf16.mxu0 0
        %3021 = vmatmul.mubr.bf16.gmra.mxu0 %v2966
        %v3022 = vpop.f32.mrf.mxu0
        %v3023 = vadd.f32 0.0, %v3022
        %v3024 = vpop.f32.mrf.mxu0
        %v3025 = vpop.f32.mrf.mxu0
        %v3026 = vadd.f32 0.0, %v3025
        %v3027 = vpop.f32.mrf.mxu0
        %3028 = vmatprep.mubr.bf16.mxu0 0
        %3029 = vmatmul.mubr.bf16.gmra.mxu0 %v2967
        %v3030 = vpop.f32.mrf.mxu0
        %v3031 = vadd.f32 0.0, %v3030
        %v3032 = vpop.f32.mrf.mxu0
        %v3033 = vpop.f32.mrf.mxu0
        %v3034 = vadd.f32 0.0, %v3033
        %v3035 = vpop.f32.mrf.mxu0
        %3036 = vmatprep.mubr.bf16.mxu0 0
        %3037 = vmatmul.mubr.bf16.gmra.mxu0 %v2968
        %v3038 = vpop.f32.mrf.mxu0
        %v3039 = vadd.f32 0.0, %v3038
        %v3040 = vpop.f32.mrf.mxu0
        %v3041 = vpop.f32.mrf.mxu0
        %v3042 = vadd.f32 0.0, %v3041
        %v3043 = vpop.f32.mrf.mxu0
        %3044 = vmatprep.mubr.bf16.mxu0 0
        %3045 = vmatmul.mubr.bf16.gmra.mxu0 %v2969
        %v3046 = vpop.f32.mrf.mxu0
        %v3047 = vadd.f32 0.0, %v3046
        %v3048 = vpop.f32.mrf.mxu0
        %v3049 = vpop.f32.mrf.mxu0
        %v3050 = vadd.f32 0.0, %v3049
        %v3051 = vpop.f32.mrf.mxu0
        %3052 = vmatprep.mubr.bf16.mxu0 0
        %3053 = vmatmul.mubr.bf16.gmra.mxu0 %v2970
        %v3054 = vpop.f32.mrf.mxu0
        %v3055 = vadd.f32 0.0, %v3054
        %v3056 = vpop.f32.mrf.mxu0
        %v3057 = vpop.f32.mrf.mxu0
        %v3058 = vadd.f32 0.0, %v3057
        %v3059 = vpop.f32.mrf.mxu0
        %3060 = vmatprep.mubr.bf16.mxu0 0
        %3061 = vmatmul.mubr.bf16.gmra.mxu0 %v2971
        %v3062 = vpop.f32.mrf.mxu0
        %v3063 = vadd.f32 0.0, %v3062
        %v3064 = vpop.f32.mrf.mxu0
        %v3065 = vpop.f32.mrf.mxu0
        %v3066 = vadd.f32 0.0, %v3065
        %v3067 = vpop.f32.mrf.mxu0
        %3068 = vdwg.mxu0
        %v3069 = vld [vmem:[#allocation7 + $0x80] sm:$0xff]
        %v3070 = vld [vmem:[#allocation7 + $0x88] sm:$0xff]
        %v3071 = vld [vmem:[#allocation7 + $0x90] sm:$0xff]
        %v3072 = vld [vmem:[#allocation7 + $0x98] sm:$0xff]
        %v3073 = vld [vmem:[#allocation7 + $0xa0] sm:$0xff]
        %v3074 = vld [vmem:[#allocation7 + $0xa8] sm:$0xff]
        %v3075 = vld [vmem:[#allocation7 + $0xb0] sm:$0xff]
        %v3076 = vld [vmem:[#allocation7 + $0xb8] sm:$0xff]
        %v3077 = vpack.c.bf16 %v3010, %v3007
        %v3078 = vpack.c.bf16 %v3018, %v3015
        %v3079 = vpack.c.bf16 %v3026, %v3023
        %v3080 = vpack.c.bf16 %v3034, %v3031
        %v3081 = vpack.c.bf16 %v3042, %v3039
        %v3082 = vpack.c.bf16 %v3050, %v3047
        %v3083 = vpack.c.bf16 %v3058, %v3055
        %v3084 = vpack.c.bf16 %v3066, %v3063
        %v3093 = vunpack.c.l.b16 %v3069
        %v3094 = vunpack.c.h.b16 %v3069
        %v3095 = vunpack.c.l.b16 %v3070
        %v3096 = vunpack.c.h.b16 %v3070
        %v3097 = vunpack.c.l.b16 %v3071
        %v3098 = vunpack.c.h.b16 %v3071
        %v3099 = vunpack.c.l.b16 %v3072
        %v3100 = vunpack.c.h.b16 %v3072
        %v3101 = vunpack.c.l.b16 %v3073
        %v3102 = vunpack.c.h.b16 %v3073
        %v3103 = vunpack.c.l.b16 %v3074
        %v3104 = vunpack.c.h.b16 %v3074
        %v3105 = vunpack.c.l.b16 %v3075
        %v3106 = vunpack.c.h.b16 %v3075
        %v3107 = vunpack.c.l.b16 %v3076
        %v3108 = vunpack.c.h.b16 %v3076
        %v3109 = vpack.c.b16 %v3095, %v3093
        %v3110 = vpack.c.b16 %v3096, %v3094
        %v3111 = vpack.c.b16 %v3099, %v3097
        %v3112 = vpack.c.b16 %v3100, %v3098
        %v3113 = vpack.c.b16 %v3103, %v3101
        %v3114 = vpack.c.b16 %v3104, %v3102
        %v3115 = vpack.c.b16 %v3107, %v3105
        %v3116 = vpack.c.b16 %v3108, %v3106
        %v3126 = vsel %vm1348, %v3077, 0
        %v3129 = vsel %vm1348, %v3078, 0
        %v3132 = vsel %vm1348, %v3079, 0
        %v3135 = vsel %vm1348, %v3080, 0
        %v3138 = vsel %vm1348, %v3081, 0
        %v3141 = vsel %vm1348, %v3082, 0
        %v3144 = vsel %vm1348, %v3083, 0
        %v3147 = vsel %vm1348, %v3084, 0
        %3149 = vmatprep.subr.bf16.mxu0 0
        %3150 = vmatpush1.bf16.msra.mxu0 0
        %3151 = vmatprep.subr.bf16.mxu0 0
        %3152 = vmatpush1.bf16.msra.mxu0 0
        %3153 = vmatprep.subr.bf16.mxu0 0
        %3154 = vmatpush1.bf16.msra.mxu0 0
        %3155 = vmatprep.subr.bf16.mxu0 0
        %3156 = vmatpush1.bf16.msra.mxu0 0
        %3157 = vmatprep.subr.bf16.mxu0 %v3116
        %3158 = vmatpush1.bf16.msra.mxu0 %v3115
        %3159 = vmatprep.subr.bf16.mxu0 %v3114
        %3160 = vmatpush1.bf16.msra.mxu0 %v3113
        %3161 = vmatprep.subr.bf16.mxu0 %v3112
        %3162 = vmatpush1.bf16.msra.mxu0 %v3111
        %3163 = vmatprep.subr.bf16.mxu0 %v3110
        %3164 = vmatpush1.bf16.msra.mxu0 %v3109
        %3165 = vmatprep.subr.bf16.mxu0 0
        %3166 = vmatpush2.bf16.msra.mxu0 0
        %3167 = vmatprep.subr.bf16.mxu0 0
        %3168 = vmatpush2.bf16.msra.mxu0 0
        %3169 = vmatprep.subr.bf16.mxu0 0
        %3170 = vmatpush2.bf16.msra.mxu0 0
        %3171 = vmatprep.subr.bf16.mxu0 0
        %3172 = vmatpush2.bf16.msra.mxu0 0
        %3173 = vmatprep.subr.bf16.mxu0 0
        %3174 = vmatpush2.bf16.msra.mxu0 0
        %3175 = vmatprep.subr.bf16.mxu0 0
        %3176 = vmatpush2.bf16.msra.mxu0 0
        %3177 = vmatprep.subr.bf16.mxu0 0
        %3178 = vmatpush2.bf16.msra.mxu0 0
        %3179 = vmatprep.subr.bf16.mxu0 0
        %3180 = vmatpush2.bf16.msra.mxu0 0
        %3181 = vmatprep.mubr.bf16.mxu0 0
        %3182 = vmatmul.mubr.bf16.gmra.mxu0 %v3126
        %v3183 = vpop.f32.mrf.mxu0
        %v3184 = vadd.f32 0.0, %v3183
        %v3185 = vpop.f32.mrf.mxu0
        %v3186 = vadd.f32 0.0, %v3185
        %v3187 = vpop.f32.mrf.mxu0
        %v3188 = vadd.f32 0.0, %v3187
        %v3189 = vpop.f32.mrf.mxu0
        %v3190 = vadd.f32 0.0, %v3189
        %3191 = vmatprep.mubr.bf16.mxu0 0
        %3192 = vmatmul.mubr.bf16.gmra.mxu0 %v3129
        %v3193 = vpop.f32.mrf.mxu0
        %v3194 = vadd.f32 0.0, %v3193
        %v3195 = vpop.f32.mrf.mxu0
        %v3196 = vadd.f32 0.0, %v3195
        %v3197 = vpop.f32.mrf.mxu0
        %v3198 = vadd.f32 0.0, %v3197
        %v3199 = vpop.f32.mrf.mxu0
        %v3200 = vadd.f32 0.0, %v3199
        %3201 = vmatprep.mubr.bf16.mxu0 0
        %3202 = vmatmul.mubr.bf16.gmra.mxu0 %v3132
        %v3203 = vpop.f32.mrf.mxu0
        %v3204 = vadd.f32 0.0, %v3203
        %v3205 = vpop.f32.mrf.mxu0
        %v3206 = vadd.f32 0.0, %v3205
        %v3207 = vpop.f32.mrf.mxu0
        %v3208 = vadd.f32 0.0, %v3207
        %v3209 = vpop.f32.mrf.mxu0
        %v3210 = vadd.f32 0.0, %v3209
        %3211 = vmatprep.mubr.bf16.mxu0 0
        %3212 = vmatmul.mubr.bf16.gmra.mxu0 %v3135
        %v3213 = vpop.f32.mrf.mxu0
        %v3214 = vadd.f32 0.0, %v3213
        %v3215 = vpop.f32.mrf.mxu0
        %v3216 = vadd.f32 0.0, %v3215
        %v3217 = vpop.f32.mrf.mxu0
        %v3218 = vadd.f32 0.0, %v3217
        %v3219 = vpop.f32.mrf.mxu0
        %v3220 = vadd.f32 0.0, %v3219
        %3221 = vmatprep.mubr.bf16.mxu0 0
        %3222 = vmatmul.mubr.bf16.gmra.mxu0 %v3138
        %v3223 = vpop.f32.mrf.mxu0
        %v3224 = vadd.f32 0.0, %v3223
        %v3225 = vpop.f32.mrf.mxu0
        %v3226 = vadd.f32 0.0, %v3225
        %v3227 = vpop.f32.mrf.mxu0
        %v3228 = vadd.f32 0.0, %v3227
        %v3229 = vpop.f32.mrf.mxu0
        %v3230 = vadd.f32 0.0, %v3229
        %3231 = vmatprep.mubr.bf16.mxu0 0
        %3232 = vmatmul.mubr.bf16.gmra.mxu0 %v3141
        %v3233 = vpop.f32.mrf.mxu0
        %v3234 = vadd.f32 0.0, %v3233
        %v3235 = vpop.f32.mrf.mxu0
        %v3236 = vadd.f32 0.0, %v3235
        %v3237 = vpop.f32.mrf.mxu0
        %v3238 = vadd.f32 0.0, %v3237
        %v3239 = vpop.f32.mrf.mxu0
        %v3240 = vadd.f32 0.0, %v3239
        %3241 = vmatprep.mubr.bf16.mxu0 0
        %3242 = vmatmul.mubr.bf16.gmra.mxu0 %v3144
        %v3243 = vpop.f32.mrf.mxu0
        %v3244 = vadd.f32 0.0, %v3243
        %v3245 = vpop.f32.mrf.mxu0
        %v3246 = vadd.f32 0.0, %v3245
        %v3247 = vpop.f32.mrf.mxu0
        %v3248 = vadd.f32 0.0, %v3247
        %v3249 = vpop.f32.mrf.mxu0
        %v3250 = vadd.f32 0.0, %v3249
        %3251 = vmatprep.mubr.bf16.mxu0 0
        %3252 = vmatmul.mubr.bf16.gmra.mxu0 %v3147
        %v3253 = vpop.f32.mrf.mxu0
        %v3254 = vadd.f32 0.0, %v3253
        %v3255 = vpop.f32.mrf.mxu0
        %v3256 = vadd.f32 0.0, %v3255
        %v3257 = vpop.f32.mrf.mxu0
        %v3258 = vadd.f32 0.0, %v3257
        %v3259 = vpop.f32.mrf.mxu0
        %v3260 = vadd.f32 0.0, %v3259
        %3261 = vdwg.mxu0
        %v3262 = vadd.f32 %v2557, %v3184
        %v3263 = vadd.f32 %v2559, %v3186
        %v3264 = vadd.f32 %v2561, %v3188
        %v3265 = vadd.f32 %v2563, %v3190
        %v3266 = vadd.f32 %v2567, %v3194
        %v3267 = vadd.f32 %v2569, %v3196
        %v3268 = vadd.f32 %v2571, %v3198
        %v3269 = vadd.f32 %v2573, %v3200
        %v3270 = vadd.f32 %v2577, %v3204
        %v3271 = vadd.f32 %v2579, %v3206
        %v3272 = vadd.f32 %v2581, %v3208
        %v3273 = vadd.f32 %v2583, %v3210
        %v3274 = vadd.f32 %v2587, %v3214
        %v3275 = vadd.f32 %v2589, %v3216
        %v3276 = vadd.f32 %v2591, %v3218
        %v3277 = vadd.f32 %v2593, %v3220
        %v3278 = vadd.f32 %v2597, %v3224
        %v3279 = vadd.f32 %v2599, %v3226
        %v3280 = vadd.f32 %v2601, %v3228
        %v3281 = vadd.f32 %v2603, %v3230
        %v3282 = vadd.f32 %v2607, %v3234
        %v3283 = vadd.f32 %v2609, %v3236
        %v3284 = vadd.f32 %v2611, %v3238
        %v3285 = vadd.f32 %v2613, %v3240
        %v3286 = vadd.f32 %v2617, %v3244
        %v3287 = vadd.f32 %v2619, %v3246
        %v3288 = vadd.f32 %v2621, %v3248
        %v3289 = vadd.f32 %v2623, %v3250
        %v3290 = vadd.f32 %v2627, %v3254
        %v3291 = vadd.f32 %v2629, %v3256
        %v3292 = vadd.f32 %v2631, %v3258
        %v3293 = vadd.f32 %v2633, %v3260
        %3302 = vrot.lane.b32.xlu0 %v2635, 64
        %v3303 = vpop.permute.xlu0 %3302
        %3304 = vrot.lane.b32.xlu0 %v2636, 64
        %v3305 = vpop.permute.xlu0 %3304
        %3306 = vrot.lane.b32.xlu0 %v2637, 64
        %v3307 = vpop.permute.xlu0 %3306
        %3308 = vrot.lane.b32.xlu0 %v2638, 64
        %v3309 = vpop.permute.xlu0 %3308
        %3310 = vrot.lane.b32.xlu0 %v2639, 64
        %v3311 = vpop.permute.xlu0 %3310
        %3312 = vrot.lane.b32.xlu0 %v2640, 64
        %v3313 = vpop.permute.xlu0 %3312
        %3314 = vrot.lane.b32.xlu0 %v2641, 64
        %v3315 = vpop.permute.xlu0 %3314
        %3316 = vrot.lane.b32.xlu0 %v2642, 64
        %v3317 = vpop.permute.xlu0 %3316
        %3326 = vrot.lane.b32.xlu0 %v2643, 64
        %v3327 = vpop.permute.xlu0 %3326
        %3328 = vrot.lane.b32.xlu0 %v2644, 64
        %v3329 = vpop.permute.xlu0 %3328
        %3330 = vrot.lane.b32.xlu0 %v2645, 64
        %v3331 = vpop.permute.xlu0 %3330
        %3332 = vrot.lane.b32.xlu0 %v2646, 64
        %v3333 = vpop.permute.xlu0 %3332
        %3334 = vrot.lane.b32.xlu0 %v2647, 64
        %v3335 = vpop.permute.xlu0 %3334
        %3336 = vrot.lane.b32.xlu0 %v2648, 64
        %v3337 = vpop.permute.xlu0 %3336
        %3338 = vrot.lane.b32.xlu0 %v2649, 64
        %v3339 = vpop.permute.xlu0 %3338
        %3340 = vrot.lane.b32.xlu0 %v2650, 64
        %v3341 = vpop.permute.xlu0 %3340
        %v3343 = vsel %vm1348, %v3303, 0
        %v3346 = vsel %vm1348, %v3305, 0
        %v3349 = vsel %vm1348, %v3307, 0
        %v3352 = vsel %vm1348, %v3309, 0
        %v3355 = vsel %vm1348, %v3311, 0
        %v3358 = vsel %vm1348, %v3313, 0
        %v3361 = vsel %vm1348, %v3315, 0
        %v3364 = vsel %vm1348, %v3317, 0
        %v3367 = vsel %vm1348, %v3327, 0
        %v3370 = vsel %vm1348, %v3329, 0
        %v3373 = vsel %vm1348, %v3331, 0
        %v3376 = vsel %vm1348, %v3333, 0
        %v3379 = vsel %vm1348, %v3335, 0
        %v3382 = vsel %vm1348, %v3337, 0
        %v3385 = vsel %vm1348, %v3339, 0
        %v3388 = vsel %vm1348, %v3341, 0
        %3390 = vmatprep.subr.bf16.mxu0 0
        %3391 = vmatpush1.bf16.xpose.msra.mxu0 %v3388
        %3392 = vmatprep.subr.bf16.mxu0 0
        %3393 = vmatpush1.bf16.xpose.msra.mxu0 %v3385
        %3394 = vmatprep.subr.bf16.mxu0 0
        %3395 = vmatpush1.bf16.xpose.msra.mxu0 %v3382
        %3396 = vmatprep.subr.bf16.mxu0 0
        %3397 = vmatpush1.bf16.xpose.msra.mxu0 %v3379
        %3398 = vmatprep.subr.bf16.mxu0 0
        %3399 = vmatpush1.bf16.xpose.msra.mxu0 %v3376
        %3400 = vmatprep.subr.bf16.mxu0 0
        %3401 = vmatpush1.bf16.xpose.msra.mxu0 %v3373
        %3402 = vmatprep.subr.bf16.mxu0 0
        %3403 = vmatpush1.bf16.xpose.msra.mxu0 %v3370
        %3404 = vmatprep.subr.bf16.mxu0 0
        %3405 = vmatpush1.bf16.xpose.msra.mxu0 %v3367
        %3406 = vmatprep.subr.bf16.mxu0 0
        %3407 = vmatpush2.bf16.xpose.msra.mxu0 0
        %3408 = vmatprep.subr.bf16.mxu0 0
        %3409 = vmatpush2.bf16.xpose.msra.mxu0 0
        %3410 = vmatprep.subr.bf16.mxu0 0
        %3411 = vmatpush2.bf16.xpose.msra.mxu0 0
        %3412 = vmatprep.subr.bf16.mxu0 0
        %3413 = vmatpush2.bf16.xpose.msra.mxu0 0
        %3414 = vmatprep.subr.bf16.mxu0 0
        %3415 = vmatpush2.bf16.xpose.msra.mxu0 0
        %3416 = vmatprep.subr.bf16.mxu0 0
        %3417 = vmatpush2.bf16.xpose.msra.mxu0 0
        %3418 = vmatprep.subr.bf16.mxu0 0
        %3419 = vmatpush2.bf16.xpose.msra.mxu0 0
        %3420 = vmatprep.subr.bf16.mxu0 0
        %3421 = vmatpush2.bf16.xpose.msra.mxu0 0
        %3422 = vmatprep.mubr.bf16.mxu0 0
        %3423 = vmatmul.mubr.bf16.gmra.mxu0 %v3343
        %v3424 = vpop.f32.mrf.mxu0
        %v3425 = vadd.f32 0.0, %v3424
        %v3426 = vpop.f32.mrf.mxu0
        %v3427 = vpop.f32.mrf.mxu0
        %v3428 = vadd.f32 0.0, %v3427
        %v3429 = vpop.f32.mrf.mxu0
        %3430 = vmatprep.mubr.bf16.mxu0 0
        %3431 = vmatmul.mubr.bf16.gmra.mxu0 %v3346
        %v3432 = vpop.f32.mrf.mxu0
        %v3433 = vadd.f32 0.0, %v3432
        %v3434 = vpop.f32.mrf.mxu0
        %v3435 = vpop.f32.mrf.mxu0
        %v3436 = vadd.f32 0.0, %v3435
        %v3437 = vpop.f32.mrf.mxu0
        %3438 = vmatprep.mubr.bf16.mxu0 0
        %3439 = vmatmul.mubr.bf16.gmra.mxu0 %v3349
        %v3440 = vpop.f32.mrf.mxu0
        %v3441 = vadd.f32 0.0, %v3440
        %v3442 = vpop.f32.mrf.mxu0
        %v3443 = vpop.f32.mrf.mxu0
        %v3444 = vadd.f32 0.0, %v3443
        %v3445 = vpop.f32.mrf.mxu0
        %3446 = vmatprep.mubr.bf16.mxu0 0
        %3447 = vmatmul.mubr.bf16.gmra.mxu0 %v3352
        %v3448 = vpop.f32.mrf.mxu0
        %v3449 = vadd.f32 0.0, %v3448
        %v3450 = vpop.f32.mrf.mxu0
        %v3451 = vpop.f32.mrf.mxu0
        %v3452 = vadd.f32 0.0, %v3451
        %v3453 = vpop.f32.mrf.mxu0
        %3454 = vmatprep.mubr.bf16.mxu0 0
        %3455 = vmatmul.mubr.bf16.gmra.mxu0 %v3355
        %v3456 = vpop.f32.mrf.mxu0
        %v3457 = vadd.f32 0.0, %v3456
        %v3458 = vpop.f32.mrf.mxu0
        %v3459 = vpop.f32.mrf.mxu0
        %v3460 = vadd.f32 0.0, %v3459
        %v3461 = vpop.f32.mrf.mxu0
        %3462 = vmatprep.mubr.bf16.mxu0 0
        %3463 = vmatmul.mubr.bf16.gmra.mxu0 %v3358
        %v3464 = vpop.f32.mrf.mxu0
        %v3465 = vadd.f32 0.0, %v3464
        %v3466 = vpop.f32.mrf.mxu0
        %v3467 = vpop.f32.mrf.mxu0
        %v3468 = vadd.f32 0.0, %v3467
        %v3469 = vpop.f32.mrf.mxu0
        %3470 = vmatprep.mubr.bf16.mxu0 0
        %3471 = vmatmul.mubr.bf16.gmra.mxu0 %v3361
        %v3472 = vpop.f32.mrf.mxu0
        %v3473 = vadd.f32 0.0, %v3472
        %v3474 = vpop.f32.mrf.mxu0
        %v3475 = vpop.f32.mrf.mxu0
        %v3476 = vadd.f32 0.0, %v3475
        %v3477 = vpop.f32.mrf.mxu0
        %3478 = vmatprep.mubr.bf16.mxu0 0
        %3479 = vmatmul.mubr.bf16.gmra.mxu0 %v3364
        %v3480 = vpop.f32.mrf.mxu0
        %v3481 = vadd.f32 0.0, %v3480
        %v3482 = vpop.f32.mrf.mxu0
        %v3483 = vpop.f32.mrf.mxu0
        %v3484 = vadd.f32 0.0, %v3483
        %v3485 = vpop.f32.mrf.mxu0
        %3486 = vdwg.mxu0
        %v3487 = vsel %vm265, %v3425, -inf
        %v3488 = vsel %vm266, %v3428, -inf
        %v3489 = vsel %vm267, %v3433, -inf
        %v3490 = vsel %vm268, %v3436, -inf
        %v3491 = vsel %vm269, %v3441, -inf
        %v3492 = vsel %vm270, %v3444, -inf
        %v3493 = vsel %vm271, %v3449, -inf
        %v3494 = vsel %vm272, %v3452, -inf
        %v3495 = vsel %vm273, %v3457, -inf
        %v3496 = vsel %vm274, %v3460, -inf
        %v3497 = vsel %vm275, %v3465, -inf
        %v3498 = vsel %vm276, %v3468, -inf
        %v3499 = vsel %vm277, %v3473, -inf
        %v3500 = vsel %vm278, %v3476, -inf
        %v3501 = vsel %vm279, %v3481, -inf
        %v3502 = vsel %vm280, %v3484, -inf
        %3503 = vmax.xlane.f32.xlu0 %v3487
        %v3504 = vpop.xlane.xlu0 %3503
        %3505 = vmax.xlane.f32.xlu0 %v3488
        %v3506 = vpop.xlane.xlu0 %3505
        %3507 = vmax.xlane.f32.xlu0 %v3489
        %v3508 = vpop.xlane.xlu0 %3507
        %3509 = vmax.xlane.f32.xlu0 %v3490
        %v3510 = vpop.xlane.xlu0 %3509
        %3511 = vmax.xlane.f32.xlu0 %v3491
        %v3512 = vpop.xlane.xlu0 %3511
        %3513 = vmax.xlane.f32.xlu0 %v3492
        %v3514 = vpop.xlane.xlu0 %3513
        %3515 = vmax.xlane.f32.xlu0 %v3493
        %v3516 = vpop.xlane.xlu0 %3515
        %3517 = vmax.xlane.f32.xlu0 %v3494
        %v3518 = vpop.xlane.xlu0 %3517
        %3519 = vmax.xlane.f32.xlu0 %v3495
        %v3520 = vpop.xlane.xlu0 %3519
        %3521 = vmax.xlane.f32.xlu0 %v3496
        %v3522 = vpop.xlane.xlu0 %3521
        %3523 = vmax.xlane.f32.xlu0 %v3497
        %v3524 = vpop.xlane.xlu0 %3523
        %3525 = vmax.xlane.f32.xlu0 %v3498
        %v3526 = vpop.xlane.xlu0 %3525
        %3527 = vmax.xlane.f32.xlu0 %v3499
        %v3528 = vpop.xlane.xlu0 %3527
        %3529 = vmax.xlane.f32.xlu0 %v3500
        %v3530 = vpop.xlane.xlu0 %3529
        %3531 = vmax.xlane.f32.xlu0 %v3501
        %v3532 = vpop.xlane.xlu0 %3531
        %3533 = vmax.xlane.f32.xlu0 %v3502
        %v3534 = vpop.xlane.xlu0 %3533
        %v3535 = vsub.f32 %v3487, %v3504
        %v3536 = vsub.f32 %v3488, %v3506
        %v3537 = vsub.f32 %v3489, %v3508
        %v3538 = vsub.f32 %v3490, %v3510
        %v3539 = vsub.f32 %v3491, %v3512
        %v3540 = vsub.f32 %v3492, %v3514
        %v3541 = vsub.f32 %v3493, %v3516
        %v3542 = vsub.f32 %v3494, %v3518
        %v3543 = vsub.f32 %v3495, %v3520
        %v3544 = vsub.f32 %v3496, %v3522
        %v3545 = vsub.f32 %v3497, %v3524
        %v3546 = vsub.f32 %v3498, %v3526
        %v3547 = vsub.f32 %v3499, %v3528
        %v3548 = vsub.f32 %v3500, %v3530
        %v3549 = vsub.f32 %v3501, %v3532
        %v3550 = vsub.f32 %v3502, %v3534
        %v3551 = vmul.f32 %v3535, 1.442695
        %v3552 = vpow.pop %v3551
        %v3553 = vmul.f32 %v3536, 1.442695
        %v3554 = vpow.pop %v3553
        %v3555 = vmul.f32 %v3537, 1.442695
        %v3556 = vpow.pop %v3555
        %v3557 = vmul.f32 %v3538, 1.442695
        %v3558 = vpow.pop %v3557
        %v3559 = vmul.f32 %v3539, 1.442695
        %v3560 = vpow.pop %v3559
        %v3561 = vmul.f32 %v3540, 1.442695
        %v3562 = vpow.pop %v3561
        %v3563 = vmul.f32 %v3541, 1.442695
        %v3564 = vpow.pop %v3563
        %v3565 = vmul.f32 %v3542, 1.442695
        %v3566 = vpow.pop %v3565
        %v3567 = vmul.f32 %v3543, 1.442695
        %v3568 = vpow.pop %v3567
        %v3569 = vmul.f32 %v3544, 1.442695
        %v3570 = vpow.pop %v3569
        %v3571 = vmul.f32 %v3545, 1.442695
        %v3572 = vpow.pop %v3571
        %v3573 = vmul.f32 %v3546, 1.442695
        %v3574 = vpow.pop %v3573
        %v3575 = vmul.f32 %v3547, 1.442695
        %v3576 = vpow.pop %v3575
        %v3577 = vmul.f32 %v3548, 1.442695
        %v3578 = vpow.pop %v3577
        %v3579 = vmul.f32 %v3549, 1.442695
        %v3580 = vpow.pop %v3579
        %v3581 = vmul.f32 %v3550, 1.442695
        %v3582 = vpow.pop %v3581
        %3583 = vadd.xlane.f32.xlu0 %v3552
        %v3584 = vpop.xlane.xlu0 %3583
        %3585 = vadd.xlane.f32.xlu0 %v3554
        %v3586 = vpop.xlane.xlu0 %3585
        %3587 = vadd.xlane.f32.xlu0 %v3556
        %v3588 = vpop.xlane.xlu0 %3587
        %3589 = vadd.xlane.f32.xlu0 %v3558
        %v3590 = vpop.xlane.xlu0 %3589
        %3591 = vadd.xlane.f32.xlu0 %v3560
        %v3592 = vpop.xlane.xlu0 %3591
        %3593 = vadd.xlane.f32.xlu0 %v3562
        %v3594 = vpop.xlane.xlu0 %3593
        %3595 = vadd.xlane.f32.xlu0 %v3564
        %v3596 = vpop.xlane.xlu0 %3595
        %3597 = vadd.xlane.f32.xlu0 %v3566
        %v3598 = vpop.xlane.xlu0 %3597
        %3599 = vadd.xlane.f32.xlu0 %v3568
        %v3600 = vpop.xlane.xlu0 %3599
        %3601 = vadd.xlane.f32.xlu0 %v3570
        %v3602 = vpop.xlane.xlu0 %3601
        %3603 = vadd.xlane.f32.xlu0 %v3572
        %v3604 = vpop.xlane.xlu0 %3603
        %3605 = vadd.xlane.f32.xlu0 %v3574
        %v3606 = vpop.xlane.xlu0 %3605
        %3607 = vadd.xlane.f32.xlu0 %v3576
        %v3608 = vpop.xlane.xlu0 %3607
        %3609 = vadd.xlane.f32.xlu0 %v3578
        %v3610 = vpop.xlane.xlu0 %3609
        %3611 = vadd.xlane.f32.xlu0 %v3580
        %v3612 = vpop.xlane.xlu0 %3611
        %3613 = vadd.xlane.f32.xlu0 %v3582
        %v3614 = vpop.xlane.xlu0 %3613
        %v3615 = vrcp.pop %v3584
        %v3616 = vrcp.pop %v3586
        %v3617 = vrcp.pop %v3588
        %v3618 = vrcp.pop %v3590
        %v3619 = vrcp.pop %v3592
        %v3620 = vrcp.pop %v3594
        %v3621 = vrcp.pop %v3596
        %v3622 = vrcp.pop %v3598
        %v3623 = vrcp.pop %v3600
        %v3624 = vrcp.pop %v3602
        %v3625 = vrcp.pop %v3604
        %v3626 = vrcp.pop %v3606
        %v3627 = vrcp.pop %v3608
        %v3628 = vrcp.pop %v3610
        %v3629 = vrcp.pop %v3612
        %v3630 = vrcp.pop %v3614
        %v3631 = vmul.f32 %v3552, %v3615
        %v3632 = vmul.f32 %v3554, %v3616
        %v3633 = vmul.f32 %v3556, %v3617
        %v3634 = vmul.f32 %v3558, %v3618
        %v3635 = vmul.f32 %v3560, %v3619
        %v3636 = vmul.f32 %v3562, %v3620
        %v3637 = vmul.f32 %v3564, %v3621
        %v3638 = vmul.f32 %v3566, %v3622
        %v3639 = vmul.f32 %v3568, %v3623
        %v3640 = vmul.f32 %v3570, %v3624
        %v3641 = vmul.f32 %v3572, %v3625
        %v3642 = vmul.f32 %v3574, %v3626
        %v3643 = vmul.f32 %v3576, %v3627
        %v3644 = vmul.f32 %v3578, %v3628
        %v3645 = vmul.f32 %v3580, %v3629
        %v3646 = vmul.f32 %v3582, %v3630
        %v3647 = vpack.c.bf16 %v3632, %v3631
        %v3648 = vpack.c.bf16 %v3634, %v3633
        %v3649 = vpack.c.bf16 %v3636, %v3635
        %v3650 = vpack.c.bf16 %v3638, %v3637
        %v3651 = vpack.c.bf16 %v3640, %v3639
        %v3652 = vpack.c.bf16 %v3642, %v3641
        %v3653 = vpack.c.bf16 %v3644, %v3643
        %v3654 = vpack.c.bf16 %v3646, %v3645
        %3663 = vrot.lane.b32.xlu0 %v2651, 64
        %v3664 = vpop.permute.xlu0 %3663
        %3665 = vrot.lane.b32.xlu0 %v2652, 64
        %v3666 = vpop.permute.xlu0 %3665
        %3667 = vrot.lane.b32.xlu0 %v2653, 64
        %v3668 = vpop.permute.xlu0 %3667
        %3669 = vrot.lane.b32.xlu0 %v2654, 64
        %v3670 = vpop.permute.xlu0 %3669
        %3671 = vrot.lane.b32.xlu0 %v2655, 64
        %v3672 = vpop.permute.xlu0 %3671
        %3673 = vrot.lane.b32.xlu0 %v2656, 64
        %v3674 = vpop.permute.xlu0 %3673
        %3675 = vrot.lane.b32.xlu0 %v2657, 64
        %v3676 = vpop.permute.xlu0 %3675
        %3677 = vrot.lane.b32.xlu0 %v2658, 64
        %v3678 = vpop.permute.xlu0 %3677
        %3687 = vmatprep.subr.bf16.mxu0 0
        %3688 = vmatpush1.bf16.msra.mxu0 %v3678
        %3689 = vmatprep.subr.bf16.mxu0 0
        %3690 = vmatpush1.bf16.msra.mxu0 %v3676
        %3691 = vmatprep.subr.bf16.mxu0 0
        %3692 = vmatpush1.bf16.msra.mxu0 %v3674
        %3693 = vmatprep.subr.bf16.mxu0 0
        %3694 = vmatpush1.bf16.msra.mxu0 %v3672
        %3695 = vmatprep.subr.bf16.mxu0 0
        %3696 = vmatpush1.bf16.msra.mxu0 %v3670
        %3697 = vmatprep.subr.bf16.mxu0 0
        %3698 = vmatpush1.bf16.msra.mxu0 %v3668
        %3699 = vmatprep.subr.bf16.mxu0 0
        %3700 = vmatpush1.bf16.msra.mxu0 %v3666
        %3701 = vmatprep.subr.bf16.mxu0 0
        %3702 = vmatpush1.bf16.msra.mxu0 %v3664
        %3703 = vmatprep.subr.bf16.mxu0 0
        %3704 = vmatpush2.bf16.msra.mxu0 0
        %3705 = vmatprep.subr.bf16.mxu0 0
        %3706 = vmatpush2.bf16.msra.mxu0 0
        %3707 = vmatprep.subr.bf16.mxu0 0
        %3708 = vmatpush2.bf16.msra.mxu0 0
        %3709 = vmatprep.subr.bf16.mxu0 0
        %3710 = vmatpush2.bf16.msra.mxu0 0
        %3711 = vmatprep.subr.bf16.mxu0 0
        %3712 = vmatpush2.bf16.msra.mxu0 0
        %3713 = vmatprep.subr.bf16.mxu0 0
        %3714 = vmatpush2.bf16.msra.mxu0 0
        %3715 = vmatprep.subr.bf16.mxu0 0
        %3716 = vmatpush2.bf16.msra.mxu0 0
        %3717 = vmatprep.subr.bf16.mxu0 0
        %3718 = vmatpush2.bf16.msra.mxu0 0
        %3719 = vmatprep.mubr.bf16.mxu0 0
        %3720 = vmatmul.mubr.bf16.gmra.mxu0 %v3647
        %v3721 = vpop.f32.mrf.mxu0
        %v3722 = vadd.f32 0.0, %v3721
        %v3723 = vpop.f32.mrf.mxu0
        %v3724 = vpop.f32.mrf.mxu0
        %v3725 = vadd.f32 0.0, %v3724
        %v3726 = vpop.f32.mrf.mxu0
        %3727 = vmatprep.mubr.bf16.mxu0 0
        %3728 = vmatmul.mubr.bf16.gmra.mxu0 %v3648
        %v3729 = vpop.f32.mrf.mxu0
        %v3730 = vadd.f32 0.0, %v3729
        %v3731 = vpop.f32.mrf.mxu0
        %v3732 = vpop.f32.mrf.mxu0
        %v3733 = vadd.f32 0.0, %v3732
        %v3734 = vpop.f32.mrf.mxu0
        %3735 = vmatprep.mubr.bf16.mxu0 0
        %3736 = vmatmul.mubr.bf16.gmra.mxu0 %v3649
        %v3737 = vpop.f32.mrf.mxu0
        %v3738 = vadd.f32 0.0, %v3737
        %v3739 = vpop.f32.mrf.mxu0
        %v3740 = vpop.f32.mrf.mxu0
        %v3741 = vadd.f32 0.0, %v3740
        %v3742 = vpop.f32.mrf.mxu0
        %3743 = vmatprep.mubr.bf16.mxu0 0
        %3744 = vmatmul.mubr.bf16.gmra.mxu0 %v3650
        %v3745 = vpop.f32.mrf.mxu0
        %v3746 = vadd.f32 0.0, %v3745
        %v3747 = vpop.f32.mrf.mxu0
        %v3748 = vpop.f32.mrf.mxu0
        %v3749 = vadd.f32 0.0, %v3748
        %v3750 = vpop.f32.mrf.mxu0
        %3751 = vmatprep.mubr.bf16.mxu0 0
        %3752 = vmatmul.mubr.bf16.gmra.mxu0 %v3651
        %v3753 = vpop.f32.mrf.mxu0
        %v3754 = vadd.f32 0.0, %v3753
        %v3755 = vpop.f32.mrf.mxu0
        %v3756 = vpop.f32.mrf.mxu0
        %v3757 = vadd.f32 0.0, %v3756
        %v3758 = vpop.f32.mrf.mxu0
        %3759 = vmatprep.mubr.bf16.mxu0 0
        %3760 = vmatmul.mubr.bf16.gmra.mxu0 %v3652
        %v3761 = vpop.f32.mrf.mxu0
        %v3762 = vadd.f32 0.0, %v3761
        %v3763 = vpop.f32.mrf.mxu0
        %v3764 = vpop.f32.mrf.mxu0
        %v3765 = vadd.f32 0.0, %v3764
        %v3766 = vpop.f32.mrf.mxu0
        %3767 = vmatprep.mubr.bf16.mxu0 0
        %3768 = vmatmul.mubr.bf16.gmra.mxu0 %v3653
        %v3769 = vpop.f32.mrf.mxu0
        %v3770 = vadd.f32 0.0, %v3769
        %v3771 = vpop.f32.mrf.mxu0
        %v3772 = vpop.f32.mrf.mxu0
        %v3773 = vadd.f32 0.0, %v3772
        %v3774 = vpop.f32.mrf.mxu0
        %3775 = vmatprep.mubr.bf16.mxu0 0
        %3776 = vmatmul.mubr.bf16.gmra.mxu0 %v3654
        %v3777 = vpop.f32.mrf.mxu0
        %v3778 = vadd.f32 0.0, %v3777
        %v3779 = vpop.f32.mrf.mxu0
        %v3780 = vpop.f32.mrf.mxu0
        %v3781 = vadd.f32 0.0, %v3780
        %v3782 = vpop.f32.mrf.mxu0
        %3783 = vdwg.mxu0
        %v3784 = vld [vmem:[#allocation7 + $0xc0] sm:$0xff]
        %v3785 = vld [vmem:[#allocation7 + $0xc8] sm:$0xff]
        %v3786 = vld [vmem:[#allocation7 + $0xd0] sm:$0xff]
        %v3787 = vld [vmem:[#allocation7 + $0xd8] sm:$0xff]
        %v3788 = vld [vmem:[#allocation7 + $0xe0] sm:$0xff]
        %v3789 = vld [vmem:[#allocation7 + $0xe8] sm:$0xff]
        %v3790 = vld [vmem:[#allocation7 + $0xf0] sm:$0xff]
        %v3791 = vld [vmem:[#allocation7 + $0xf8] sm:$0xff]
        %v3792 = vpack.c.bf16 %v3725, %v3722
        %v3793 = vpack.c.bf16 %v3733, %v3730
        %v3794 = vpack.c.bf16 %v3741, %v3738
        %v3795 = vpack.c.bf16 %v3749, %v3746
        %v3796 = vpack.c.bf16 %v3757, %v3754
        %v3797 = vpack.c.bf16 %v3765, %v3762
        %v3798 = vpack.c.bf16 %v3773, %v3770
        %v3799 = vpack.c.bf16 %v3781, %v3778
        %v3808 = vunpack.c.l.b16 %v3784
        %v3809 = vunpack.c.h.b16 %v3784
        %v3810 = vunpack.c.l.b16 %v3785
        %v3811 = vunpack.c.h.b16 %v3785
        %v3812 = vunpack.c.l.b16 %v3786
        %v3813 = vunpack.c.h.b16 %v3786
        %v3814 = vunpack.c.l.b16 %v3787
        %v3815 = vunpack.c.h.b16 %v3787
        %v3816 = vunpack.c.l.b16 %v3788
        %v3817 = vunpack.c.h.b16 %v3788
        %v3818 = vunpack.c.l.b16 %v3789
        %v3819 = vunpack.c.h.b16 %v3789
        %v3820 = vunpack.c.l.b16 %v3790
        %v3821 = vunpack.c.h.b16 %v3790
        %v3822 = vunpack.c.l.b16 %v3791
        %v3823 = vunpack.c.h.b16 %v3791
        %v3824 = vpack.c.b16 %v3810, %v3808
        %v3825 = vpack.c.b16 %v3811, %v3809
        %v3826 = vpack.c.b16 %v3814, %v3812
        %v3827 = vpack.c.b16 %v3815, %v3813
        %v3828 = vpack.c.b16 %v3818, %v3816
        %v3829 = vpack.c.b16 %v3819, %v3817
        %v3830 = vpack.c.b16 %v3822, %v3820
        %v3831 = vpack.c.b16 %v3823, %v3821
        %v3841 = vsel %vm1348, %v3792, 0
        %v3844 = vsel %vm1348, %v3793, 0
        %v3847 = vsel %vm1348, %v3794, 0
        %v3850 = vsel %vm1348, %v3795, 0
        %v3853 = vsel %vm1348, %v3796, 0
        %v3856 = vsel %vm1348, %v3797, 0
        %v3859 = vsel %vm1348, %v3798, 0
        %v3862 = vsel %vm1348, %v3799, 0
        %3864 = vmatprep.subr.bf16.mxu0 0
        %3865 = vmatpush1.bf16.msra.mxu0 0
        %3866 = vmatprep.subr.bf16.mxu0 0
        %3867 = vmatpush1.bf16.msra.mxu0 0
        %3868 = vmatprep.subr.bf16.mxu0 0
        %3869 = vmatpush1.bf16.msra.mxu0 0
        %3870 = vmatprep.subr.bf16.mxu0 0
        %3871 = vmatpush1.bf16.msra.mxu0 0
        %3872 = vmatprep.subr.bf16.mxu0 %v3831
        %3873 = vmatpush1.bf16.msra.mxu0 %v3830
        %3874 = vmatprep.subr.bf16.mxu0 %v3829
        %3875 = vmatpush1.bf16.msra.mxu0 %v3828
        %3876 = vmatprep.subr.bf16.mxu0 %v3827
        %3877 = vmatpush1.bf16.msra.mxu0 %v3826
        %3878 = vmatprep.subr.bf16.mxu0 %v3825
        %3879 = vmatpush1.bf16.msra.mxu0 %v3824
        %3880 = vmatprep.subr.bf16.mxu0 0
        %3881 = vmatpush2.bf16.msra.mxu0 0
        %3882 = vmatprep.subr.bf16.mxu0 0
        %3883 = vmatpush2.bf16.msra.mxu0 0
        %3884 = vmatprep.subr.bf16.mxu0 0
        %3885 = vmatpush2.bf16.msra.mxu0 0
        %3886 = vmatprep.subr.bf16.mxu0 0
        %3887 = vmatpush2.bf16.msra.mxu0 0
        %3888 = vmatprep.subr.bf16.mxu0 0
        %3889 = vmatpush2.bf16.msra.mxu0 0
        %3890 = vmatprep.subr.bf16.mxu0 0
        %3891 = vmatpush2.bf16.msra.mxu0 0
        %3892 = vmatprep.subr.bf16.mxu0 0
        %3893 = vmatpush2.bf16.msra.mxu0 0
        %3894 = vmatprep.subr.bf16.mxu0 0
        %3895 = vmatpush2.bf16.msra.mxu0 0
        %3896 = vmatprep.mubr.bf16.mxu0 0
        %3897 = vmatmul.mubr.bf16.gmra.mxu0 %v3841
        %v3898 = vpop.f32.mrf.mxu0
        %v3899 = vadd.f32 0.0, %v3898
        %v3900 = vpop.f32.mrf.mxu0
        %v3901 = vadd.f32 0.0, %v3900
        %v3902 = vpop.f32.mrf.mxu0
        %v3903 = vadd.f32 0.0, %v3902
        %v3904 = vpop.f32.mrf.mxu0
        %v3905 = vadd.f32 0.0, %v3904
        %3906 = vmatprep.mubr.bf16.mxu0 0
        %3907 = vmatmul.mubr.bf16.gmra.mxu0 %v3844
        %v3908 = vpop.f32.mrf.mxu0
        %v3909 = vadd.f32 0.0, %v3908
        %v3910 = vpop.f32.mrf.mxu0
        %v3911 = vadd.f32 0.0, %v3910
        %v3912 = vpop.f32.mrf.mxu0
        %v3913 = vadd.f32 0.0, %v3912
        %v3914 = vpop.f32.mrf.mxu0
        %v3915 = vadd.f32 0.0, %v3914
        %3916 = vmatprep.mubr.bf16.mxu0 0
        %3917 = vmatmul.mubr.bf16.gmra.mxu0 %v3847
        %v3918 = vpop.f32.mrf.mxu0
        %v3919 = vadd.f32 0.0, %v3918
        %v3920 = vpop.f32.mrf.mxu0
        %v3921 = vadd.f32 0.0, %v3920
        %v3922 = vpop.f32.mrf.mxu0
        %v3923 = vadd.f32 0.0, %v3922
        %v3924 = vpop.f32.mrf.mxu0
        %v3925 = vadd.f32 0.0, %v3924
        %3926 = vmatprep.mubr.bf16.mxu0 0
        %3927 = vmatmul.mubr.bf16.gmra.mxu0 %v3850
        %v3928 = vpop.f32.mrf.mxu0
        %v3929 = vadd.f32 0.0, %v3928
        %v3930 = vpop.f32.mrf.mxu0
        %v3931 = vadd.f32 0.0, %v3930
        %v3932 = vpop.f32.mrf.mxu0
        %v3933 = vadd.f32 0.0, %v3932
        %v3934 = vpop.f32.mrf.mxu0
        %v3935 = vadd.f32 0.0, %v3934
        %3936 = vmatprep.mubr.bf16.mxu0 0
        %3937 = vmatmul.mubr.bf16.gmra.mxu0 %v3853
        %v3938 = vpop.f32.mrf.mxu0
        %v3939 = vadd.f32 0.0, %v3938
        %v3940 = vpop.f32.mrf.mxu0
        %v3941 = vadd.f32 0.0, %v3940
        %v3942 = vpop.f32.mrf.mxu0
        %v3943 = vadd.f32 0.0, %v3942
        %v3944 = vpop.f32.mrf.mxu0
        %v3945 = vadd.f32 0.0, %v3944
        %3946 = vmatprep.mubr.bf16.mxu0 0
        %3947 = vmatmul.mubr.bf16.gmra.mxu0 %v3856
        %v3948 = vpop.f32.mrf.mxu0
        %v3949 = vadd.f32 0.0, %v3948
        %v3950 = vpop.f32.mrf.mxu0
        %v3951 = vadd.f32 0.0, %v3950
        %v3952 = vpop.f32.mrf.mxu0
        %v3953 = vadd.f32 0.0, %v3952
        %v3954 = vpop.f32.mrf.mxu0
        %v3955 = vadd.f32 0.0, %v3954
        %3956 = vmatprep.mubr.bf16.mxu0 0
        %3957 = vmatmul.mubr.bf16.gmra.mxu0 %v3859
        %v3958 = vpop.f32.mrf.mxu0
        %v3959 = vadd.f32 0.0, %v3958
        %v3960 = vpop.f32.mrf.mxu0
        %v3961 = vadd.f32 0.0, %v3960
        %v3962 = vpop.f32.mrf.mxu0
        %v3963 = vadd.f32 0.0, %v3962
        %v3964 = vpop.f32.mrf.mxu0
        %v3965 = vadd.f32 0.0, %v3964
        %3966 = vmatprep.mubr.bf16.mxu0 0
        %3967 = vmatmul.mubr.bf16.gmra.mxu0 %v3862
        %v3968 = vpop.f32.mrf.mxu0
        %v3969 = vadd.f32 0.0, %v3968
        %v3970 = vpop.f32.mrf.mxu0
        %v3971 = vadd.f32 0.0, %v3970
        %v3972 = vpop.f32.mrf.mxu0
        %v3973 = vadd.f32 0.0, %v3972
        %v3974 = vpop.f32.mrf.mxu0
        %v3975 = vadd.f32 0.0, %v3974
        %3976 = vdwg.mxu0
        %v3977 = vadd.f32 %v3262, %v3899
        %v3978 = vadd.f32 %v3263, %v3901
        %v3979 = vadd.f32 %v3264, %v3903
        %v3980 = vadd.f32 %v3265, %v3905
        %v3981 = vadd.f32 %v3266, %v3909
        %v3982 = vadd.f32 %v3267, %v3911
        %v3983 = vadd.f32 %v3268, %v3913
        %v3984 = vadd.f32 %v3269, %v3915
        %v3985 = vadd.f32 %v3270, %v3919
        %v3986 = vadd.f32 %v3271, %v3921
        %v3987 = vadd.f32 %v3272, %v3923
        %v3988 = vadd.f32 %v3273, %v3925
        %v3989 = vadd.f32 %v3274, %v3929
        %v3990 = vadd.f32 %v3275, %v3931
        %v3991 = vadd.f32 %v3276, %v3933
        %v3992 = vadd.f32 %v3277, %v3935
        %v3993 = vadd.f32 %v3278, %v3939
        %v3994 = vadd.f32 %v3279, %v3941
        %v3995 = vadd.f32 %v3280, %v3943
        %v3996 = vadd.f32 %v3281, %v3945
        %v3997 = vadd.f32 %v3282, %v3949
        %v3998 = vadd.f32 %v3283, %v3951
        %v3999 = vadd.f32 %v3284, %v3953
        %v4000 = vadd.f32 %v3285, %v3955
        %v4001 = vadd.f32 %v3286, %v3959
        %v4002 = vadd.f32 %v3287, %v3961
        %v4003 = vadd.f32 %v3288, %v3963
        %v4004 = vadd.f32 %v3289, %v3965
        %v4005 = vadd.f32 %v3290, %v3969
        %v4006 = vadd.f32 %v3291, %v3971
        %v4007 = vadd.f32 %v3292, %v3973
        %v4008 = vadd.f32 %v3293, %v3975
        %v4009 = vld [vmem:[%s3] sm:$0x3]
        %v4011 = vlaneseq
        %v4012 = vshrl.u32 %v4011, 7
        %v4013 = vsub.s32 0, %v4012
        %v4014 = vrot.slane %v4009, %v4013
        %v4015 = vlaneseq
        %v4016 = vshrl.u32 %v4015, 7
        %v4017 = vsub.s32 1, %v4016
        %v4018 = vrot.slane %v4009, %v4017
        %v4021 = vadd.f32 %v3977, %v4014
        %v4022 = vadd.f32 %v3978, %v4018
        %v4023 = vadd.f32 %v3979, %v4014
        %v4024 = vadd.f32 %v3980, %v4018
        %v4025 = vadd.f32 %v3981, %v4014
        %v4026 = vadd.f32 %v3982, %v4018
        %v4027 = vadd.f32 %v3983, %v4014
        %v4028 = vadd.f32 %v3984, %v4018
        %v4029 = vadd.f32 %v3985, %v4014
        %v4030 = vadd.f32 %v3986, %v4018
        %v4031 = vadd.f32 %v3987, %v4014
        %v4032 = vadd.f32 %v3988, %v4018
        %v4033 = vadd.f32 %v3989, %v4014
        %v4034 = vadd.f32 %v3990, %v4018
        %v4035 = vadd.f32 %v3991, %v4014
        %v4036 = vadd.f32 %v3992, %v4018
        %v4037 = vadd.f32 %v3993, %v4014
        %v4038 = vadd.f32 %v3994, %v4018
        %v4039 = vadd.f32 %v3995, %v4014
        %v4040 = vadd.f32 %v3996, %v4018
        %v4041 = vadd.f32 %v3997, %v4014
        %v4042 = vadd.f32 %v3998, %v4018
        %v4043 = vadd.f32 %v3999, %v4014
        %v4044 = vadd.f32 %v4000, %v4018
        %v4045 = vadd.f32 %v4001, %v4014
        %v4046 = vadd.f32 %v4002, %v4018
        %v4047 = vadd.f32 %v4003, %v4014
        %v4048 = vadd.f32 %v4004, %v4018
        %v4049 = vadd.f32 %v4005, %v4014
        %v4050 = vadd.f32 %v4006, %v4018
        %v4051 = vadd.f32 %v4007, %v4014
        %v4052 = vadd.f32 %v4008, %v4018
        %4053 = vst [vmem:[%s244] sm:$0xff] %v4021
        %4054 = vst [vmem:[%s244 + $0x8] sm:$0xff] %v4022
        %4055 = vst [vmem:[%s244 + $0x10] sm:$0xff] %v4023
        %4056 = vst [vmem:[%s244 + $0x18] sm:$0xff] %v4024
        %4057 = vst [vmem:[%s244 + $0x20] sm:$0xff] %v4025
        %4058 = vst [vmem:[%s244 + $0x28] sm:$0xff] %v4026
        %4059 = vst [vmem:[%s244 + $0x30] sm:$0xff] %v4027
        %4060 = vst [vmem:[%s244 + $0x38] sm:$0xff] %v4028
        %4061 = vst [vmem:[%s244 + $0x40] sm:$0xff] %v4029
        %4062 = vst [vmem:[%s244 + $0x48] sm:$0xff] %v4030
        %4063 = vst [vmem:[%s244 + $0x50] sm:$0xff] %v4031
        %4064 = vst [vmem:[%s244 + $0x58] sm:$0xff] %v4032
        %4065 = vst [vmem:[%s244 + $0x60] sm:$0xff] %v4033
        %4066 = vst [vmem:[%s244 + $0x68] sm:$0xff] %v4034
        %4067 = vst [vmem:[%s244 + $0x70] sm:$0xff] %v4035
        %4068 = vst [vmem:[%s244 + $0x78] sm:$0xff] %v4036
        %4069 = vst [vmem:[%s244 + $0x80] sm:$0xff] %v4037
        %4070 = vst [vmem:[%s244 + $0x88] sm:$0xff] %v4038
        %4071 = vst [vmem:[%s244 + $0x90] sm:$0xff] %v4039
        %4072 = vst [vmem:[%s244 + $0x98] sm:$0xff] %v4040
        %4073 = vst [vmem:[%s244 + $0xa0] sm:$0xff] %v4041
        %4074 = vst [vmem:[%s244 + $0xa8] sm:$0xff] %v4042
        %4075 = vst [vmem:[%s244 + $0xb0] sm:$0xff] %v4043
        %4076 = vst [vmem:[%s244 + $0xb8] sm:$0xff] %v4044
        %4077 = vst [vmem:[%s244 + $0xc0] sm:$0xff] %v4045
        %4078 = vst [vmem:[%s244 + $0xc8] sm:$0xff] %v4046
        %4079 = vst [vmem:[%s244 + $0xd0] sm:$0xff] %v4047
        %4080 = vst [vmem:[%s244 + $0xd8] sm:$0xff] %v4048
        %4081 = vst [vmem:[%s244 + $0xe0] sm:$0xff] %v4049
        %4082 = vst [vmem:[%s244 + $0xe8] sm:$0xff] %v4050
        %4083 = vst [vmem:[%s244 + $0xf0] sm:$0xff] %v4051
        %4084 = vst [vmem:[%s244 + $0xf8] sm:$0xff] %v4052
        %s4085 = sand.u32 %s119, 1
        %s4086 = scalar_lea.sflag [#allocation4], %s4085
        %s4087 = sand.u32 %s119, 1
        %s4088 = smul.addr %s4087, 256
        %s4089 = scalar_lea.vmem [#allocation8], %s4088
        // Predicated region
        $region49: #{tpu_custom_call.1} parent=35 // pred_check
          %p4090 = pneg %p129
        $region50: #{tpu_custom_call.1} parent=35 // pred_check_branch
          %4092 = sbr.rel (%p4090) target = $region52
        $region51: #{tpu_custom_call.1} parent=35 // pred_region
          %s4094 = ssub.s32 4096, 4096
          %4095 = vsyncadd %s4086, %s4094
          %s4096 = smul.addr %s22, 32
          %s4097 = smul.addr %s4096, 128
          %s4098 = scalar_lea.hbm %s4, %s4097
          %s4099 = sshll.u32 %s4089, 4
          %s4100 = int_to_ptr.vmem [resolvable:$true] %s4099
          %4105 = dma.vmem_to_hbm [thread:$0]  %s4100, 4096, %s4098, %s4086, 256, 256, 16
        $region52: #{tpu_custom_call.1} parent=35 // pred_fallthru
          _
      $region36: #{tpu_custom_call.1} parent=5 // pred_fallthru
        _
      %p4106 = scmp.le.s32.totalorder 2, %s17
      // Predicated region
      $region53: #{tpu_custom_call.1} parent=5 // pred_check
        %p4107 = pneg %p4106
      $region54: #{tpu_custom_call.1} parent=5 // pred_check_branch
        %4109 = sbr.rel (%p4107) target = $region56
      $region55: #{tpu_custom_call.1} parent=5 // pred_region
        %s4110 = ssub.s32 %s17, 2
        // Predicated region
        $region57: #{tpu_custom_call.1} parent=55 // pred_check
          %p4111 = pneg %p135
        $region58: #{tpu_custom_call.1} parent=55 // pred_check_branch
          %4113 = sbr.rel (%p4111) target = $region60
        $region59: #{tpu_custom_call.1} parent=55 // pred_region
          %s4114 = sand.u32 %s120, 1
          %s4115 = scalar_lea.sflag [#allocation4], %s4114
          %s4116 = sand.u32 %s120, 1
          %s4117 = smul.addr %s4116, 256
          %s4118 = scalar_lea.vmem [#allocation8], %s4117
          %4119 = dma.done %s4115, 4096
        $region60: #{tpu_custom_call.1} parent=55 // pred_fallthru
          _
      $region56: #{tpu_custom_call.1} parent=5 // pred_fallthru
        _
    $region6: #{tpu_custom_call.1} parent=1 // loop_footer
      %s21 = sadd.s32 1, %s17
    $region7: #{tpu_custom_call.1} parent=1 // loop_footer_branch
      %16 = sbr.rel target = $region3
    $region8: #{tpu_custom_call.1} parent=1 // loop_exit
      _
    %4120 = vsyncpa [#allocation3], 1
    %s4121 = scalar_lea.sflag [#allocation3], 1
    %4122 = vsyncpa %s4121, 1
    %4123 = vsyncpa [#allocation6], 1
    %4124 = vsyncpa [#allocation4], 1
    %s4125 = scalar_lea.sflag [#allocation4], 1
    %4126 = vsyncpa %s4125, 1

</llo_original>
